<compile_context>
chip_gen: v6e
topology: v6e:2x2x1
jax: 0.10.0
libtpu: 0.0.40
codegen_flags: <defaults>
</compile_context>

<pallas_src>
import numpy as np
import jax
import jax.numpy as jnp
from jax import lax
from jax.experimental import pallas as pl
from jax.experimental.pallas import tpu as pltpu


# ----------------------------------------------------------------------------- helpers

def _round_up(x, m):
    return (x + m - 1) // m * m


def _upsample_pad_matrix(in_size, up_size, pad_before, out_size, halo):
    """1-D bilinear (align_corners=True) interpolation matrix of shape
    (out_size + 2*halo, in_size).  Rows [halo+pad_before : halo+pad_before+up_size]
    hold the interpolation weights; all other rows are zero (F.pad region + conv halo)."""
    m = np.zeros((out_size + 2 * halo, in_size), np.float32)
    for i in range(up_size):
        if up_size > 1 and in_size > 1:
            src = i * (in_size - 1) / (up_size - 1)
        else:
            src = 0.0
        lo = min(int(np.floor(src)), in_size - 1)
        hi = min(lo + 1, in_size - 1)
        frac = src - lo
        r = halo + pad_before + i
        m[r, lo] += (1.0 - frac)
        m[r, hi] += frac
    return m


def _fold_bn(w, b, gamma, beta, mean, var, eps=1e-5):
    """Fold eval-mode BatchNorm into conv weight (OIHW) and bias."""
    s = gamma / jnp.sqrt(var + eps)
    return w * s[:, None, None, None], (b - mean) * s + beta


# ----------------------------------------------------------------------------- wrapper

def up_forward(x1, x2, params, *, row_tile=8):
    """Up.forward(x1, x2) with bilinear=True.  x1, x2, result are NCHW float32.

    row_tile: output rows per grid step.  At real UNet sizes pick the largest value such
    that (row_tile+4)*Wp*(Cc+Cmid) bf16 + the f32 accumulators fit the per-generation
    VMEM budget (~24-28 MiB on v7x, more on v5e/v6e)."""
    N, C1, H1, W1 = x1.shape
    N2, C2, H2, W2 = x2.shape
    assert N == N2
    H1u, W1u = 2 * H1, 2 * W1
    diffY, diffX = H2 - H1u, W2 - W1u
    assert diffY >= 0 and diffX >= 0   # see TODO(synk) above
    Cc = C1 + C2
    Cmid = params["w1"].shape[0]
    Cout = params["w2"].shape[0]
    assert params["w1"].shape[1] == Cc   # concat([x2, x1]) channel count

    # Row tile: largest divisor of H2 not exceeding row_tile.
    th = max(d for d in range(1, min(row_tile, H2) + 1) if H2 % d == 0)
    nT = H2 // th

    # conv1 is computed over an extended, sublane-aligned width W2e (>= W2+2) so that its
    # 1-px ring (= conv2's zero padding) never needs masked single-sublane stores and the
    # (rows, W2e) -> (rows*W2e) merges are free relabels.  Junk columns are zeroed by the
    # same mask that zeroes the ring.
    W2e = _round_up(W2 + 2, 8)          # extended conv1 width
    Wp = W2e + 2                        # input tiles carry a 2-px W halo (+ alignment)
    Hp = H2 + 4                         # 2-px H halo

    # ---- XLA-side prep (cheap layout / small-operator work, kept out of the kernel) ----
    # Bilinear upsample (align_corners=True) + F.pad of x1, with the 2-px conv halo baked
    # into the 1-D operators.  Two tiny einsums; result streamed channel-last in bf16.
    uh2 = jnp.asarray(_upsample_pad_matrix(H1, H1u, diffY // 2, H2, halo=2))  # (H2+4, H1)
    uw2 = jnp.asarray(_upsample_pad_matrix(W1, W1u, diffX // 2, W2, halo=2))  # (W2+4, W1)
    x1u = jnp.einsum("ph,nchw->ncpw", uh2, x1)
    x1u = jnp.einsum("qw,ncpw->ncpq", uw2, x1u)                               # (N,C1,H2+4,W2+4)
    x1u = jnp.transpose(x1u, (0, 2, 3, 1))                                    # NHWC
    x1u = jnp.pad(x1u, ((0, 0), (0, 0), (0, Wp - (W2 + 4)), (0, 0))).astype(jnp.bfloat16)
    x2p = jnp.pad(jnp.transpose(x2, (0, 2, 3, 1)),
                  ((0, 0), (2, 2), (2, Wp - W2 - 2), (0, 0))).astype(jnp.bfloat16)

    # Overlapped row tiles (window th+4, stride th) so each grid step is an independent,
    # uniformly-shaped block (halo rows are recomputed in-kernel).
    x2ov = jnp.stack([x2p[:, t * th:t * th + th + 4] for t in range(nT)], axis=1)
    x1ov = jnp.stack([x1u[:, t * th:t * th + th + 4] for t in range(nT)], axis=1)
    # shapes: (N, nT, th+4, Wp, C2) and (N, nT, th+4, Wp, C1)

    # Fold eval-mode BN into the convs; tap-major weight layout for the 9-tap matmuls.
    w1f, b1f = _fold_bn(params["w1"], params["b1"], params["bn1_gamma"],
                        params["bn1_beta"], params["bn1_mean"], params["bn1_var"])
    w2f, b2f = _fold_bn(params["w2"], params["b2"], params["bn2_gamma"],
                        params["bn2_beta"], params["bn2_mean"], params["bn2_var"])
    w1k = jnp.transpose(w1f, (2, 3, 1, 0)).reshape(9, Cc, Cmid).astype(jnp.bfloat16)
    w2k = jnp.transpose(w2f, (2, 3, 1, 0)).reshape(9, Cmid, Cout).astype(jnp.bfloat16)
    b1k = b1f.reshape(1, Cmid).astype(jnp.float32)
    b2k = b2f.reshape(1, Cout).astype(jnp.float32)

    M1 = (th + 2) * W2e        # conv1 extended output rows (includes conv2's halo rows)
    M2 = th * W2               # output rows per tile

    # -------------------------------------------------------------------------- kernel
    def kernel(x2_ref, x1_ref, w1_ref, b1_ref, w2_ref, b2_ref, out_ref):
        t = pl.program_id(1)

        # concat([x2, up(x1)], channel) — lane concat on bf16 values, no scratch stores.
        cat = jnp.concatenate([x2_ref[0, 0], x1_ref[0, 0]], axis=-1)   # (th+4, Wp, Cc)

        # conv1 (3x3, pad=1) + folded BN1 + ReLU over the extended (th+2, W2e) domain:
        # 9 accumulating bf16 MXU matmuls over shifted views, f32 accumulation.
        acc1 = jnp.zeros((M1, Cmid), jnp.float32)
        for tap in range(9):
            ky, kx = tap // 3, tap % 3
            slab = cat[ky:ky + th + 2, kx:kx + W2e, :].reshape(M1, Cc)
            acc1 = acc1 + jnp.dot(slab, w1_ref[tap],
                                  preferred_element_type=jnp.float32)
        h1 = jnp.maximum(acc1 + b1_ref[...], 0.0).reshape(th + 2, W2e, Cmid)

        # Zero conv2's padding ring (and the alignment junk columns) with one select:
        #   - W borders (x==0, x>=W2+1) always,
        #   - H borders only on the first / last row tile (elsewhere those rows are
        #     valid halo rows recomputed from the neighbouring tile's data).
        kk = lax.broadcasted_iota(jnp.int32, (th + 2, W2e, Cmid), 0)
        xx = lax.broadcasted_iota(jnp.int32, (th + 2, W2e, Cmid), 1)
        ring = ((xx == 0) | (xx >= W2 + 1)
                | ((kk == 0) & (t == 0))
                | ((kk == th + 1) & (t == nT - 1)))
        hpad = jnp.where(ring, 0.0, h1).astype(jnp.bfloat16)   # (th+2, W2e, Cmid)

        # conv2 (3x3, pad=1) + folded BN2 + ReLU: 9 accumulating matmuls, natural
        # (rows, Cout) orientation (no operand/result transposes in-kernel).
        acc2 = jnp.zeros((M2, Cout), jnp.float32)
        for tap in range(9):
            ky, kx = tap // 3, tap % 3
            slab = hpad[ky:ky + th, kx:kx + W2, :].reshape(M2, Cmid)
            acc2 = acc2 + jnp.dot(slab, w2_ref[tap],
                                  preferred_element_type=jnp.float32)
        out_ref[0] = jnp.maximum(acc2 + b2_ref[...], 0.0).astype(out_ref.dtype)

    # ------------------------------------------------------------------ pallas_call glue
    # Per-generation VMEM budget: ~half of physical (32 MiB on v7x, 64 MiB on v5e/v6e).
    try:
        cap = pltpu.get_tpu_info().vmem_capacity_bytes
        vmem_limit = int(min(cap // 2, 96 * 1024 * 1024))
    except Exception:
        vmem_limit = 32 * 1024 * 1024

    flops = 2 * N * nT * 9 * (M1 * Cc * Cmid + M2 * Cmid * Cout)
    bytes_accessed = int(x2ov.size * 2 + x1ov.size * 2 + w1k.size * 2 + w2k.size * 2
                         + b1k.size * 4 + b2k.size * 4 + N * H2 * W2 * Cout * 4)

    grid_spec = pltpu.PrefetchScalarGridSpec(
        num_scalar_prefetch=0,
        grid=(N, nT),
        in_specs=[
            pl.BlockSpec((1, 1, th + 4, Wp, C2), lambda n, t: (n, t, 0, 0, 0)),
            pl.BlockSpec((1, 1, th + 4, Wp, C1), lambda n, t: (n, t, 0, 0, 0)),
            # Weights/biases: constant block index -> fetched once, kept resident.
            # TODO(synk): at real sizes add pipeline_mode=pl.Buffered(1) here (v7x VMEM).
            pl.BlockSpec((9, Cc, Cmid), lambda n, t: (0, 0, 0)),
            pl.BlockSpec((1, Cmid), lambda n, t: (0, 0)),
            pl.BlockSpec((9, Cmid, Cout), lambda n, t: (0, 0, 0)),
            pl.BlockSpec((1, Cout), lambda n, t: (0, 0)),
        ],
        out_specs=pl.BlockSpec((1, M2, Cout), lambda n, t: (n, t, 0)),
    )

    # NOTE(item 7): at demo scale MXU columns are ~3% utilized (Cmid=Cout=4) and per-step
    # overhead dominates; batching images into one step would help utilization but would
    # drop below 2 grid steps at N=2 (bad for v7x's two TensorCores), so grid=(N, nT).
    y_flat = pl.pallas_call(
        kernel,
        out_shape=jax.ShapeDtypeStruct((N, H2 * W2, Cout), jnp.float32),
        grid_spec=grid_spec,
        compiler_params=pltpu.CompilerParams(
            dimension_semantics=("parallel", "parallel"),
            vmem_limit_bytes=vmem_limit),
        cost_estimate=pl.CostEstimate(flops=flops, transcendentals=0,
                                      bytes_accessed=bytes_accessed),
    )(x2ov, x1ov, w1k, b1k, w2k, b2k)

    # NHWC-flat -> NCHW (trivial XLA transpose of the small output).
    return jnp.transpose(y_flat, (0, 2, 1)).reshape(N, Cout, H2, W2)


# ----------------------------------------------------------------------------- reference

def up_forward_reference(x1, x2, params):
    """Pure-JAX reference (same eval-mode BN semantics)."""
    N, C1, H1, W1 = x1.shape
    _, C2, H2, W2 = x2.shape
    uh = jnp.asarray(_upsample_pad_matrix(H1, 2 * H1, (H2 - 2 * H1) // 2, H2, halo=0))
    uw = jnp.asarray(_upsample_pad_matrix(W1, 2 * W1, (W2 - 2 * W1) // 2, W2, halo=0))
    t = jnp.einsum("ah,nchw->ncaw", uh, x1)
    x1u = jnp.einsum("bw,ncaw->ncab", uw, t)
    x = jnp.concatenate([x2, x1u], axis=1)

    w1f, b1f = _fold_bn(params["w1"], params["b1"], params["bn1_gamma"],
                        params["bn1_beta"], params["bn1_mean"], params["bn1_var"])
    w2f, b2f = _fold_bn(params["w2"], params["b2"], params["bn2_gamma"],
                        params["bn2_beta"], params["bn2_mean"], params["bn2_var"])

    def conv(x, w):
        return lax.conv_general_dilated(
            x, w, (1, 1), ((1, 1), (1, 1)),
            dimension_numbers=("NCHW", "OIHW", "NCHW"),
            precision=lax.Precision.HIGHEST)

    y = jnp.maximum(conv(x, w1f) + b1f[None, :, None, None], 0.0)
    y = jnp.maximum(conv(y, w2f) + b2f[None, :, None, None], 0.0)
    return y


# ----------------------------------------------------------------------------- params

def init_params(key, in_channels, out_channels):
    mid = in_channels // 2
    ks = jax.random.split(key, 12)
    return {
        "w1": 0.1 * jax.random.normal(ks[0], (mid, in_channels, 3, 3), jnp.float32),
        "b1": 0.1 * jax.random.normal(ks[1], (mid,), jnp.float32),
        "bn1_gamma": 1.0 + 0.1 * jax.random.normal(ks[2], (mid,), jnp.float32),
        "bn1_beta": 0.1 * jax.random.normal(ks[3], (mid,), jnp.float32),
        "bn1_mean": 0.1 * jax.random.normal(ks[4], (mid,), jnp.float32),
        "bn1_var": jax.random.uniform(ks[5], (mid,), jnp.float32, 0.5, 1.5),
        "w2": 0.1 * jax.random.normal(ks[6], (out_channels, mid, 3, 3), jnp.float32),
        "b2": 0.1 * jax.random.normal(ks[7], (out_channels,), jnp.float32),
        "bn2_gamma": 1.0 + 0.1 * jax.random.normal(ks[8], (out_channels,), jnp.float32),
        "bn2_beta": 0.1 * jax.random.normal(ks[9], (out_channels,), jnp.float32),
        "bn2_mean": 0.1 * jax.random.normal(ks[10], (out_channels,), jnp.float32),
        "bn2_var": jax.random.uniform(ks[11], (out_channels,), jnp.float32, 0.5, 1.5),
    }


# ----------------------------------------------------------------------------- main

if __name__ == "__main__":
    key = jax.random.PRNGKey(0)
    k1, k2, kp = jax.random.split(key, 3)

    # Up(in_channels=8, out_channels=4, bilinear=True):
    #   x1 (deeper feature): [N, in_channels//2, H, W], x2 (skip): [N, in_channels//2, 2H, 2W]
    N, C1, H1, W1 = 2, 4, 8, 8
    C2, H2, W2 = 4, 16, 16
    in_channels, out_channels = C1 + C2, 4

    x1 = jax.random.normal(k1, (N, C1, H1, W1), jnp.float32)
    x2 = jax.random.normal(k2, (N, C2, H2, W2), jnp.float32)
    params = init_params(kp, in_channels, out_channels)

    y = jax.block_until_ready(up_forward(x1, x2, params, row_tile=8))
    y_ref = jax.block_until_ready(up_forward_reference(x1, x2, params))

    assert y.shape == (N, out_channels, H2, W2)
    # bf16 MXU operands with f32 accumulation -> slightly looser tolerance than pure f32.
    np.testing.assert_allclose(np.asarray(y), np.asarray(y_ref), atol=3e-2, rtol=3e-2)
    print("KERNEL_OK")
</pallas_src>

<mosaic_0001>
module attributes {stable_mosaic.version = 11 : i64} {
  func.func @kernel(%arg0: i32, %arg1: i32, %arg2: memref<1x1x12x26x4xbf16, #tpu.memory_space<vmem>>, %arg3: memref<1x1x12x26x4xbf16, #tpu.memory_space<vmem>>, %arg4: memref<9x8x4xbf16, #tpu.memory_space<vmem>>, %arg5: memref<1x4xf32, #tpu.memory_space<vmem>>, %arg6: memref<9x4x4xbf16, #tpu.memory_space<vmem>>, %arg7: memref<1x4xf32, #tpu.memory_space<vmem>>, %arg8: memref<1x128x4xf32, #tpu.memory_space<vmem>>) attributes {dimension_semantics = [#tpu.dimension_semantics<parallel>, #tpu.dimension_semantics<parallel>], iteration_bounds = array<i64: 2, 2>, scalar_prefetch = 0 : i64, scratch_operands = 0 : i64, tpu.core_type = #tpu.core_type<tc>, window_params = [{transform_indices = @transform_0, window_bounds = array<i64: 1, 1, 12, 26, 4>}, {transform_indices = @transform_1, window_bounds = array<i64: 1, 1, 12, 26, 4>}, {pipeline_mode = #tpu.pipeline_mode<synchronous>, transform_indices = @transform_2, window_bounds = array<i64: 9, 8, 4>}, {pipeline_mode = #tpu.pipeline_mode<synchronous>, transform_indices = @transform_3, window_bounds = array<i64: 1, 4>}, {pipeline_mode = #tpu.pipeline_mode<synchronous>, transform_indices = @transform_4, window_bounds = array<i64: 9, 4, 4>}, {pipeline_mode = #tpu.pipeline_mode<synchronous>, transform_indices = @transform_5, window_bounds = array<i64: 1, 4>}, {transform_indices = @transform_6, window_bounds = array<i64: 1, 128, 4>}]} {
    %c0 = arith.constant 0 : index
    %c0_0 = arith.constant 0 : index
    %c0_1 = arith.constant 0 : index
    %c0_2 = arith.constant 0 : index
    %c0_3 = arith.constant 0 : index
    %0 = vector.load %arg2[%c0, %c0_0, %c0_1, %c0_2, %c0_3] : memref<1x1x12x26x4xbf16, #tpu.memory_space<vmem>>, vector<1x1x12x26x4xbf16>
    %1 = vector.shape_cast %0 : vector<1x1x12x26x4xbf16> to vector<12x26x4xbf16>
    %c0_4 = arith.constant 0 : index
    %c0_5 = arith.constant 0 : index
    %c0_6 = arith.constant 0 : index
    %c0_7 = arith.constant 0 : index
    %c0_8 = arith.constant 0 : index
    %2 = vector.load %arg3[%c0_4, %c0_5, %c0_6, %c0_7, %c0_8] : memref<1x1x12x26x4xbf16, #tpu.memory_space<vmem>>, vector<1x1x12x26x4xbf16>
    %3 = vector.shape_cast %2 : vector<1x1x12x26x4xbf16> to vector<12x26x4xbf16>
    %4 = tpu.concatenate %1, %3 in 2 : vector<12x26x4xbf16>, vector<12x26x4xbf16> -> vector<12x26x8xbf16>
    %cst = arith.constant 0.000000e+00 : f32
    %5 = vector.broadcast %cst : f32 to vector<240x4xf32>
    %6 = vector.extract_strided_slice %4 {offsets = [0, 0, 0], sizes = [10, 24, 8], strides = [1, 1, 1]} : vector<12x26x8xbf16> to vector<10x24x8xbf16>
    %7 = vector.shape_cast %6 : vector<10x24x8xbf16> to vector<240x8xbf16>
    %c0_9 = arith.constant 0 : index
    %c0_10 = arith.constant 0 : index
    %c0_11 = arith.constant 0 : index
    %8 = vector.load %arg4[%c0_9, %c0_10, %c0_11] : memref<9x8x4xbf16, #tpu.memory_space<vmem>>, vector<1x8x4xbf16>
    %9 = vector.shape_cast %8 : vector<1x8x4xbf16> to vector<8x4xbf16>
    %cst_12 = arith.constant dense<0.000000e+00> : vector<240x4xf32>
    %10 = tpu.matmul %7, %9, %cst_12 {dimension_numbers = #tpu.dot_dimension_numbers<[1], [0], [0], [1], [0, 0, 1, 1], [], []>} : vector<240x8xbf16>, vector<8x4xbf16>, vector<240x4xf32> -> vector<240x4xf32>
    %11 = arith.addf %5, %10 : vector<240x4xf32>
    %12 = vector.extract_strided_slice %4 {offsets = [0, 1, 0], sizes = [10, 24, 8], strides = [1, 1, 1]} : vector<12x26x8xbf16> to vector<10x24x8xbf16>
    %13 = vector.shape_cast %12 : vector<10x24x8xbf16> to vector<240x8xbf16>
    %c1 = arith.constant 1 : index
    %c0_13 = arith.constant 0 : index
    %c0_14 = arith.constant 0 : index
    %14 = vector.load %arg4[%c1, %c0_13, %c0_14] : memref<9x8x4xbf16, #tpu.memory_space<vmem>>, vector<1x8x4xbf16>
    %15 = vector.shape_cast %14 : vector<1x8x4xbf16> to vector<8x4xbf16>
    %cst_15 = arith.constant dense<0.000000e+00> : vector<240x4xf32>
    %16 = tpu.matmul %13, %15, %cst_15 {dimension_numbers = #tpu.dot_dimension_numbers<[1], [0], [0], [1], [0, 0, 1, 1], [], []>} : vector<240x8xbf16>, vector<8x4xbf16>, vector<240x4xf32> -> vector<240x4xf32>
    %17 = arith.addf %11, %16 : vector<240x4xf32>
    %18 = vector.extract_strided_slice %4 {offsets = [0, 2, 0], sizes = [10, 24, 8], strides = [1, 1, 1]} : vector<12x26x8xbf16> to vector<10x24x8xbf16>
    %19 = vector.shape_cast %18 : vector<10x24x8xbf16> to vector<240x8xbf16>
    %c2 = arith.constant 2 : index
    %c0_16 = arith.constant 0 : index
    %c0_17 = arith.constant 0 : index
    %20 = vector.load %arg4[%c2, %c0_16, %c0_17] : memref<9x8x4xbf16, #tpu.memory_space<vmem>>, vector<1x8x4xbf16>
    %21 = vector.shape_cast %20 : vector<1x8x4xbf16> to vector<8x4xbf16>
    %cst_18 = arith.constant dense<0.000000e+00> : vector<240x4xf32>
    %22 = tpu.matmul %19, %21, %cst_18 {dimension_numbers = #tpu.dot_dimension_numbers<[1], [0], [0], [1], [0, 0, 1, 1], [], []>} : vector<240x8xbf16>, vector<8x4xbf16>, vector<240x4xf32> -> vector<240x4xf32>
    %23 = arith.addf %17, %22 : vector<240x4xf32>
    %24 = vector.extract_strided_slice %4 {offsets = [1, 0, 0], sizes = [10, 24, 8], strides = [1, 1, 1]} : vector<12x26x8xbf16> to vector<10x24x8xbf16>
    %25 = vector.shape_cast %24 : vector<10x24x8xbf16> to vector<240x8xbf16>
    %c3 = arith.constant 3 : index
    %c0_19 = arith.constant 0 : index
    %c0_20 = arith.constant 0 : index
    %26 = vector.load %arg4[%c3, %c0_19, %c0_20] : memref<9x8x4xbf16, #tpu.memory_space<vmem>>, vector<1x8x4xbf16>
    %27 = vector.shape_cast %26 : vector<1x8x4xbf16> to vector<8x4xbf16>
    %cst_21 = arith.constant dense<0.000000e+00> : vector<240x4xf32>
    %28 = tpu.matmul %25, %27, %cst_21 {dimension_numbers = #tpu.dot_dimension_numbers<[1], [0], [0], [1], [0, 0, 1, 1], [], []>} : vector<240x8xbf16>, vector<8x4xbf16>, vector<240x4xf32> -> vector<240x4xf32>
    %29 = arith.addf %23, %28 : vector<240x4xf32>
    %30 = vector.extract_strided_slice %4 {offsets = [1, 1, 0], sizes = [10, 24, 8], strides = [1, 1, 1]} : vector<12x26x8xbf16> to vector<10x24x8xbf16>
    %31 = vector.shape_cast %30 : vector<10x24x8xbf16> to vector<240x8xbf16>
    %c4 = arith.constant 4 : index
    %c0_22 = arith.constant 0 : index
    %c0_23 = arith.constant 0 : index
    %32 = vector.load %arg4[%c4, %c0_22, %c0_23] : memref<9x8x4xbf16, #tpu.memory_space<vmem>>, vector<1x8x4xbf16>
    %33 = vector.shape_cast %32 : vector<1x8x4xbf16> to vector<8x4xbf16>
    %cst_24 = arith.constant dense<0.000000e+00> : vector<240x4xf32>
    %34 = tpu.matmul %31, %33, %cst_24 {dimension_numbers = #tpu.dot_dimension_numbers<[1], [0], [0], [1], [0, 0, 1, 1], [], []>} : vector<240x8xbf16>, vector<8x4xbf16>, vector<240x4xf32> -> vector<240x4xf32>
    %35 = arith.addf %29, %34 : vector<240x4xf32>
    %36 = vector.extract_strided_slice %4 {offsets = [1, 2, 0], sizes = [10, 24, 8], strides = [1, 1, 1]} : vector<12x26x8xbf16> to vector<10x24x8xbf16>
    %37 = vector.shape_cast %36 : vector<10x24x8xbf16> to vector<240x8xbf16>
    %c5 = arith.constant 5 : index
    %c0_25 = arith.constant 0 : index
    %c0_26 = arith.constant 0 : index
    %38 = vector.load %arg4[%c5, %c0_25, %c0_26] : memref<9x8x4xbf16, #tpu.memory_space<vmem>>, vector<1x8x4xbf16>
    %39 = vector.shape_cast %38 : vector<1x8x4xbf16> to vector<8x4xbf16>
    %cst_27 = arith.constant dense<0.000000e+00> : vector<240x4xf32>
    %40 = tpu.matmul %37, %39, %cst_27 {dimension_numbers = #tpu.dot_dimension_numbers<[1], [0], [0], [1], [0, 0, 1, 1], [], []>} : vector<240x8xbf16>, vector<8x4xbf16>, vector<240x4xf32> -> vector<240x4xf32>
    %41 = arith.addf %35, %40 : vector<240x4xf32>
    %42 = vector.extract_strided_slice %4 {offsets = [2, 0, 0], sizes = [10, 24, 8], strides = [1, 1, 1]} : vector<12x26x8xbf16> to vector<10x24x8xbf16>
    %43 = vector.shape_cast %42 : vector<10x24x8xbf16> to vector<240x8xbf16>
    %c6 = arith.constant 6 : index
    %c0_28 = arith.constant 0 : index
    %c0_29 = arith.constant 0 : index
    %44 = vector.load %arg4[%c6, %c0_28, %c0_29] : memref<9x8x4xbf16, #tpu.memory_space<vmem>>, vector<1x8x4xbf16>
    %45 = vector.shape_cast %44 : vector<1x8x4xbf16> to vector<8x4xbf16>
    %cst_30 = arith.constant dense<0.000000e+00> : vector<240x4xf32>
    %46 = tpu.matmul %43, %45, %cst_30 {dimension_numbers = #tpu.dot_dimension_numbers<[1], [0], [0], [1], [0, 0, 1, 1], [], []>} : vector<240x8xbf16>, vector<8x4xbf16>, vector<240x4xf32> -> vector<240x4xf32>
    %47 = arith.addf %41, %46 : vector<240x4xf32>
    %48 = vector.extract_strided_slice %4 {offsets = [2, 1, 0], sizes = [10, 24, 8], strides = [1, 1, 1]} : vector<12x26x8xbf16> to vector<10x24x8xbf16>
    %49 = vector.shape_cast %48 : vector<10x24x8xbf16> to vector<240x8xbf16>
    %c7 = arith.constant 7 : index
    %c0_31 = arith.constant 0 : index
    %c0_32 = arith.constant 0 : index
    %50 = vector.load %arg4[%c7, %c0_31, %c0_32] : memref<9x8x4xbf16, #tpu.memory_space<vmem>>, vector<1x8x4xbf16>
    %51 = vector.shape_cast %50 : vector<1x8x4xbf16> to vector<8x4xbf16>
    %cst_33 = arith.constant dense<0.000000e+00> : vector<240x4xf32>
    %52 = tpu.matmul %49, %51, %cst_33 {dimension_numbers = #tpu.dot_dimension_numbers<[1], [0], [0], [1], [0, 0, 1, 1], [], []>} : vector<240x8xbf16>, vector<8x4xbf16>, vector<240x4xf32> -> vector<240x4xf32>
    %53 = arith.addf %47, %52 : vector<240x4xf32>
    %54 = vector.extract_strided_slice %4 {offsets = [2, 2, 0], sizes = [10, 24, 8], strides = [1, 1, 1]} : vector<12x26x8xbf16> to vector<10x24x8xbf16>
    %55 = vector.shape_cast %54 : vector<10x24x8xbf16> to vector<240x8xbf16>
    %c8 = arith.constant 8 : index
    %c0_34 = arith.constant 0 : index
    %c0_35 = arith.constant 0 : index
    %56 = vector.load %arg4[%c8, %c0_34, %c0_35] : memref<9x8x4xbf16, #tpu.memory_space<vmem>>, vector<1x8x4xbf16>
    %57 = vector.shape_cast %56 : vector<1x8x4xbf16> to vector<8x4xbf16>
    %cst_36 = arith.constant dense<0.000000e+00> : vector<240x4xf32>
    %58 = tpu.matmul %55, %57, %cst_36 {dimension_numbers = #tpu.dot_dimension_numbers<[1], [0], [0], [1], [0, 0, 1, 1], [], []>} : vector<240x8xbf16>, vector<8x4xbf16>, vector<240x4xf32> -> vector<240x4xf32>
    %59 = arith.addf %53, %58 : vector<240x4xf32>
    %c0_37 = arith.constant 0 : index
    %c0_38 = arith.constant 0 : index
    %60 = vector.load %arg5[%c0_37, %c0_38] : memref<1x4xf32, #tpu.memory_space<vmem>>, vector<1x4xf32>
    %61 = vector.broadcast %60 : vector<1x4xf32> to vector<240x4xf32>
    %62 = arith.addf %59, %61 : vector<240x4xf32>
    %cst_39 = arith.constant 0.000000e+00 : f32
    %63 = vector.broadcast %cst_39 : f32 to vector<240x4xf32>
    %64 = arith.maximumf %62, %63 : vector<240x4xf32>
    %65 = vector.shape_cast %64 : vector<240x4xf32> to vector<10x24x4xf32>
    %66 = tpu.iota {dimensions = array<i32: 0>} : vector<10x24x4xi32>
    %67 = tpu.iota {dimensions = array<i32: 1>} : vector<10x24x4xi32>
    %c0_i32 = arith.constant 0 : i32
    %68 = vector.broadcast %c0_i32 : i32 to vector<10x24x4xi32>
    %69 = arith.cmpi eq, %67, %68 : vector<10x24x4xi32>
    %c17_i32 = arith.constant 17 : i32
    %70 = vector.broadcast %c17_i32 : i32 to vector<10x24x4xi32>
    %71 = arith.cmpi sge, %67, %70 : vector<10x24x4xi32>
    %72 = arith.ori %69, %71 : vector<10x24x4xi1>
    %c0_i32_40 = arith.constant 0 : i32
    %73 = vector.broadcast %c0_i32_40 : i32 to vector<10x24x4xi32>
    %74 = arith.cmpi eq, %66, %73 : vector<10x24x4xi32>
    %c0_i32_41 = arith.constant 0 : i32
    %75 = arith.cmpi eq, %arg1, %c0_i32_41 : i32
    %76 = vector.broadcast %75 : i1 to vector<10x24x4xi1>
    %77 = arith.andi %74, %76 : vector<10x24x4xi1>
    %78 = arith.ori %72, %77 : vector<10x24x4xi1>
    %c9_i32 = arith.constant 9 : i32
    %79 = vector.broadcast %c9_i32 : i32 to vector<10x24x4xi32>
    %80 = arith.cmpi eq, %66, %79 : vector<10x24x4xi32>
    %c1_i32 = arith.constant 1 : i32
    %81 = arith.cmpi eq, %arg1, %c1_i32 : i32
    %82 = vector.broadcast %81 : i1 to vector<10x24x4xi1>
    %83 = arith.andi %80, %82 : vector<10x24x4xi1>
    %84 = arith.ori %78, %83 : vector<10x24x4xi1>
    %cst_42 = arith.constant 0.000000e+00 : f32
    %85 = vector.broadcast %cst_42 : f32 to vector<10x24x4xf32>
    %86 = arith.select %84, %85, %65 : vector<10x24x4xi1>, vector<10x24x4xf32>
    %87 = arith.truncf %86 : vector<10x24x4xf32> to vector<10x24x4xbf16>
    %cst_43 = arith.constant 0.000000e+00 : f32
    %88 = vector.broadcast %cst_43 : f32 to vector<128x4xf32>
    %89 = vector.extract_strided_slice %87 {offsets = [0, 0, 0], sizes = [8, 16, 4], strides = [1, 1, 1]} : vector<10x24x4xbf16> to vector<8x16x4xbf16>
    %90 = vector.shape_cast %89 : vector<8x16x4xbf16> to vector<128x4xbf16>
    %c0_44 = arith.constant 0 : index
    %c0_45 = arith.constant 0 : index
    %c0_46 = arith.constant 0 : index
    %91 = vector.load %arg6[%c0_44, %c0_45, %c0_46] : memref<9x4x4xbf16, #tpu.memory_space<vmem>>, vector<1x4x4xbf16>
    %92 = vector.shape_cast %91 : vector<1x4x4xbf16> to vector<4x4xbf16>
    %cst_47 = arith.constant dense<0.000000e+00> : vector<128x4xf32>
    %93 = tpu.matmul %90, %92, %cst_47 {dimension_numbers = #tpu.dot_dimension_numbers<[1], [0], [0], [1], [0, 0, 1, 1], [], []>} : vector<128x4xbf16>, vector<4x4xbf16>, vector<128x4xf32> -> vector<128x4xf32>
    %94 = arith.addf %88, %93 : vector<128x4xf32>
    %95 = vector.extract_strided_slice %87 {offsets = [0, 1, 0], sizes = [8, 16, 4], strides = [1, 1, 1]} : vector<10x24x4xbf16> to vector<8x16x4xbf16>
    %96 = vector.shape_cast %95 : vector<8x16x4xbf16> to vector<128x4xbf16>
    %c1_48 = arith.constant 1 : index
    %c0_49 = arith.constant 0 : index
    %c0_50 = arith.constant 0 : index
    %97 = vector.load %arg6[%c1_48, %c0_49, %c0_50] : memref<9x4x4xbf16, #tpu.memory_space<vmem>>, vector<1x4x4xbf16>
    %98 = vector.shape_cast %97 : vector<1x4x4xbf16> to vector<4x4xbf16>
    %cst_51 = arith.constant dense<0.000000e+00> : vector<128x4xf32>
    %99 = tpu.matmul %96, %98, %cst_51 {dimension_numbers = #tpu.dot_dimension_numbers<[1], [0], [0], [1], [0, 0, 1, 1], [], []>} : vector<128x4xbf16>, vector<4x4xbf16>, vector<128x4xf32> -> vector<128x4xf32>
    %100 = arith.addf %94, %99 : vector<128x4xf32>
    %101 = vector.extract_strided_slice %87 {offsets = [0, 2, 0], sizes = [8, 16, 4], strides = [1, 1, 1]} : vector<10x24x4xbf16> to vector<8x16x4xbf16>
    %102 = vector.shape_cast %101 : vector<8x16x4xbf16> to vector<128x4xbf16>
    %c2_52 = arith.constant 2 : index
    %c0_53 = arith.constant 0 : index
    %c0_54 = arith.constant 0 : index
    %103 = vector.load %arg6[%c2_52, %c0_53, %c0_54] : memref<9x4x4xbf16, #tpu.memory_space<vmem>>, vector<1x4x4xbf16>
    %104 = vector.shape_cast %103 : vector<1x4x4xbf16> to vector<4x4xbf16>
    %cst_55 = arith.constant dense<0.000000e+00> : vector<128x4xf32>
    %105 = tpu.matmul %102, %104, %cst_55 {dimension_numbers = #tpu.dot_dimension_numbers<[1], [0], [0], [1], [0, 0, 1, 1], [], []>} : vector<128x4xbf16>, vector<4x4xbf16>, vector<128x4xf32> -> vector<128x4xf32>
    %106 = arith.addf %100, %105 : vector<128x4xf32>
    %107 = vector.extract_strided_slice %87 {offsets = [1, 0, 0], sizes = [8, 16, 4], strides = [1, 1, 1]} : vector<10x24x4xbf16> to vector<8x16x4xbf16>
    %108 = vector.shape_cast %107 : vector<8x16x4xbf16> to vector<128x4xbf16>
    %c3_56 = arith.constant 3 : index
    %c0_57 = arith.constant 0 : index
    %c0_58 = arith.constant 0 : index
    %109 = vector.load %arg6[%c3_56, %c0_57, %c0_58] : memref<9x4x4xbf16, #tpu.memory_space<vmem>>, vector<1x4x4xbf16>
    %110 = vector.shape_cast %109 : vector<1x4x4xbf16> to vector<4x4xbf16>
    %cst_59 = arith.constant dense<0.000000e+00> : vector<128x4xf32>
    %111 = tpu.matmul %108, %110, %cst_59 {dimension_numbers = #tpu.dot_dimension_numbers<[1], [0], [0], [1], [0, 0, 1, 1], [], []>} : vector<128x4xbf16>, vector<4x4xbf16>, vector<128x4xf32> -> vector<128x4xf32>
    %112 = arith.addf %106, %111 : vector<128x4xf32>
    %113 = vector.extract_strided_slice %87 {offsets = [1, 1, 0], sizes = [8, 16, 4], strides = [1, 1, 1]} : vector<10x24x4xbf16> to vector<8x16x4xbf16>
    %114 = vector.shape_cast %113 : vector<8x16x4xbf16> to vector<128x4xbf16>
    %c4_60 = arith.constant 4 : index
    %c0_61 = arith.constant 0 : index
    %c0_62 = arith.constant 0 : index
    %115 = vector.load %arg6[%c4_60, %c0_61, %c0_62] : memref<9x4x4xbf16, #tpu.memory_space<vmem>>, vector<1x4x4xbf16>
    %116 = vector.shape_cast %115 : vector<1x4x4xbf16> to vector<4x4xbf16>
    %cst_63 = arith.constant dense<0.000000e+00> : vector<128x4xf32>
    %117 = tpu.matmul %114, %116, %cst_63 {dimension_numbers = #tpu.dot_dimension_numbers<[1], [0], [0], [1], [0, 0, 1, 1], [], []>} : vector<128x4xbf16>, vector<4x4xbf16>, vector<128x4xf32> -> vector<128x4xf32>
    %118 = arith.addf %112, %117 : vector<128x4xf32>
    %119 = vector.extract_strided_slice %87 {offsets = [1, 2, 0], sizes = [8, 16, 4], strides = [1, 1, 1]} : vector<10x24x4xbf16> to vector<8x16x4xbf16>
    %120 = vector.shape_cast %119 : vector<8x16x4xbf16> to vector<128x4xbf16>
    %c5_64 = arith.constant 5 : index
    %c0_65 = arith.constant 0 : index
    %c0_66 = arith.constant 0 : index
    %121 = vector.load %arg6[%c5_64, %c0_65, %c0_66] : memref<9x4x4xbf16, #tpu.memory_space<vmem>>, vector<1x4x4xbf16>
    %122 = vector.shape_cast %121 : vector<1x4x4xbf16> to vector<4x4xbf16>
    %cst_67 = arith.constant dense<0.000000e+00> : vector<128x4xf32>
    %123 = tpu.matmul %120, %122, %cst_67 {dimension_numbers = #tpu.dot_dimension_numbers<[1], [0], [0], [1], [0, 0, 1, 1], [], []>} : vector<128x4xbf16>, vector<4x4xbf16>, vector<128x4xf32> -> vector<128x4xf32>
    %124 = arith.addf %118, %123 : vector<128x4xf32>
    %125 = vector.extract_strided_slice %87 {offsets = [2, 0, 0], sizes = [8, 16, 4], strides = [1, 1, 1]} : vector<10x24x4xbf16> to vector<8x16x4xbf16>
    %126 = vector.shape_cast %125 : vector<8x16x4xbf16> to vector<128x4xbf16>
    %c6_68 = arith.constant 6 : index
    %c0_69 = arith.constant 0 : index
    %c0_70 = arith.constant 0 : index
    %127 = vector.load %arg6[%c6_68, %c0_69, %c0_70] : memref<9x4x4xbf16, #tpu.memory_space<vmem>>, vector<1x4x4xbf16>
    %128 = vector.shape_cast %127 : vector<1x4x4xbf16> to vector<4x4xbf16>
    %cst_71 = arith.constant dense<0.000000e+00> : vector<128x4xf32>
    %129 = tpu.matmul %126, %128, %cst_71 {dimension_numbers = #tpu.dot_dimension_numbers<[1], [0], [0], [1], [0, 0, 1, 1], [], []>} : vector<128x4xbf16>, vector<4x4xbf16>, vector<128x4xf32> -> vector<128x4xf32>
    %130 = arith.addf %124, %129 : vector<128x4xf32>
    %131 = vector.extract_strided_slice %87 {offsets = [2, 1, 0], sizes = [8, 16, 4], strides = [1, 1, 1]} : vector<10x24x4xbf16> to vector<8x16x4xbf16>
    %132 = vector.shape_cast %131 : vector<8x16x4xbf16> to vector<128x4xbf16>
    %c7_72 = arith.constant 7 : index
    %c0_73 = arith.constant 0 : index
    %c0_74 = arith.constant 0 : index
    %133 = vector.load %arg6[%c7_72, %c0_73, %c0_74] : memref<9x4x4xbf16, #tpu.memory_space<vmem>>, vector<1x4x4xbf16>
    %134 = vector.shape_cast %133 : vector<1x4x4xbf16> to vector<4x4xbf16>
    %cst_75 = arith.constant dense<0.000000e+00> : vector<128x4xf32>
    %135 = tpu.matmul %132, %134, %cst_75 {dimension_numbers = #tpu.dot_dimension_numbers<[1], [0], [0], [1], [0, 0, 1, 1], [], []>} : vector<128x4xbf16>, vector<4x4xbf16>, vector<128x4xf32> -> vector<128x4xf32>
    %136 = arith.addf %130, %135 : vector<128x4xf32>
    %137 = vector.extract_strided_slice %87 {offsets = [2, 2, 0], sizes = [8, 16, 4], strides = [1, 1, 1]} : vector<10x24x4xbf16> to vector<8x16x4xbf16>
    %138 = vector.shape_cast %137 : vector<8x16x4xbf16> to vector<128x4xbf16>
    %c8_76 = arith.constant 8 : index
    %c0_77 = arith.constant 0 : index
    %c0_78 = arith.constant 0 : index
    %139 = vector.load %arg6[%c8_76, %c0_77, %c0_78] : memref<9x4x4xbf16, #tpu.memory_space<vmem>>, vector<1x4x4xbf16>
    %140 = vector.shape_cast %139 : vector<1x4x4xbf16> to vector<4x4xbf16>
    %cst_79 = arith.constant dense<0.000000e+00> : vector<128x4xf32>
    %141 = tpu.matmul %138, %140, %cst_79 {dimension_numbers = #tpu.dot_dimension_numbers<[1], [0], [0], [1], [0, 0, 1, 1], [], []>} : vector<128x4xbf16>, vector<4x4xbf16>, vector<128x4xf32> -> vector<128x4xf32>
    %142 = arith.addf %136, %141 : vector<128x4xf32>
    %c0_80 = arith.constant 0 : index
    %c0_81 = arith.constant 0 : index
    %143 = vector.load %arg7[%c0_80, %c0_81] : memref<1x4xf32, #tpu.memory_space<vmem>>, vector<1x4xf32>
    %144 = vector.broadcast %143 : vector<1x4xf32> to vector<128x4xf32>
    %145 = arith.addf %142, %144 : vector<128x4xf32>
    %cst_82 = arith.constant 0.000000e+00 : f32
    %146 = vector.broadcast %cst_82 : f32 to vector<128x4xf32>
    %147 = arith.maximumf %145, %146 : vector<128x4xf32>
    %c0_83 = arith.constant 0 : index
    %c0_84 = arith.constant 0 : index
    %c0_85 = arith.constant 0 : index
    %148 = vector.load %arg8[%c0_83, %c0_84, %c0_85] : memref<1x128x4xf32, #tpu.memory_space<vmem>>, vector<1x128x4xf32>
    %149 = vector.shape_cast %148 : vector<1x128x4xf32> to vector<128x4xf32>
    %150 = vector.shape_cast %147 : vector<128x4xf32> to vector<1x128x4xf32>
    tpu.vector_store %arg8[%c0_83, %c0_84, %c0_85], %150 {strides = array<i32>} : memref<1x128x4xf32, #tpu.memory_space<vmem>>, vector<1x128x4xf32>,
    return
  }
  func.func @transform_0(%arg0: i32, %arg1: i32) -> (i32, i32, i32, i32, i32) {
    %c0_i32 = arith.constant 0 : i32
    %c0_i32_0 = arith.constant 0 : i32
    %c0_i32_1 = arith.constant 0 : i32
    %c0_i32_2 = arith.constant 0 : i32
    return %arg0, %arg1, %c0_i32, %c0_i32_0, %c0_i32_1 : i32, i32, i32, i32, i32
  }
  func.func @transform_1(%arg0: i32, %arg1: i32) -> (i32, i32, i32, i32, i32) {
    %c0_i32 = arith.constant 0 : i32
    %c0_i32_0 = arith.constant 0 : i32
    %c0_i32_1 = arith.constant 0 : i32
    %c0_i32_2 = arith.constant 0 : i32
    return %arg0, %arg1, %c0_i32, %c0_i32_0, %c0_i32_1 : i32, i32, i32, i32, i32
  }
  func.func @transform_2(%arg0: i32, %arg1: i32) -> (i32, i32, i32) {
    %c0_i32 = arith.constant 0 : i32
    %c0_i32_0 = arith.constant 0 : i32
    %c0_i32_1 = arith.constant 0 : i32
    %c0_i32_2 = arith.constant 0 : i32
    return %c0_i32, %c0_i32_0, %c0_i32_1 : i32, i32, i32
  }
  func.func @transform_3(%arg0: i32, %arg1: i32) -> (i32, i32) {
    %c0_i32 = arith.constant 0 : i32
    %c0_i32_0 = arith.constant 0 : i32
    %c0_i32_1 = arith.constant 0 : i32
    return %c0_i32, %c0_i32_0 : i32, i32
  }
  func.func @transform_4(%arg0: i32, %arg1: i32) -> (i32, i32, i32) {
    %c0_i32 = arith.constant 0 : i32
    %c0_i32_0 = arith.constant 0 : i32
    %c0_i32_1 = arith.constant 0 : i32
    %c0_i32_2 = arith.constant 0 : i32
    return %c0_i32, %c0_i32_0, %c0_i32_1 : i32, i32, i32
  }
  func.func @transform_5(%arg0: i32, %arg1: i32) -> (i32, i32) {
    %c0_i32 = arith.constant 0 : i32
    %c0_i32_0 = arith.constant 0 : i32
    %c0_i32_1 = arith.constant 0 : i32
    return %c0_i32, %c0_i32_0 : i32, i32
  }
  func.func @transform_6(%arg0: i32, %arg1: i32) -> (i32, i32, i32) {
    %c0_i32 = arith.constant 0 : i32
    %c0_i32_0 = arith.constant 0 : i32
    return %arg0, %arg1, %c0_i32 : i32, i32, i32
  }
}

</mosaic_0001>

<llo_original>
// kernel: tpu_custom_call.1
$region0: #{tpu_custom_call.1}
  #allocation0 [shape = 'u32[]', space=smem, size = 0x4, offset = 0x4, fixed_abs, tag = 'smem constant byte address 0x4 - core index']
  #allocation1 [shape = 'u32[144,128]{1,0:T(1,128)}', space=vmem, size = 0x12000, scoped, tag = 'internal scratch']
  %s0 = inlined_call_operand.vmem [shape: bf16[2,2,12,26,4], index: 0, kind: input, shape index: {}]
  %s1 = inlined_call_operand.vmem [shape: bf16[2,2,12,26,4], index: 1, kind: input, shape index: {}]
  %s2 = inlined_call_operand.vmem [shape: bf16[9,8,4], index: 2, kind: input, shape index: {}]
  %s3 = inlined_call_operand.vmem [shape: f32[1,4], index: 3, kind: input, shape index: {}]
  %s4 = inlined_call_operand.vmem [shape: bf16[9,4,4], index: 4, kind: input, shape index: {}]
  %s5 = inlined_call_operand.vmem [shape: f32[1,4], index: 5, kind: input, shape index: {}]
  %s6 = inlined_call_operand.vmem [shape: f32[2,256,4], index: 6, kind: output, shape index: {}]
  %s7 = sld [smem:[#allocation0]]
  $region57: #{tpu_custom_call.1} parent=0
    _
  %s9 = ssub.s32 1, %s7
  %s10 = scalar_select 0, %s9, %s7
  loop: start=0, step=1, limit=6
  $region2: #{tpu_custom_call.1} parent=0 // loop_pre_header
    _
  $region3: #{tpu_custom_call.1} parent=0 // loop_header
    %s12 = sphi 0, %s16
    %p13 = scmp.ge.s32.totalorder %s12, 6
    %s19 = sphi 0, %s31
    %s20 = sphi 0, %s27
    %s21 = sphi 0, %s19
    %s22 = sphi 0, %s20
    %s23 = sphi 0, %s21
    %s24 = sphi 0, %s22
    %s36 = sphi 0, %s38
    %s39 = sphi 0, %s36
    %s40 = sphi 0, %s39
    %s56 = sphi 0, %s40
    %s64 = sphi 0, %s66
    %s67 = sphi 0, %s64
    %s68 = sphi 0, %s67
    %s84 = sphi 0, %s68
    %s88 = sphi 0, %s88
    %s90 = sphi 0, %s88
    %s91 = sphi 0, %s90
    %s105 = sphi 0, %s91
    %s109 = sphi 0, %s109
    %s111 = sphi 0, %s109
    %s112 = sphi 0, %s111
    %s126 = sphi 0, %s112
    %s130 = sphi 0, %s130
    %s132 = sphi 0, %s130
    %s133 = sphi 0, %s132
    %s147 = sphi 0, %s133
    %s151 = sphi 0, %s151
    %s153 = sphi 0, %s151
    %s154 = sphi 0, %s153
    %s168 = sphi 0, %s154
    %s176 = sphi 0, %s178
    %s179 = sphi 0, %s176
    %s180 = sphi 0, %s179
    %s196 = sphi 0, %s180
  $region4: #{tpu_custom_call.1} parent=0 // loop_header_branch
    %15 = sbr.rel (%p13) target = $region8
  $region5: #{tpu_custom_call.1} parent=0 // loop_body
    %s17 = ssub.s32 %s12, 1
    %s18 = ssub.s32 %s12, 2
    %s25 = sadd.s32 1, %s20
    %p26 = scmp.ge.s32.totalorder %s25, 2
    %s27 = scalar_select %p26, 0, %s25
    %s28 = sadd.s32 1, %s19
    %s29 = scalar_select %p26, %s28, %s19
    %p30 = scmp.ge.s32.totalorder %s29, 2
    %s31 = scalar_select %p30, 0, %s29
    %s32 = ssub.s32 %s19, %s31
    %s33 = ssub.s32 %s20, %s27
    %s34 = sor.u32 %s32, %s33
    %p35 = scmp.eq.s32.totalorder %s34, 0
    %s37 = sadd.s32 %s36, 1
    %s38 = scalar_select %p35, %s36, %s37
    %p41 = pneg %p35
    %p42 = scmp.eq.s32.totalorder %s12, 3
    %p43 = por %p41, %p42
    %p44 = scmp.ne.s32.totalorder %s36, %s39
    %p45 = scmp.eq.s32.totalorder %s12, 0
    %p46 = por %p44, %p45
    %p47 = scmp.ne.s32.totalorder %s36, %s39
    %p48 = scmp.eq.s32.totalorder %s17, 3
    %p49 = por %p47, %p48
    %p50 = scmp.ne.s32.totalorder %s39, %s40
    %p51 = scmp.eq.s32.totalorder %s17, 0
    %p52 = por %p50, %p51
    %p53 = scmp.ne.s32.totalorder %s39, %s40
    %p54 = scmp.eq.s32.totalorder %s18, 3
    %p55 = por %p53, %p54
    %p57 = scmp.ne.s32.totalorder %s40, %s56
    %p58 = scmp.eq.s32.totalorder %s18, 0
    %p59 = por %p57, %p58
    %s60 = ssub.s32 %s19, %s31
    %s61 = ssub.s32 %s20, %s27
    %s62 = sor.u32 %s60, %s61
    %p63 = scmp.eq.s32.totalorder %s62, 0
    %s65 = sadd.s32 %s64, 1
    %s66 = scalar_select %p63, %s64, %s65
    %p69 = pneg %p63
    %p70 = scmp.eq.s32.totalorder %s12, 3
    %p71 = por %p69, %p70
    %p72 = scmp.ne.s32.totalorder %s64, %s67
    %p73 = scmp.eq.s32.totalorder %s12, 0
    %p74 = por %p72, %p73
    %p75 = scmp.ne.s32.totalorder %s64, %s67
    %p76 = scmp.eq.s32.totalorder %s17, 3
    %p77 = por %p75, %p76
    %p78 = scmp.ne.s32.totalorder %s67, %s68
    %p79 = scmp.eq.s32.totalorder %s17, 0
    %p80 = por %p78, %p79
    %p81 = scmp.ne.s32.totalorder %s67, %s68
    %p82 = scmp.eq.s32.totalorder %s18, 3
    %p83 = por %p81, %p82
    %p85 = scmp.ne.s32.totalorder %s68, %s84
    %p86 = scmp.eq.s32.totalorder %s18, 0
    %p87 = por %p85, %p86
    %s89 = sadd.s32 %s88, 1
    %p92 = scmp.eq.s32.totalorder %s12, 3
    %p93 = scmp.ne.s32.totalorder %s88, %s90
    %p94 = scmp.eq.s32.totalorder %s12, 0
    %p95 = por %p93, %p94
    %p96 = scmp.ne.s32.totalorder %s88, %s90
    %p97 = scmp.eq.s32.totalorder %s17, 3
    %p98 = por %p96, %p97
    %p99 = scmp.ne.s32.totalorder %s90, %s91
    %p100 = scmp.eq.s32.totalorder %s17, 0
    %p101 = por %p99, %p100
    %p102 = scmp.ne.s32.totalorder %s90, %s91
    %p103 = scmp.eq.s32.totalorder %s18, 3
    %p104 = por %p102, %p103
    %p106 = scmp.ne.s32.totalorder %s91, %s105
    %p107 = scmp.eq.s32.totalorder %s18, 0
    %p108 = por %p106, %p107
    %s110 = sadd.s32 %s109, 1
    %p113 = scmp.eq.s32.totalorder %s12, 3
    %p114 = scmp.ne.s32.totalorder %s109, %s111
    %p115 = scmp.eq.s32.totalorder %s12, 0
    %p116 = por %p114, %p115
    %p117 = scmp.ne.s32.totalorder %s109, %s111
    %p118 = scmp.eq.s32.totalorder %s17, 3
    %p119 = por %p117, %p118
    %p120 = scmp.ne.s32.totalorder %s111, %s112
    %p121 = scmp.eq.s32.totalorder %s17, 0
    %p122 = por %p120, %p121
    %p123 = scmp.ne.s32.totalorder %s111, %s112
    %p124 = scmp.eq.s32.totalorder %s18, 3
    %p125 = por %p123, %p124
    %p127 = scmp.ne.s32.totalorder %s112, %s126
    %p128 = scmp.eq.s32.totalorder %s18, 0
    %p129 = por %p127, %p128
    %s131 = sadd.s32 %s130, 1
    %p134 = scmp.eq.s32.totalorder %s12, 3
    %p135 = scmp.ne.s32.totalorder %s130, %s132
    %p136 = scmp.eq.s32.totalorder %s12, 0
    %p137 = por %p135, %p136
    %p138 = scmp.ne.s32.totalorder %s130, %s132
    %p139 = scmp.eq.s32.totalorder %s17, 3
    %p140 = por %p138, %p139
    %p141 = scmp.ne.s32.totalorder %s132, %s133
    %p142 = scmp.eq.s32.totalorder %s17, 0
    %p143 = por %p141, %p142
    %p144 = scmp.ne.s32.totalorder %s132, %s133
    %p145 = scmp.eq.s32.totalorder %s18, 3
    %p146 = por %p144, %p145
    %p148 = scmp.ne.s32.totalorder %s133, %s147
    %p149 = scmp.eq.s32.totalorder %s18, 0
    %p150 = por %p148, %p149
    %s152 = sadd.s32 %s151, 1
    %p155 = scmp.eq.s32.totalorder %s12, 3
    %p156 = scmp.ne.s32.totalorder %s151, %s153
    %p157 = scmp.eq.s32.totalorder %s12, 0
    %p158 = por %p156, %p157
    %p159 = scmp.ne.s32.totalorder %s151, %s153
    %p160 = scmp.eq.s32.totalorder %s17, 3
    %p161 = por %p159, %p160
    %p162 = scmp.ne.s32.totalorder %s153, %s154
    %p163 = scmp.eq.s32.totalorder %s17, 0
    %p164 = por %p162, %p163
    %p165 = scmp.ne.s32.totalorder %s153, %s154
    %p166 = scmp.eq.s32.totalorder %s18, 3
    %p167 = por %p165, %p166
    %p169 = scmp.ne.s32.totalorder %s154, %s168
    %p170 = scmp.eq.s32.totalorder %s18, 0
    %p171 = por %p169, %p170
    %s172 = ssub.s32 %s19, %s31
    %s173 = ssub.s32 %s20, %s27
    %s174 = sor.u32 %s172, %s173
    %p175 = scmp.eq.s32.totalorder %s174, 0
    %s177 = sadd.s32 %s176, 1
    %s178 = scalar_select %p175, %s176, %s177
    %p181 = pneg %p175
    %p182 = scmp.eq.s32.totalorder %s12, 3
    %p183 = por %p181, %p182
    %p184 = scmp.ne.s32.totalorder %s176, %s179
    %p185 = scmp.eq.s32.totalorder %s12, 0
    %p186 = por %p184, %p185
    %p187 = scmp.ne.s32.totalorder %s176, %s179
    %p188 = scmp.eq.s32.totalorder %s17, 3
    %p189 = por %p187, %p188
    %p190 = scmp.ne.s32.totalorder %s179, %s180
    %p191 = scmp.eq.s32.totalorder %s17, 0
    %p192 = por %p190, %p191
    %p193 = scmp.ne.s32.totalorder %s179, %s180
    %p194 = scmp.eq.s32.totalorder %s18, 3
    %p195 = por %p193, %p194
    %p197 = scmp.ne.s32.totalorder %s180, %s196
    %p198 = scmp.eq.s32.totalorder %s18, 0
    %p199 = por %p197, %p198
    %p200 = scmp.le.s32.totalorder 1, %s12
    %p201 = scmp.lt.s32.totalorder %s12, 5
    %p202 = pnand %p200, %p201
    %p203 = pneg %p202
    // Predicated region
    $region9: #{tpu_custom_call.1} parent=5 // pred_check
      _
    $region10: #{tpu_custom_call.1} parent=5 // pred_check_branch
      %205 = sbr.rel (%p202) target = $region12
    $region11: #{tpu_custom_call.1} parent=5 // pred_region
      %s206 = ssub.s32 %s12, 1
      // Predicated region
      $region13: #{tpu_custom_call.1} parent=11 // pred_check
        %p207 = pneg %p101
      $region14: #{tpu_custom_call.1} parent=11 // pred_check_branch
        %209 = sbr.rel (%p207) target = $region16
      $region15: #{tpu_custom_call.1} parent=11 // pred_region
        _
      $region16: #{tpu_custom_call.1} parent=11 // pred_fallthru
        _
      // Predicated region
      $region17: #{tpu_custom_call.1} parent=11 // pred_check
        %p210 = pneg %p122
      $region18: #{tpu_custom_call.1} parent=11 // pred_check_branch
        %212 = sbr.rel (%p210) target = $region20
      $region19: #{tpu_custom_call.1} parent=11 // pred_region
        _
      $region20: #{tpu_custom_call.1} parent=11 // pred_fallthru
        _
      // Predicated region
      $region21: #{tpu_custom_call.1} parent=11 // pred_check
        %p213 = pneg %p143
      $region22: #{tpu_custom_call.1} parent=11 // pred_check_branch
        %215 = sbr.rel (%p213) target = $region24
      $region23: #{tpu_custom_call.1} parent=11 // pred_region
        _
      $region24: #{tpu_custom_call.1} parent=11 // pred_fallthru
        _
      // Predicated region
      $region25: #{tpu_custom_call.1} parent=11 // pred_check
        %p216 = pneg %p164
      $region26: #{tpu_custom_call.1} parent=11 // pred_check_branch
        %218 = sbr.rel (%p216) target = $region28
      $region27: #{tpu_custom_call.1} parent=11 // pred_region
        _
      $region28: #{tpu_custom_call.1} parent=11 // pred_fallthru
        _
    $region12: #{tpu_custom_call.1} parent=5 // pred_fallthru
      _
    %p219 = scmp.lt.s32.totalorder %s12, 4
    // Predicated region
    $region29: #{tpu_custom_call.1} parent=5 // pred_check
      %p220 = pneg %p219
    $region30: #{tpu_custom_call.1} parent=5 // pred_check_branch
      %222 = sbr.rel (%p220) target = $region32
    $region31: #{tpu_custom_call.1} parent=5 // pred_region
      // Predicated region
      $region33: #{tpu_custom_call.1} parent=31 // pred_check
        %p223 = pneg %p46
      $region34: #{tpu_custom_call.1} parent=31 // pred_check_branch
        %225 = sbr.rel (%p223) target = $region36
      $region35: #{tpu_custom_call.1} parent=31 // pred_region
        %p226 = scmp.lt.s32.totalorder %s19, 1
        %s227 = scalar_select %p226, %s19, 1
        %p228 = scmp.lt.s32.totalorder %s20, 1
        %s229 = scalar_select %p228, %s20, 1
        %s230 = smul.addr %s229, 48
        %s231 = smul.addr %s227, 96
        %s232 = sadd.s32 %s230, %s231
        %s233 = smul.addr %s232, 4
        %s234 = scalar_lea.vmem %s0, %s233
      $region36: #{tpu_custom_call.1} parent=31 // pred_fallthru
        _
      // Predicated region
      $region37: #{tpu_custom_call.1} parent=31 // pred_check
        %p235 = pneg %p74
      $region38: #{tpu_custom_call.1} parent=31 // pred_check_branch
        %237 = sbr.rel (%p235) target = $region40
      $region39: #{tpu_custom_call.1} parent=31 // pred_region
        %p238 = scmp.lt.s32.totalorder %s19, 1
        %s239 = scalar_select %p238, %s19, 1
        %p240 = scmp.lt.s32.totalorder %s20, 1
        %s241 = scalar_select %p240, %s20, 1
        %s242 = smul.addr %s241, 48
        %s243 = smul.addr %s239, 96
        %s244 = sadd.s32 %s242, %s243
        %s245 = smul.addr %s244, 4
        %s246 = scalar_lea.vmem %s1, %s245
      $region40: #{tpu_custom_call.1} parent=31 // pred_fallthru
        _
    $region32: #{tpu_custom_call.1} parent=5 // pred_fallthru
      _
    %p247 = scmp.le.s32.totalorder 1, %s12
    %p248 = scmp.lt.s32.totalorder %s12, 5
    %p249 = pnand %p247, %p248
    %p250 = pneg %p249
    // Predicated region
    $region41: #{tpu_custom_call.1} parent=5 // pred_check
      _
    $region42: #{tpu_custom_call.1} parent=5 // pred_check_branch
      %252 = sbr.rel (%p249) target = $region44
    $region43: #{tpu_custom_call.1} parent=5 // pred_region
      %s253 = ssub.s32 %s12, 1
      %p254 = scmp.lt.s32.totalorder %s21, 1
      %s255 = scalar_select %p254, %s21, 1
      %p256 = scmp.lt.s32.totalorder %s22, 1
      %s257 = scalar_select %p256, %s22, 1
      %s258 = smul.addr %s257, 48
      %s259 = smul.addr %s255, 96
      %s260 = sadd.s32 %s258, %s259
      %s261 = smul.addr %s260, 4
      %s262 = scalar_lea.vmem %s0, %s261
      %p263 = pneg %p52
      %p264 = pneg %p49
      %p265 = scmp.lt.s32.totalorder %s21, 1
      %s266 = scalar_select %p265, %s21, 1
      %p267 = scmp.lt.s32.totalorder %s22, 1
      %s268 = scalar_select %p267, %s22, 1
      %s269 = smul.addr %s268, 48
      %s270 = smul.addr %s266, 96
      %s271 = sadd.s32 %s269, %s270
      %s272 = smul.addr %s271, 4
      %s273 = scalar_lea.vmem %s1, %s272
      %p274 = pneg %p80
      %p275 = pneg %p77
      %p276 = pneg %p101
      %p277 = pneg %p98
      %p278 = pneg %p122
      %p279 = pneg %p119
      %p280 = pneg %p143
      %p281 = pneg %p140
      %p282 = pneg %p164
      %p283 = pneg %p161
      %p284 = pneg %p192
      %p285 = pneg %p189
      %s286 = smul.u32 16, %s22
      %p287 = scmp.lt.s32.totalorder %s21, 1
      %s288 = scalar_select %p287, %s21, 1
      %p289 = scmp.lt.s32.totalorder %s286, 31
      %s290 = scalar_select %p289, %s286, 31
      %s291 = smul.addr %s288, 32
      %s292 = sadd.s32 %s290, %s291
      %s293 = smul.addr %s292, 8
      %s294 = scalar_lea.vmem %s6, %s293
      %p295 = scmp.lt.s32.totalorder %s21, 1
      %s296 = scalar_select %p295, %s21, 1
      %p297 = scmp.lt.s32.totalorder %s22, 1
      %s298 = scalar_select %p297, %s22, 1
      %s299 = smul.addr %s298, 48
      %s300 = smul.addr %s296, 96
      %s301 = sadd.s32 %s299, %s300
      %s302 = smul.addr %s301, 4
      %s303 = scalar_lea.vmem %s0, %s302
      %p304 = scmp.lt.s32.totalorder %s21, 1
      %s305 = scalar_select %p304, %s21, 1
      %p306 = scmp.lt.s32.totalorder %s22, 1
      %s307 = scalar_select %p306, %s22, 1
      %s308 = smul.addr %s307, 48
      %s309 = smul.addr %s305, 96
      %s310 = sadd.s32 %s308, %s309
      %s311 = smul.addr %s310, 4
      %s312 = scalar_lea.vmem %s1, %s311
      %s313 = smul.u32 16, %s22
      %p314 = scmp.lt.s32.totalorder %s21, 1
      %s315 = scalar_select %p314, %s21, 1
      %p316 = scmp.lt.s32.totalorder %s313, 31
      %s317 = scalar_select %p316, %s313, 31
      %s318 = smul.addr %s315, 32
      %s319 = sadd.s32 %s317, %s318
      %s320 = smul.addr %s319, 8
      %s321 = scalar_lea.vmem %s6, %s320
      %s322 = smul.u32 16, %s22
      %v324 = vld [vmem:[%s303] sm:$0xf]
      %v325 = vld [vmem:[%s303 + $0x4] sm:$0xf]
      %v326 = vld [vmem:[%s303 + $0x8] sm:$0xf]
      %v327 = vld [vmem:[%s303 + $0xc] sm:$0x1]
      %v328 = vld [vmem:[%s303 + $0x10] sm:$0xf]
      %v329 = vld [vmem:[%s303 + $0x14] sm:$0xf]
      %v330 = vld [vmem:[%s303 + $0x18] sm:$0xf]
      %v331 = vld [vmem:[%s303 + $0x1c] sm:$0x1]
      %v332 = vld [vmem:[%s303 + $0x20] sm:$0xf]
      %v333 = vld [vmem:[%s303 + $0x24] sm:$0xf]
      %v334 = vld [vmem:[%s303 + $0x28] sm:$0xf]
      %v335 = vld [vmem:[%s303 + $0x2c] sm:$0x1]
      %v336 = vld [vmem:[%s303 + $0x30] sm:$0xf]
      %v337 = vld [vmem:[%s303 + $0x34] sm:$0xf]
      %v338 = vld [vmem:[%s303 + $0x38] sm:$0xf]
      %v339 = vld [vmem:[%s303 + $0x3c] sm:$0x1]
      %v340 = vld [vmem:[%s303 + $0x40] sm:$0xf]
      %v341 = vld [vmem:[%s303 + $0x44] sm:$0xf]
      %v342 = vld [vmem:[%s303 + $0x48] sm:$0xf]
      %v343 = vld [vmem:[%s303 + $0x4c] sm:$0x1]
      %v344 = vld [vmem:[%s303 + $0x50] sm:$0xf]
      %v345 = vld [vmem:[%s303 + $0x54] sm:$0xf]
      %v346 = vld [vmem:[%s303 + $0x58] sm:$0xf]
      %v347 = vld [vmem:[%s303 + $0x5c] sm:$0x1]
      %v348 = vld [vmem:[%s303 + $0x60] sm:$0xf]
      %v349 = vld [vmem:[%s303 + $0x64] sm:$0xf]
      %v350 = vld [vmem:[%s303 + $0x68] sm:$0xf]
      %v351 = vld [vmem:[%s303 + $0x6c] sm:$0x1]
      %v352 = vld [vmem:[%s303 + $0x70] sm:$0xf]
      %v353 = vld [vmem:[%s303 + $0x74] sm:$0xf]
      %v354 = vld [vmem:[%s303 + $0x78] sm:$0xf]
      %v355 = vld [vmem:[%s303 + $0x7c] sm:$0x1]
      %v356 = vld [vmem:[%s303 + $0x80] sm:$0xf]
      %v357 = vld [vmem:[%s303 + $0x84] sm:$0xf]
      %v358 = vld [vmem:[%s303 + $0x88] sm:$0xf]
      %v359 = vld [vmem:[%s303 + $0x8c] sm:$0x1]
      %v360 = vld [vmem:[%s303 + $0x90] sm:$0xf]
      %v361 = vld [vmem:[%s303 + $0x94] sm:$0xf]
      %v362 = vld [vmem:[%s303 + $0x98] sm:$0xf]
      %v363 = vld [vmem:[%s303 + $0x9c] sm:$0x1]
      %v364 = vld [vmem:[%s303 + $0xa0] sm:$0xf]
      %v365 = vld [vmem:[%s303 + $0xa4] sm:$0xf]
      %v366 = vld [vmem:[%s303 + $0xa8] sm:$0xf]
      %v367 = vld [vmem:[%s303 + $0xac] sm:$0x1]
      %v368 = vld [vmem:[%s303 + $0xb0] sm:$0xf]
      %v369 = vld [vmem:[%s303 + $0xb4] sm:$0xf]
      %v370 = vld [vmem:[%s303 + $0xb8] sm:$0xf]
      %v371 = vld [vmem:[%s303 + $0xbc] sm:$0x1]
      %v372 = vld [vmem:[%s312] sm:$0xf]
      %v373 = vld [vmem:[%s312 + $0x4] sm:$0xf]
      %v374 = vld [vmem:[%s312 + $0x8] sm:$0xf]
      %v375 = vld [vmem:[%s312 + $0xc] sm:$0x1]
      %v376 = vld [vmem:[%s312 + $0x10] sm:$0xf]
      %v377 = vld [vmem:[%s312 + $0x14] sm:$0xf]
      %v378 = vld [vmem:[%s312 + $0x18] sm:$0xf]
      %v379 = vld [vmem:[%s312 + $0x1c] sm:$0x1]
      %v380 = vld [vmem:[%s312 + $0x20] sm:$0xf]
      %v381 = vld [vmem:[%s312 + $0x24] sm:$0xf]
      %v382 = vld [vmem:[%s312 + $0x28] sm:$0xf]
      %v383 = vld [vmem:[%s312 + $0x2c] sm:$0x1]
      %v384 = vld [vmem:[%s312 + $0x30] sm:$0xf]
      %v385 = vld [vmem:[%s312 + $0x34] sm:$0xf]
      %v386 = vld [vmem:[%s312 + $0x38] sm:$0xf]
      %v387 = vld [vmem:[%s312 + $0x3c] sm:$0x1]
      %v388 = vld [vmem:[%s312 + $0x40] sm:$0xf]
      %v389 = vld [vmem:[%s312 + $0x44] sm:$0xf]
      %v390 = vld [vmem:[%s312 + $0x48] sm:$0xf]
      %v391 = vld [vmem:[%s312 + $0x4c] sm:$0x1]
      %v392 = vld [vmem:[%s312 + $0x50] sm:$0xf]
      %v393 = vld [vmem:[%s312 + $0x54] sm:$0xf]
      %v394 = vld [vmem:[%s312 + $0x58] sm:$0xf]
      %v395 = vld [vmem:[%s312 + $0x5c] sm:$0x1]
      %v396 = vld [vmem:[%s312 + $0x60] sm:$0xf]
      %v397 = vld [vmem:[%s312 + $0x64] sm:$0xf]
      %v398 = vld [vmem:[%s312 + $0x68] sm:$0xf]
      %v399 = vld [vmem:[%s312 + $0x6c] sm:$0x1]
      %v400 = vld [vmem:[%s312 + $0x70] sm:$0xf]
      %v401 = vld [vmem:[%s312 + $0x74] sm:$0xf]
      %v402 = vld [vmem:[%s312 + $0x78] sm:$0xf]
      %v403 = vld [vmem:[%s312 + $0x7c] sm:$0x1]
      %v404 = vld [vmem:[%s312 + $0x80] sm:$0xf]
      %v405 = vld [vmem:[%s312 + $0x84] sm:$0xf]
      %v406 = vld [vmem:[%s312 + $0x88] sm:$0xf]
      %v407 = vld [vmem:[%s312 + $0x8c] sm:$0x1]
      %v408 = vld [vmem:[%s312 + $0x90] sm:$0xf]
      %v409 = vld [vmem:[%s312 + $0x94] sm:$0xf]
      %v410 = vld [vmem:[%s312 + $0x98] sm:$0xf]
      %v411 = vld [vmem:[%s312 + $0x9c] sm:$0x1]
      %v412 = vld [vmem:[%s312 + $0xa0] sm:$0xf]
      %v413 = vld [vmem:[%s312 + $0xa4] sm:$0xf]
      %v414 = vld [vmem:[%s312 + $0xa8] sm:$0xf]
      %v415 = vld [vmem:[%s312 + $0xac] sm:$0x1]
      %v416 = vld [vmem:[%s312 + $0xb0] sm:$0xf]
      %v417 = vld [vmem:[%s312 + $0xb4] sm:$0xf]
      %v418 = vld [vmem:[%s312 + $0xb8] sm:$0xf]
      %v419 = vld [vmem:[%s312 + $0xbc] sm:$0x1]
      %v468 = vunpack.c.l.b16 %v324
      %v469 = vunpack.c.l.b16 %v325
      %v470 = vunpack.c.l.b16 %v326
      %v471 = vunpack.c.l.b16 %v327
      %v472 = vunpack.c.l.b16 %v328
      %v473 = vunpack.c.l.b16 %v329
      %v474 = vunpack.c.l.b16 %v330
      %v475 = vunpack.c.l.b16 %v331
      %v476 = vunpack.c.l.b16 %v332
      %v477 = vunpack.c.l.b16 %v333
      %v478 = vunpack.c.l.b16 %v334
      %v479 = vunpack.c.l.b16 %v335
      %v480 = vunpack.c.l.b16 %v336
      %v481 = vunpack.c.l.b16 %v337
      %v482 = vunpack.c.l.b16 %v338
      %v483 = vunpack.c.l.b16 %v339
      %v484 = vunpack.c.l.b16 %v340
      %v485 = vunpack.c.l.b16 %v341
      %v486 = vunpack.c.l.b16 %v342
      %v487 = vunpack.c.l.b16 %v343
      %v488 = vunpack.c.l.b16 %v344
      %v489 = vunpack.c.l.b16 %v345
      %v490 = vunpack.c.l.b16 %v346
      %v491 = vunpack.c.l.b16 %v347
      %v492 = vunpack.c.l.b16 %v348
      %v493 = vunpack.c.l.b16 %v349
      %v494 = vunpack.c.l.b16 %v350
      %v495 = vunpack.c.l.b16 %v351
      %v496 = vunpack.c.l.b16 %v352
      %v497 = vunpack.c.l.b16 %v353
      %v498 = vunpack.c.l.b16 %v354
      %v499 = vunpack.c.l.b16 %v355
      %v500 = vunpack.c.l.b16 %v356
      %v501 = vunpack.c.l.b16 %v357
      %v502 = vunpack.c.l.b16 %v358
      %v503 = vunpack.c.l.b16 %v359
      %v504 = vunpack.c.l.b16 %v360
      %v505 = vunpack.c.l.b16 %v361
      %v506 = vunpack.c.l.b16 %v362
      %v507 = vunpack.c.l.b16 %v363
      %v508 = vunpack.c.l.b16 %v364
      %v509 = vunpack.c.l.b16 %v365
      %v510 = vunpack.c.l.b16 %v366
      %v511 = vunpack.c.l.b16 %v367
      %v512 = vunpack.c.l.b16 %v368
      %v513 = vunpack.c.l.b16 %v369
      %v514 = vunpack.c.l.b16 %v370
      %v515 = vunpack.c.l.b16 %v371
      %v516 = vpack.c.b16 %v469, %v468
      %v517 = vpack.c.b16 %v471, %v470
      %v518 = vpack.c.b16 %v473, %v472
      %v519 = vpack.c.b16 %v475, %v474
      %v520 = vpack.c.b16 %v477, %v476
      %v521 = vpack.c.b16 %v479, %v478
      %v522 = vpack.c.b16 %v481, %v480
      %v523 = vpack.c.b16 %v483, %v482
      %v524 = vpack.c.b16 %v485, %v484
      %v525 = vpack.c.b16 %v487, %v486
      %v526 = vpack.c.b16 %v489, %v488
      %v527 = vpack.c.b16 %v491, %v490
      %v528 = vpack.c.b16 %v493, %v492
      %v529 = vpack.c.b16 %v495, %v494
      %v530 = vpack.c.b16 %v497, %v496
      %v531 = vpack.c.b16 %v499, %v498
      %v532 = vpack.c.b16 %v501, %v500
      %v533 = vpack.c.b16 %v503, %v502
      %v534 = vpack.c.b16 %v505, %v504
      %v535 = vpack.c.b16 %v507, %v506
      %v536 = vpack.c.b16 %v509, %v508
      %v537 = vpack.c.b16 %v511, %v510
      %v538 = vpack.c.b16 %v513, %v512
      %v539 = vpack.c.b16 %v515, %v514
      %v588 = vunpack.c.l.b16 %v372
      %v589 = vunpack.c.l.b16 %v373
      %v590 = vunpack.c.l.b16 %v374
      %v591 = vunpack.c.l.b16 %v375
      %v592 = vunpack.c.l.b16 %v376
      %v593 = vunpack.c.l.b16 %v377
      %v594 = vunpack.c.l.b16 %v378
      %v595 = vunpack.c.l.b16 %v379
      %v596 = vunpack.c.l.b16 %v380
      %v597 = vunpack.c.l.b16 %v381
      %v598 = vunpack.c.l.b16 %v382
      %v599 = vunpack.c.l.b16 %v383
      %v600 = vunpack.c.l.b16 %v384
      %v601 = vunpack.c.l.b16 %v385
      %v602 = vunpack.c.l.b16 %v386
      %v603 = vunpack.c.l.b16 %v387
      %v604 = vunpack.c.l.b16 %v388
      %v605 = vunpack.c.l.b16 %v389
      %v606 = vunpack.c.l.b16 %v390
      %v607 = vunpack.c.l.b16 %v391
      %v608 = vunpack.c.l.b16 %v392
      %v609 = vunpack.c.l.b16 %v393
      %v610 = vunpack.c.l.b16 %v394
      %v611 = vunpack.c.l.b16 %v395
      %v612 = vunpack.c.l.b16 %v396
      %v613 = vunpack.c.l.b16 %v397
      %v614 = vunpack.c.l.b16 %v398
      %v615 = vunpack.c.l.b16 %v399
      %v616 = vunpack.c.l.b16 %v400
      %v617 = vunpack.c.l.b16 %v401
      %v618 = vunpack.c.l.b16 %v402
      %v619 = vunpack.c.l.b16 %v403
      %v620 = vunpack.c.l.b16 %v404
      %v621 = vunpack.c.l.b16 %v405
      %v622 = vunpack.c.l.b16 %v406
      %v623 = vunpack.c.l.b16 %v407
      %v624 = vunpack.c.l.b16 %v408
      %v625 = vunpack.c.l.b16 %v409
      %v626 = vunpack.c.l.b16 %v410
      %v627 = vunpack.c.l.b16 %v411
      %v628 = vunpack.c.l.b16 %v412
      %v629 = vunpack.c.l.b16 %v413
      %v630 = vunpack.c.l.b16 %v414
      %v631 = vunpack.c.l.b16 %v415
      %v632 = vunpack.c.l.b16 %v416
      %v633 = vunpack.c.l.b16 %v417
      %v634 = vunpack.c.l.b16 %v418
      %v635 = vunpack.c.l.b16 %v419
      %v636 = vpack.c.b16 %v589, %v588
      %v637 = vpack.c.b16 %v591, %v590
      %v638 = vpack.c.b16 %v593, %v592
      %v639 = vpack.c.b16 %v595, %v594
      %v640 = vpack.c.b16 %v597, %v596
      %v641 = vpack.c.b16 %v599, %v598
      %v642 = vpack.c.b16 %v601, %v600
      %v643 = vpack.c.b16 %v603, %v602
      %v644 = vpack.c.b16 %v605, %v604
      %v645 = vpack.c.b16 %v607, %v606
      %v646 = vpack.c.b16 %v609, %v608
      %v647 = vpack.c.b16 %v611, %v610
      %v648 = vpack.c.b16 %v613, %v612
      %v649 = vpack.c.b16 %v615, %v614
      %v650 = vpack.c.b16 %v617, %v616
      %v651 = vpack.c.b16 %v619, %v618
      %v652 = vpack.c.b16 %v621, %v620
      %v653 = vpack.c.b16 %v623, %v622
      %v654 = vpack.c.b16 %v625, %v624
      %v655 = vpack.c.b16 %v627, %v626
      %v656 = vpack.c.b16 %v629, %v628
      %v657 = vpack.c.b16 %v631, %v630
      %v658 = vpack.c.b16 %v633, %v632
      %v659 = vpack.c.b16 %v635, %v634
      %660 = vrot.lane.b32.xlu0 %v636, 4
      %v661 = vpop.permute.xlu0 %660
      %662 = vrot.lane.b32.xlu0 %v637, 4
      %v663 = vpop.permute.xlu0 %662
      %664 = vrot.lane.b32.xlu0 %v638, 4
      %v665 = vpop.permute.xlu0 %664
      %666 = vrot.lane.b32.xlu0 %v639, 4
      %v667 = vpop.permute.xlu0 %666
      %668 = vrot.lane.b32.xlu0 %v640, 4
      %v669 = vpop.permute.xlu0 %668
      %670 = vrot.lane.b32.xlu0 %v641, 4
      %v671 = vpop.permute.xlu0 %670
      %672 = vrot.lane.b32.xlu0 %v642, 4
      %v673 = vpop.permute.xlu0 %672
      %674 = vrot.lane.b32.xlu0 %v643, 4
      %v675 = vpop.permute.xlu0 %674
      %676 = vrot.lane.b32.xlu0 %v644, 4
      %v677 = vpop.permute.xlu0 %676
      %678 = vrot.lane.b32.xlu0 %v645, 4
      %v679 = vpop.permute.xlu0 %678
      %680 = vrot.lane.b32.xlu0 %v646, 4
      %v681 = vpop.permute.xlu0 %680
      %682 = vrot.lane.b32.xlu0 %v647, 4
      %v683 = vpop.permute.xlu0 %682
      %684 = vrot.lane.b32.xlu0 %v648, 4
      %v685 = vpop.permute.xlu0 %684
      %686 = vrot.lane.b32.xlu0 %v649, 4
      %v687 = vpop.permute.xlu0 %686
      %688 = vrot.lane.b32.xlu0 %v650, 4
      %v689 = vpop.permute.xlu0 %688
      %690 = vrot.lane.b32.xlu0 %v651, 4
      %v691 = vpop.permute.xlu0 %690
      %692 = vrot.lane.b32.xlu0 %v652, 4
      %v693 = vpop.permute.xlu0 %692
      %694 = vrot.lane.b32.xlu0 %v653, 4
      %v695 = vpop.permute.xlu0 %694
      %696 = vrot.lane.b32.xlu0 %v654, 4
      %v697 = vpop.permute.xlu0 %696
      %698 = vrot.lane.b32.xlu0 %v655, 4
      %v699 = vpop.permute.xlu0 %698
      %700 = vrot.lane.b32.xlu0 %v656, 4
      %v701 = vpop.permute.xlu0 %700
      %702 = vrot.lane.b32.xlu0 %v657, 4
      %v703 = vpop.permute.xlu0 %702
      %704 = vrot.lane.b32.xlu0 %v658, 4
      %v705 = vpop.permute.xlu0 %704
      %706 = vrot.lane.b32.xlu0 %v659, 4
      %v707 = vpop.permute.xlu0 %706
      %vm708 = vcmask 31744
      %v711 = vsel %vm708, %v516, %v661
      %v714 = vsel %vm708, %v517, %v663
      %v717 = vsel %vm708, %v518, %v665
      %v720 = vsel %vm708, %v519, %v667
      %v723 = vsel %vm708, %v520, %v669
      %v726 = vsel %vm708, %v521, %v671
      %v729 = vsel %vm708, %v522, %v673
      %v732 = vsel %vm708, %v523, %v675
      %v735 = vsel %vm708, %v524, %v677
      %v738 = vsel %vm708, %v525, %v679
      %v741 = vsel %vm708, %v526, %v681
      %v744 = vsel %vm708, %v527, %v683
      %v747 = vsel %vm708, %v528, %v685
      %v750 = vsel %vm708, %v529, %v687
      %v753 = vsel %vm708, %v530, %v689
      %v756 = vsel %vm708, %v531, %v691
      %v759 = vsel %vm708, %v532, %v693
      %v762 = vsel %vm708, %v533, %v695
      %v765 = vsel %vm708, %v534, %v697
      %v768 = vsel %vm708, %v535, %v699
      %v771 = vsel %vm708, %v536, %v701
      %v774 = vsel %vm708, %v537, %v703
      %v777 = vsel %vm708, %v538, %v705
      %v780 = vsel %vm708, %v539, %v707
      %v801 = vunpack.c.l.b16 %v711
      %v802 = vunpack.c.h.b16 %v711
      %v803 = vunpack.c.l.b16 %v714
      %v804 = vunpack.c.l.b16 %v717
      %v805 = vunpack.c.h.b16 %v717
      %v806 = vunpack.c.l.b16 %v720
      %v807 = vunpack.c.l.b16 %v723
      %v808 = vunpack.c.h.b16 %v723
      %v809 = vunpack.c.l.b16 %v726
      %v810 = vunpack.c.l.b16 %v729
      %v811 = vunpack.c.h.b16 %v729
      %v812 = vunpack.c.l.b16 %v732
      %v813 = vunpack.c.l.b16 %v735
      %v814 = vunpack.c.h.b16 %v735
      %v815 = vunpack.c.l.b16 %v738
      %v816 = vunpack.c.l.b16 %v741
      %v817 = vunpack.c.h.b16 %v741
      %v818 = vunpack.c.l.b16 %v744
      %v819 = vunpack.c.l.b16 %v747
      %v820 = vunpack.c.h.b16 %v747
      %v821 = vunpack.c.l.b16 %v750
      %v822 = vunpack.c.l.b16 %v753
      %v823 = vunpack.c.h.b16 %v753
      %v824 = vunpack.c.l.b16 %v756
      %v825 = vunpack.c.l.b16 %v759
      %v826 = vunpack.c.h.b16 %v759
      %v827 = vunpack.c.l.b16 %v762
      %v828 = vunpack.c.l.b16 %v765
      %v829 = vunpack.c.h.b16 %v765
      %v830 = vunpack.c.l.b16 %v768
      %v831 = vld [vmem:[%s2] sm:$0xf]
      %v832 = vunpack.c.h.b16 %v714
      %v833 = vunpack.c.h.b16 %v720
      %v834 = vunpack.c.h.b16 %v726
      %v835 = vunpack.c.h.b16 %v732
      %v836 = vunpack.c.h.b16 %v738
      %v837 = vunpack.c.h.b16 %v744
      %v838 = vunpack.c.h.b16 %v750
      %v839 = vunpack.c.h.b16 %v756
      %v840 = vunpack.c.h.b16 %v762
      %v841 = vunpack.c.h.b16 %v768
      %v842 = vpack.c.b16 %v801, %v801
      %v843 = vpack.c.b16 %v802, %v802
      %v844 = vpack.c.b16 %v803, %v803
      %v845 = vpack.c.b16 %v832, %v832
      %v846 = vpack.c.b16 %v804, %v804
      %v847 = vpack.c.b16 %v805, %v805
      %v848 = vpack.c.b16 %v806, %v806
      %v849 = vpack.c.b16 %v833, %v833
      %v850 = vpack.c.b16 %v807, %v807
      %v851 = vpack.c.b16 %v808, %v808
      %v852 = vpack.c.b16 %v809, %v809
      %v853 = vpack.c.b16 %v834, %v834
      %v854 = vpack.c.b16 %v810, %v810
      %v855 = vpack.c.b16 %v811, %v811
      %v856 = vpack.c.b16 %v812, %v812
      %v857 = vpack.c.b16 %v835, %v835
      %v858 = vpack.c.b16 %v813, %v813
      %v859 = vpack.c.b16 %v814, %v814
      %v860 = vpack.c.b16 %v815, %v815
      %v861 = vpack.c.b16 %v836, %v836
      %v862 = vpack.c.b16 %v816, %v816
      %v863 = vpack.c.b16 %v817, %v817
      %v864 = vpack.c.b16 %v818, %v818
      %v865 = vpack.c.b16 %v837, %v837
      %v866 = vpack.c.b16 %v819, %v819
      %v867 = vpack.c.b16 %v820, %v820
      %v868 = vpack.c.b16 %v821, %v821
      %v869 = vpack.c.b16 %v838, %v838
      %v870 = vpack.c.b16 %v822, %v822
      %v871 = vpack.c.b16 %v823, %v823
      %v872 = vpack.c.b16 %v824, %v824
      %v873 = vpack.c.b16 %v839, %v839
      %v874 = vpack.c.b16 %v825, %v825
      %v875 = vpack.c.b16 %v826, %v826
      %v876 = vpack.c.b16 %v827, %v827
      %v877 = vpack.c.b16 %v840, %v840
      %v878 = vpack.c.b16 %v828, %v828
      %v879 = vpack.c.b16 %v829, %v829
      %v880 = vpack.c.b16 %v830, %v830
      %v881 = vpack.c.b16 %v841, %v841
      %vm882 = vsmask.f32 3328
      %vm883 = vsmask.f32 7440
      %vm884 = vmor %vm882, %vm883
      %v886 = vshrl.u32 %v842, 16
      %v888 = vrot.slane %v886, 4
      %v889 = vshll.u32 %v842, 16
      %v891 = vrot.slane %v889, 5
      %v892 = vor.u32 %v888, %v891
      %v893 = vrot.slane %v892, 4
      %v895 = vshll.u32 %v843, 16
      %v897 = vrot.slane %v895, 5
      %v898 = vsel %vm884, %v893, %v897
      %v899 = vshrl.u32 %v843, 16
      %v901 = vrot.slane %v899, 4
      %v902 = vor.u32 %v901, %v897
      %v903 = vrot.slane %v902, 4
      %v905 = vshll.u32 %v844, 16
      %v907 = vrot.slane %v905, 5
      %v908 = vsel %vm884, %v903, %v907
      %v909 = vshrl.u32 %v844, 16
      %v911 = vrot.slane %v909, 4
      %v912 = vor.u32 %v911, %v907
      %v913 = vrot.slane %v912, 4
      %v915 = vshll.u32 %v845, 16
      %v917 = vrot.slane %v915, 5
      %v918 = vsel %vm884, %v913, %v917
      %v920 = vshrl.u32 %v846, 16
      %v922 = vrot.slane %v920, 4
      %v923 = vshll.u32 %v846, 16
      %v925 = vrot.slane %v923, 5
      %v926 = vor.u32 %v922, %v925
      %v927 = vrot.slane %v926, 4
      %v929 = vshll.u32 %v847, 16
      %v931 = vrot.slane %v929, 5
      %v932 = vsel %vm884, %v927, %v931
      %v933 = vshrl.u32 %v847, 16
      %v935 = vrot.slane %v933, 4
      %v936 = vor.u32 %v935, %v931
      %v937 = vrot.slane %v936, 4
      %v939 = vshll.u32 %v848, 16
      %v941 = vrot.slane %v939, 5
      %v942 = vsel %vm884, %v937, %v941
      %v943 = vshrl.u32 %v848, 16
      %v945 = vrot.slane %v943, 4
      %v946 = vor.u32 %v945, %v941
      %v947 = vrot.slane %v946, 4
      %v949 = vshll.u32 %v849, 16
      %v951 = vrot.slane %v949, 5
      %v952 = vsel %vm884, %v947, %v951
      %v954 = vshrl.u32 %v850, 16
      %v956 = vrot.slane %v954, 4
      %v957 = vshll.u32 %v850, 16
      %v959 = vrot.slane %v957, 5
      %v960 = vor.u32 %v956, %v959
      %v961 = vrot.slane %v960, 4
      %v963 = vshll.u32 %v851, 16
      %v965 = vrot.slane %v963, 5
      %v966 = vsel %vm884, %v961, %v965
      %v967 = vshrl.u32 %v851, 16
      %v969 = vrot.slane %v967, 4
      %v970 = vor.u32 %v969, %v965
      %v971 = vrot.slane %v970, 4
      %v973 = vshll.u32 %v852, 16
      %v975 = vrot.slane %v973, 5
      %v976 = vsel %vm884, %v971, %v975
      %v977 = vshrl.u32 %v852, 16
      %v979 = vrot.slane %v977, 4
      %v980 = vor.u32 %v979, %v975
      %v981 = vrot.slane %v980, 4
      %v983 = vshll.u32 %v853, 16
      %v985 = vrot.slane %v983, 5
      %v986 = vsel %vm884, %v981, %v985
      %v988 = vshrl.u32 %v854, 16
      %v990 = vrot.slane %v988, 4
      %v991 = vshll.u32 %v854, 16
      %v993 = vrot.slane %v991, 5
      %v994 = vor.u32 %v990, %v993
      %v995 = vrot.slane %v994, 4
      %v997 = vshll.u32 %v855, 16
      %v999 = vrot.slane %v997, 5
      %v1000 = vsel %vm884, %v995, %v999
      %v1001 = vshrl.u32 %v855, 16
      %v1003 = vrot.slane %v1001, 4
      %v1004 = vor.u32 %v1003, %v999
      %v1005 = vrot.slane %v1004, 4
      %v1007 = vshll.u32 %v856, 16
      %v1009 = vrot.slane %v1007, 5
      %v1010 = vsel %vm884, %v1005, %v1009
      %v1011 = vshrl.u32 %v856, 16
      %v1013 = vrot.slane %v1011, 4
      %v1014 = vor.u32 %v1013, %v1009
      %v1015 = vrot.slane %v1014, 4
      %v1017 = vshll.u32 %v857, 16
      %v1019 = vrot.slane %v1017, 5
      %v1020 = vsel %vm884, %v1015, %v1019
      %v1022 = vshrl.u32 %v858, 16
      %v1024 = vrot.slane %v1022, 4
      %v1025 = vshll.u32 %v858, 16
      %v1027 = vrot.slane %v1025, 5
      %v1028 = vor.u32 %v1024, %v1027
      %v1029 = vrot.slane %v1028, 4
      %v1031 = vshll.u32 %v859, 16
      %v1033 = vrot.slane %v1031, 5
      %v1034 = vsel %vm884, %v1029, %v1033
      %v1035 = vshrl.u32 %v859, 16
      %v1037 = vrot.slane %v1035, 4
      %v1038 = vor.u32 %v1037, %v1033
      %v1039 = vrot.slane %v1038, 4
      %v1041 = vshll.u32 %v860, 16
      %v1043 = vrot.slane %v1041, 5
      %v1044 = vsel %vm884, %v1039, %v1043
      %v1045 = vshrl.u32 %v860, 16
      %v1047 = vrot.slane %v1045, 4
      %v1048 = vor.u32 %v1047, %v1043
      %v1049 = vrot.slane %v1048, 4
      %v1051 = vshll.u32 %v861, 16
      %v1053 = vrot.slane %v1051, 5
      %v1054 = vsel %vm884, %v1049, %v1053
      %v1056 = vshrl.u32 %v862, 16
      %v1058 = vrot.slane %v1056, 4
      %v1059 = vshll.u32 %v862, 16
      %v1061 = vrot.slane %v1059, 5
      %v1062 = vor.u32 %v1058, %v1061
      %v1063 = vrot.slane %v1062, 4
      %v1065 = vshll.u32 %v863, 16
      %v1067 = vrot.slane %v1065, 5
      %v1068 = vsel %vm884, %v1063, %v1067
      %v1069 = vshrl.u32 %v863, 16
      %v1071 = vrot.slane %v1069, 4
      %v1072 = vor.u32 %v1071, %v1067
      %v1073 = vrot.slane %v1072, 4
      %v1075 = vshll.u32 %v864, 16
      %v1077 = vrot.slane %v1075, 5
      %v1078 = vsel %vm884, %v1073, %v1077
      %v1079 = vshrl.u32 %v864, 16
      %v1081 = vrot.slane %v1079, 4
      %v1082 = vor.u32 %v1081, %v1077
      %v1083 = vrot.slane %v1082, 4
      %v1085 = vshll.u32 %v865, 16
      %v1087 = vrot.slane %v1085, 5
      %v1088 = vsel %vm884, %v1083, %v1087
      %v1090 = vshrl.u32 %v866, 16
      %v1092 = vrot.slane %v1090, 4
      %v1093 = vshll.u32 %v866, 16
      %v1095 = vrot.slane %v1093, 5
      %v1096 = vor.u32 %v1092, %v1095
      %v1097 = vrot.slane %v1096, 4
      %v1099 = vshll.u32 %v867, 16
      %v1101 = vrot.slane %v1099, 5
      %v1102 = vsel %vm884, %v1097, %v1101
      %v1103 = vshrl.u32 %v867, 16
      %v1105 = vrot.slane %v1103, 4
      %v1106 = vor.u32 %v1105, %v1101
      %v1107 = vrot.slane %v1106, 4
      %v1109 = vshll.u32 %v868, 16
      %v1111 = vrot.slane %v1109, 5
      %v1112 = vsel %vm884, %v1107, %v1111
      %v1113 = vshrl.u32 %v868, 16
      %v1115 = vrot.slane %v1113, 4
      %v1116 = vor.u32 %v1115, %v1111
      %v1117 = vrot.slane %v1116, 4
      %v1119 = vshll.u32 %v869, 16
      %v1121 = vrot.slane %v1119, 5
      %v1122 = vsel %vm884, %v1117, %v1121
      %v1124 = vshrl.u32 %v870, 16
      %v1126 = vrot.slane %v1124, 4
      %v1127 = vshll.u32 %v870, 16
      %v1129 = vrot.slane %v1127, 5
      %v1130 = vor.u32 %v1126, %v1129
      %v1131 = vrot.slane %v1130, 4
      %v1133 = vshll.u32 %v871, 16
      %v1135 = vrot.slane %v1133, 5
      %v1136 = vsel %vm884, %v1131, %v1135
      %v1137 = vshrl.u32 %v871, 16
      %v1139 = vrot.slane %v1137, 4
      %v1140 = vor.u32 %v1139, %v1135
      %v1141 = vrot.slane %v1140, 4
      %v1143 = vshll.u32 %v872, 16
      %v1145 = vrot.slane %v1143, 5
      %v1146 = vsel %vm884, %v1141, %v1145
      %v1147 = vshrl.u32 %v872, 16
      %v1149 = vrot.slane %v1147, 4
      %v1150 = vor.u32 %v1149, %v1145
      %v1151 = vrot.slane %v1150, 4
      %v1153 = vshll.u32 %v873, 16
      %v1155 = vrot.slane %v1153, 5
      %v1156 = vsel %vm884, %v1151, %v1155
      %v1158 = vshrl.u32 %v874, 16
      %v1160 = vrot.slane %v1158, 4
      %v1161 = vshll.u32 %v874, 16
      %v1163 = vrot.slane %v1161, 5
      %v1164 = vor.u32 %v1160, %v1163
      %v1165 = vrot.slane %v1164, 4
      %v1167 = vshll.u32 %v875, 16
      %v1169 = vrot.slane %v1167, 5
      %v1170 = vsel %vm884, %v1165, %v1169
      %v1171 = vshrl.u32 %v875, 16
      %v1173 = vrot.slane %v1171, 4
      %v1174 = vor.u32 %v1173, %v1169
      %v1175 = vrot.slane %v1174, 4
      %v1177 = vshll.u32 %v876, 16
      %v1179 = vrot.slane %v1177, 5
      %v1180 = vsel %vm884, %v1175, %v1179
      %v1181 = vshrl.u32 %v876, 16
      %v1183 = vrot.slane %v1181, 4
      %v1184 = vor.u32 %v1183, %v1179
      %v1185 = vrot.slane %v1184, 4
      %v1187 = vshll.u32 %v877, 16
      %v1189 = vrot.slane %v1187, 5
      %v1190 = vsel %vm884, %v1185, %v1189
      %v1192 = vshrl.u32 %v878, 16
      %v1194 = vrot.slane %v1192, 4
      %v1195 = vshll.u32 %v878, 16
      %v1197 = vrot.slane %v1195, 5
      %v1198 = vor.u32 %v1194, %v1197
      %v1199 = vrot.slane %v1198, 4
      %v1201 = vshll.u32 %v879, 16
      %v1203 = vrot.slane %v1201, 5
      %v1204 = vsel %vm884, %v1199, %v1203
      %v1205 = vshrl.u32 %v879, 16
      %v1207 = vrot.slane %v1205, 4
      %v1208 = vor.u32 %v1207, %v1203
      %v1209 = vrot.slane %v1208, 4
      %v1211 = vshll.u32 %v880, 16
      %v1213 = vrot.slane %v1211, 5
      %v1214 = vsel %vm884, %v1209, %v1213
      %v1215 = vshrl.u32 %v880, 16
      %v1217 = vrot.slane %v1215, 4
      %v1218 = vor.u32 %v1217, %v1213
      %v1219 = vrot.slane %v1218, 4
      %v1221 = vshll.u32 %v881, 16
      %v1223 = vrot.slane %v1221, 5
      %v1224 = vsel %vm884, %v1219, %v1223
      %s1225 = scalar_lea.vmem %s2, 4
      %v1226 = vld [vmem:[%s1225] sm:$0xf]
      %v1227 = vunpack.c.l.b16 %v898
      %v1228 = vunpack.c.l.b16 %v908
      %v1229 = vunpack.c.l.b16 %v918
      %v1230 = vunpack.c.l.b16 %v932
      %v1231 = vunpack.c.l.b16 %v942
      %v1232 = vunpack.c.l.b16 %v952
      %v1233 = vunpack.c.l.b16 %v966
      %v1234 = vunpack.c.l.b16 %v976
      %v1235 = vunpack.c.l.b16 %v986
      %v1236 = vunpack.c.l.b16 %v1000
      %v1237 = vunpack.c.l.b16 %v1010
      %v1238 = vunpack.c.l.b16 %v1020
      %v1239 = vunpack.c.l.b16 %v1034
      %v1240 = vunpack.c.l.b16 %v1044
      %v1241 = vunpack.c.l.b16 %v1054
      %v1242 = vunpack.c.l.b16 %v1068
      %v1243 = vunpack.c.l.b16 %v1078
      %v1244 = vunpack.c.l.b16 %v1088
      %v1245 = vunpack.c.l.b16 %v1102
      %v1246 = vunpack.c.l.b16 %v1112
      %v1247 = vunpack.c.l.b16 %v1122
      %v1248 = vunpack.c.l.b16 %v1136
      %v1249 = vunpack.c.l.b16 %v1146
      %v1250 = vunpack.c.l.b16 %v1156
      %v1251 = vunpack.c.l.b16 %v1170
      %v1252 = vunpack.c.l.b16 %v1180
      %v1253 = vunpack.c.l.b16 %v1190
      %v1254 = vunpack.c.l.b16 %v1204
      %v1255 = vunpack.c.l.b16 %v1214
      %v1256 = vunpack.c.l.b16 %v1224
      %v1257 = vpack.c.b16 %v1228, %v1227
      %v1258 = vpack.c.b16 %v1230, %v1229
      %v1259 = vpack.c.b16 %v1232, %v1231
      %v1260 = vpack.c.b16 %v1234, %v1233
      %v1261 = vpack.c.b16 %v1236, %v1235
      %v1262 = vpack.c.b16 %v1238, %v1237
      %v1263 = vpack.c.b16 %v1240, %v1239
      %v1264 = vpack.c.b16 %v1242, %v1241
      %v1265 = vpack.c.b16 %v1244, %v1243
      %v1266 = vpack.c.b16 %v1246, %v1245
      %v1267 = vpack.c.b16 %v1248, %v1247
      %v1268 = vpack.c.b16 %v1250, %v1249
      %v1269 = vpack.c.b16 %v1252, %v1251
      %v1270 = vpack.c.b16 %v1254, %v1253
      %v1271 = vpack.c.b16 %v1256, %v1255
      %vm1272 = vcmask 64512
      %v1274 = vsel %vm1272, %v1257, 0
      %v1277 = vsel %vm1272, %v1258, 0
      %v1280 = vsel %vm1272, %v1259, 0
      %v1283 = vsel %vm1272, %v1260, 0
      %v1286 = vsel %vm1272, %v1261, 0
      %v1289 = vsel %vm1272, %v1262, 0
      %v1292 = vsel %vm1272, %v1263, 0
      %v1295 = vsel %vm1272, %v1264, 0
      %v1298 = vsel %vm1272, %v1265, 0
      %v1301 = vsel %vm1272, %v1266, 0
      %v1304 = vsel %vm1272, %v1267, 0
      %v1307 = vsel %vm1272, %v1268, 0
      %v1310 = vsel %vm1272, %v1269, 0
      %v1313 = vsel %vm1272, %v1270, 0
      %v1316 = vsel %vm1272, %v1271, 0
      %vm1318 = vcmask 1043456
      %v1320 = vsel %vm1318, %v1226, 0
      %1322 = vmatprep.subr.bf16.mxu0 0
      %1323 = vmatpush1.bf16.msra.mxu0 0
      %1324 = vmatprep.subr.bf16.mxu0 0
      %1325 = vmatpush1.bf16.msra.mxu0 0
      %1326 = vmatprep.subr.bf16.mxu0 0
      %1327 = vmatpush1.bf16.msra.mxu0 0
      %1328 = vmatprep.subr.bf16.mxu0 0
      %1329 = vmatpush1.bf16.msra.mxu0 0
      %1330 = vmatprep.subr.bf16.mxu0 0
      %1331 = vmatpush1.bf16.msra.mxu0 0
      %1332 = vmatprep.subr.bf16.mxu0 0
      %1333 = vmatpush1.bf16.msra.mxu0 0
      %1334 = vmatprep.subr.bf16.mxu0 0
      %1335 = vmatpush1.bf16.msra.mxu0 0
      %1336 = vmatprep.subr.bf16.mxu0 0
      %1337 = vmatpush1.bf16.msra.mxu0 %v1320
      %1338 = vmatprep.subr.bf16.mxu0 0
      %1339 = vmatpush2.bf16.msra.mxu0 0
      %1340 = vmatprep.subr.bf16.mxu0 0
      %1341 = vmatpush2.bf16.msra.mxu0 0
      %1342 = vmatprep.subr.bf16.mxu0 0
      %1343 = vmatpush2.bf16.msra.mxu0 0
      %1344 = vmatprep.subr.bf16.mxu0 0
      %1345 = vmatpush2.bf16.msra.mxu0 0
      %1346 = vmatprep.subr.bf16.mxu0 0
      %1347 = vmatpush2.bf16.msra.mxu0 0
      %1348 = vmatprep.subr.bf16.mxu0 0
      %1349 = vmatpush2.bf16.msra.mxu0 0
      %1350 = vmatprep.subr.bf16.mxu0 0
      %1351 = vmatpush2.bf16.msra.mxu0 0
      %1352 = vmatprep.subr.bf16.mxu0 0
      %1353 = vmatpush2.bf16.msra.mxu0 0
      %1354 = vmatprep.mubr.bf16.mxu0 0
      %1355 = vmatmul.mubr.bf16.gmra.mxu0 %v1274
      %v1356 = vpop.f32.mrf.mxu0
      %v1357 = vadd.f32 0.0, %v1356
      %v1358 = vpop.f32.mrf.mxu0
      %v1359 = vpop.f32.mrf.mxu0
      %v1360 = vadd.f32 0.0, %v1359
      %v1361 = vpop.f32.mrf.mxu0
      %1362 = vmatprep.mubr.bf16.mxu0 0
      %1363 = vmatmul.mubr.bf16.gmra.mxu0 %v1277
      %v1364 = vpop.f32.mrf.mxu0
      %v1365 = vadd.f32 0.0, %v1364
      %v1366 = vpop.f32.mrf.mxu0
      %v1367 = vpop.f32.mrf.mxu0
      %v1368 = vadd.f32 0.0, %v1367
      %v1369 = vpop.f32.mrf.mxu0
      %1370 = vmatprep.mubr.bf16.mxu0 0
      %1371 = vmatmul.mubr.bf16.gmra.mxu0 %v1280
      %v1372 = vpop.f32.mrf.mxu0
      %v1373 = vadd.f32 0.0, %v1372
      %v1374 = vpop.f32.mrf.mxu0
      %v1375 = vpop.f32.mrf.mxu0
      %v1376 = vadd.f32 0.0, %v1375
      %v1377 = vpop.f32.mrf.mxu0
      %1378 = vmatprep.mubr.bf16.mxu0 0
      %1379 = vmatmul.mubr.bf16.gmra.mxu0 %v1283
      %v1380 = vpop.f32.mrf.mxu0
      %v1381 = vadd.f32 0.0, %v1380
      %v1382 = vpop.f32.mrf.mxu0
      %v1383 = vpop.f32.mrf.mxu0
      %v1384 = vadd.f32 0.0, %v1383
      %v1385 = vpop.f32.mrf.mxu0
      %1386 = vmatprep.mubr.bf16.mxu0 0
      %1387 = vmatmul.mubr.bf16.gmra.mxu0 %v1286
      %v1388 = vpop.f32.mrf.mxu0
      %v1389 = vadd.f32 0.0, %v1388
      %v1390 = vpop.f32.mrf.mxu0
      %v1391 = vpop.f32.mrf.mxu0
      %v1392 = vadd.f32 0.0, %v1391
      %v1393 = vpop.f32.mrf.mxu0
      %1394 = vmatprep.mubr.bf16.mxu0 0
      %1395 = vmatmul.mubr.bf16.gmra.mxu0 %v1289
      %v1396 = vpop.f32.mrf.mxu0
      %v1397 = vadd.f32 0.0, %v1396
      %v1398 = vpop.f32.mrf.mxu0
      %v1399 = vpop.f32.mrf.mxu0
      %v1400 = vadd.f32 0.0, %v1399
      %v1401 = vpop.f32.mrf.mxu0
      %1402 = vmatprep.mubr.bf16.mxu0 0
      %1403 = vmatmul.mubr.bf16.gmra.mxu0 %v1292
      %v1404 = vpop.f32.mrf.mxu0
      %v1405 = vadd.f32 0.0, %v1404
      %v1406 = vpop.f32.mrf.mxu0
      %v1407 = vpop.f32.mrf.mxu0
      %v1408 = vadd.f32 0.0, %v1407
      %v1409 = vpop.f32.mrf.mxu0
      %1410 = vmatprep.mubr.bf16.mxu0 0
      %1411 = vmatmul.mubr.bf16.gmra.mxu0 %v1295
      %v1412 = vpop.f32.mrf.mxu0
      %v1413 = vadd.f32 0.0, %v1412
      %v1414 = vpop.f32.mrf.mxu0
      %v1415 = vpop.f32.mrf.mxu0
      %v1416 = vadd.f32 0.0, %v1415
      %v1417 = vpop.f32.mrf.mxu0
      %1418 = vmatprep.mubr.bf16.mxu0 0
      %1419 = vmatmul.mubr.bf16.gmra.mxu0 %v1298
      %v1420 = vpop.f32.mrf.mxu0
      %v1421 = vadd.f32 0.0, %v1420
      %v1422 = vpop.f32.mrf.mxu0
      %v1423 = vpop.f32.mrf.mxu0
      %v1424 = vadd.f32 0.0, %v1423
      %v1425 = vpop.f32.mrf.mxu0
      %1426 = vmatprep.mubr.bf16.mxu0 0
      %1427 = vmatmul.mubr.bf16.gmra.mxu0 %v1301
      %v1428 = vpop.f32.mrf.mxu0
      %v1429 = vadd.f32 0.0, %v1428
      %v1430 = vpop.f32.mrf.mxu0
      %v1431 = vpop.f32.mrf.mxu0
      %v1432 = vadd.f32 0.0, %v1431
      %v1433 = vpop.f32.mrf.mxu0
      %1434 = vmatprep.mubr.bf16.mxu0 0
      %1435 = vmatmul.mubr.bf16.gmra.mxu0 %v1304
      %v1436 = vpop.f32.mrf.mxu0
      %v1437 = vadd.f32 0.0, %v1436
      %v1438 = vpop.f32.mrf.mxu0
      %v1439 = vpop.f32.mrf.mxu0
      %v1440 = vadd.f32 0.0, %v1439
      %v1441 = vpop.f32.mrf.mxu0
      %1442 = vmatprep.mubr.bf16.mxu0 0
      %1443 = vmatmul.mubr.bf16.gmra.mxu0 %v1307
      %v1444 = vpop.f32.mrf.mxu0
      %v1445 = vadd.f32 0.0, %v1444
      %v1446 = vpop.f32.mrf.mxu0
      %v1447 = vpop.f32.mrf.mxu0
      %v1448 = vadd.f32 0.0, %v1447
      %v1449 = vpop.f32.mrf.mxu0
      %1450 = vmatprep.mubr.bf16.mxu0 0
      %1451 = vmatmul.mubr.bf16.gmra.mxu0 %v1310
      %v1452 = vpop.f32.mrf.mxu0
      %v1453 = vadd.f32 0.0, %v1452
      %v1454 = vpop.f32.mrf.mxu0
      %v1455 = vpop.f32.mrf.mxu0
      %v1456 = vadd.f32 0.0, %v1455
      %v1457 = vpop.f32.mrf.mxu0
      %1458 = vmatprep.mubr.bf16.mxu0 0
      %1459 = vmatmul.mubr.bf16.gmra.mxu0 %v1313
      %v1460 = vpop.f32.mrf.mxu0
      %v1461 = vadd.f32 0.0, %v1460
      %v1462 = vpop.f32.mrf.mxu0
      %v1463 = vpop.f32.mrf.mxu0
      %v1464 = vadd.f32 0.0, %v1463
      %v1465 = vpop.f32.mrf.mxu0
      %1466 = vmatprep.mubr.bf16.mxu0 0
      %1467 = vmatmul.mubr.bf16.gmra.mxu0 %v1316
      %v1468 = vpop.f32.mrf.mxu0
      %v1469 = vadd.f32 0.0, %v1468
      %v1470 = vpop.f32.mrf.mxu0
      %v1471 = vpop.f32.mrf.mxu0
      %v1472 = vadd.f32 0.0, %v1471
      %v1473 = vpop.f32.mrf.mxu0
      %1474 = vdwg.mxu0
      %v1475 = vpack.c.b16 %v802, %v801
      %v1476 = vpack.c.b16 %v804, %v803
      %v1477 = vpack.c.b16 %v806, %v805
      %v1478 = vpack.c.b16 %v808, %v807
      %v1479 = vpack.c.b16 %v810, %v809
      %v1480 = vpack.c.b16 %v812, %v811
      %v1481 = vpack.c.b16 %v814, %v813
      %v1482 = vpack.c.b16 %v816, %v815
      %v1483 = vpack.c.b16 %v818, %v817
      %v1484 = vpack.c.b16 %v820, %v819
      %v1485 = vpack.c.b16 %v822, %v821
      %v1486 = vpack.c.b16 %v824, %v823
      %v1487 = vpack.c.b16 %v826, %v825
      %v1488 = vpack.c.b16 %v828, %v827
      %v1489 = vpack.c.b16 %v830, %v829
      %v1491 = vsel %vm1272, %v1475, 0
      %v1494 = vsel %vm1272, %v1476, 0
      %v1497 = vsel %vm1272, %v1477, 0
      %v1500 = vsel %vm1272, %v1478, 0
      %v1503 = vsel %vm1272, %v1479, 0
      %v1506 = vsel %vm1272, %v1480, 0
      %v1509 = vsel %vm1272, %v1481, 0
      %v1512 = vsel %vm1272, %v1482, 0
      %v1515 = vsel %vm1272, %v1483, 0
      %v1518 = vsel %vm1272, %v1484, 0
      %v1521 = vsel %vm1272, %v1485, 0
      %v1524 = vsel %vm1272, %v1486, 0
      %v1527 = vsel %vm1272, %v1487, 0
      %v1530 = vsel %vm1272, %v1488, 0
      %v1533 = vsel %vm1272, %v1489, 0
      %v1536 = vsel %vm1318, %v831, 0
      %1538 = vmatprep.subr.bf16.mxu0 0
      %1539 = vmatpush1.bf16.msra.mxu0 0
      %1540 = vmatprep.subr.bf16.mxu0 0
      %1541 = vmatpush1.bf16.msra.mxu0 0
      %1542 = vmatprep.subr.bf16.mxu0 0
      %1543 = vmatpush1.bf16.msra.mxu0 0
      %1544 = vmatprep.subr.bf16.mxu0 0
      %1545 = vmatpush1.bf16.msra.mxu0 0
      %1546 = vmatprep.subr.bf16.mxu0 0
      %1547 = vmatpush1.bf16.msra.mxu0 0
      %1548 = vmatprep.subr.bf16.mxu0 0
      %1549 = vmatpush1.bf16.msra.mxu0 0
      %1550 = vmatprep.subr.bf16.mxu0 0
      %1551 = vmatpush1.bf16.msra.mxu0 0
      %1552 = vmatprep.subr.bf16.mxu0 0
      %1553 = vmatpush1.bf16.msra.mxu0 %v1536
      %1554 = vmatprep.subr.bf16.mxu0 0
      %1555 = vmatpush2.bf16.msra.mxu0 0
      %1556 = vmatprep.subr.bf16.mxu0 0
      %1557 = vmatpush2.bf16.msra.mxu0 0
      %1558 = vmatprep.subr.bf16.mxu0 0
      %1559 = vmatpush2.bf16.msra.mxu0 0
      %1560 = vmatprep.subr.bf16.mxu0 0
      %1561 = vmatpush2.bf16.msra.mxu0 0
      %1562 = vmatprep.subr.bf16.mxu0 0
      %1563 = vmatpush2.bf16.msra.mxu0 0
      %1564 = vmatprep.subr.bf16.mxu0 0
      %1565 = vmatpush2.bf16.msra.mxu0 0
      %1566 = vmatprep.subr.bf16.mxu0 0
      %1567 = vmatpush2.bf16.msra.mxu0 0
      %1568 = vmatprep.subr.bf16.mxu0 0
      %1569 = vmatpush2.bf16.msra.mxu0 0
      %1570 = vmatprep.mubr.bf16.mxu0 0
      %1571 = vmatmul.mubr.bf16.gmra.mxu0 %v1491
      %v1572 = vpop.f32.mrf.mxu0
      %v1573 = vadd.f32 %v1357, %v1572
      %v1574 = vpop.f32.mrf.mxu0
      %v1575 = vpop.f32.mrf.mxu0
      %v1576 = vadd.f32 %v1360, %v1575
      %v1577 = vpop.f32.mrf.mxu0
      %1578 = vmatprep.mubr.bf16.mxu0 0
      %1579 = vmatmul.mubr.bf16.gmra.mxu0 %v1494
      %v1580 = vpop.f32.mrf.mxu0
      %v1581 = vadd.f32 %v1365, %v1580
      %v1582 = vpop.f32.mrf.mxu0
      %v1583 = vpop.f32.mrf.mxu0
      %v1584 = vadd.f32 %v1368, %v1583
      %v1585 = vpop.f32.mrf.mxu0
      %1586 = vmatprep.mubr.bf16.mxu0 0
      %1587 = vmatmul.mubr.bf16.gmra.mxu0 %v1497
      %v1588 = vpop.f32.mrf.mxu0
      %v1589 = vadd.f32 %v1373, %v1588
      %v1590 = vpop.f32.mrf.mxu0
      %v1591 = vpop.f32.mrf.mxu0
      %v1592 = vadd.f32 %v1376, %v1591
      %v1593 = vpop.f32.mrf.mxu0
      %1594 = vmatprep.mubr.bf16.mxu0 0
      %1595 = vmatmul.mubr.bf16.gmra.mxu0 %v1500
      %v1596 = vpop.f32.mrf.mxu0
      %v1597 = vadd.f32 %v1381, %v1596
      %v1598 = vpop.f32.mrf.mxu0
      %v1599 = vpop.f32.mrf.mxu0
      %v1600 = vadd.f32 %v1384, %v1599
      %v1601 = vpop.f32.mrf.mxu0
      %1602 = vmatprep.mubr.bf16.mxu0 0
      %1603 = vmatmul.mubr.bf16.gmra.mxu0 %v1503
      %v1604 = vpop.f32.mrf.mxu0
      %v1605 = vadd.f32 %v1389, %v1604
      %v1606 = vpop.f32.mrf.mxu0
      %v1607 = vpop.f32.mrf.mxu0
      %v1608 = vadd.f32 %v1392, %v1607
      %v1609 = vpop.f32.mrf.mxu0
      %1610 = vmatprep.mubr.bf16.mxu0 0
      %1611 = vmatmul.mubr.bf16.gmra.mxu0 %v1506
      %v1612 = vpop.f32.mrf.mxu0
      %v1613 = vadd.f32 %v1397, %v1612
      %v1614 = vpop.f32.mrf.mxu0
      %v1615 = vpop.f32.mrf.mxu0
      %v1616 = vadd.f32 %v1400, %v1615
      %v1617 = vpop.f32.mrf.mxu0
      %1618 = vmatprep.mubr.bf16.mxu0 0
      %1619 = vmatmul.mubr.bf16.gmra.mxu0 %v1509
      %v1620 = vpop.f32.mrf.mxu0
      %v1621 = vadd.f32 %v1405, %v1620
      %v1622 = vpop.f32.mrf.mxu0
      %v1623 = vpop.f32.mrf.mxu0
      %v1624 = vadd.f32 %v1408, %v1623
      %v1625 = vpop.f32.mrf.mxu0
      %1626 = vmatprep.mubr.bf16.mxu0 0
      %1627 = vmatmul.mubr.bf16.gmra.mxu0 %v1512
      %v1628 = vpop.f32.mrf.mxu0
      %v1629 = vadd.f32 %v1413, %v1628
      %v1630 = vpop.f32.mrf.mxu0
      %v1631 = vpop.f32.mrf.mxu0
      %v1632 = vadd.f32 %v1416, %v1631
      %v1633 = vpop.f32.mrf.mxu0
      %1634 = vmatprep.mubr.bf16.mxu0 0
      %1635 = vmatmul.mubr.bf16.gmra.mxu0 %v1515
      %v1636 = vpop.f32.mrf.mxu0
      %v1637 = vadd.f32 %v1421, %v1636
      %v1638 = vpop.f32.mrf.mxu0
      %v1639 = vpop.f32.mrf.mxu0
      %v1640 = vadd.f32 %v1424, %v1639
      %v1641 = vpop.f32.mrf.mxu0
      %1642 = vmatprep.mubr.bf16.mxu0 0
      %1643 = vmatmul.mubr.bf16.gmra.mxu0 %v1518
      %v1644 = vpop.f32.mrf.mxu0
      %v1645 = vadd.f32 %v1429, %v1644
      %v1646 = vpop.f32.mrf.mxu0
      %v1647 = vpop.f32.mrf.mxu0
      %v1648 = vadd.f32 %v1432, %v1647
      %v1649 = vpop.f32.mrf.mxu0
      %1650 = vmatprep.mubr.bf16.mxu0 0
      %1651 = vmatmul.mubr.bf16.gmra.mxu0 %v1521
      %v1652 = vpop.f32.mrf.mxu0
      %v1653 = vadd.f32 %v1437, %v1652
      %v1654 = vpop.f32.mrf.mxu0
      %v1655 = vpop.f32.mrf.mxu0
      %v1656 = vadd.f32 %v1440, %v1655
      %v1657 = vpop.f32.mrf.mxu0
      %1658 = vmatprep.mubr.bf16.mxu0 0
      %1659 = vmatmul.mubr.bf16.gmra.mxu0 %v1524
      %v1660 = vpop.f32.mrf.mxu0
      %v1661 = vadd.f32 %v1445, %v1660
      %v1662 = vpop.f32.mrf.mxu0
      %v1663 = vpop.f32.mrf.mxu0
      %v1664 = vadd.f32 %v1448, %v1663
      %v1665 = vpop.f32.mrf.mxu0
      %1666 = vmatprep.mubr.bf16.mxu0 0
      %1667 = vmatmul.mubr.bf16.gmra.mxu0 %v1527
      %v1668 = vpop.f32.mrf.mxu0
      %v1669 = vadd.f32 %v1453, %v1668
      %v1670 = vpop.f32.mrf.mxu0
      %v1671 = vpop.f32.mrf.mxu0
      %v1672 = vadd.f32 %v1456, %v1671
      %v1673 = vpop.f32.mrf.mxu0
      %1674 = vmatprep.mubr.bf16.mxu0 0
      %1675 = vmatmul.mubr.bf16.gmra.mxu0 %v1530
      %v1676 = vpop.f32.mrf.mxu0
      %v1677 = vadd.f32 %v1461, %v1676
      %v1678 = vpop.f32.mrf.mxu0
      %v1679 = vpop.f32.mrf.mxu0
      %v1680 = vadd.f32 %v1464, %v1679
      %v1681 = vpop.f32.mrf.mxu0
      %1682 = vmatprep.mubr.bf16.mxu0 0
      %1683 = vmatmul.mubr.bf16.gmra.mxu0 %v1533
      %v1684 = vpop.f32.mrf.mxu0
      %v1685 = vadd.f32 %v1469, %v1684
      %v1686 = vpop.f32.mrf.mxu0
      %v1687 = vpop.f32.mrf.mxu0
      %v1688 = vadd.f32 %v1472, %v1687
      %v1689 = vpop.f32.mrf.mxu0
      %1690 = vdwg.mxu0
      %vm1691 = vcmask 1042432
      %vm1692 = vcmask 1046532
      %vm1693 = vmor %vm1691, %vm1692
      %v1694 = vrot.slane %v842, 5
      %v1695 = vrot.slane %v1694, 4
      %v1696 = vrot.slane %v843, 5
      %v1697 = vsel %vm1693, %v1695, %v1696
      %v1698 = vrot.slane %v1696, 4
      %v1699 = vrot.slane %v844, 5
      %v1700 = vsel %vm1693, %v1698, %v1699
      %v1701 = vrot.slane %v1699, 4
      %v1702 = vrot.slane %v845, 5
      %v1703 = vsel %vm1693, %v1701, %v1702
      %v1704 = vrot.slane %v846, 5
      %v1705 = vrot.slane %v1704, 4
      %v1706 = vrot.slane %v847, 5
      %v1707 = vsel %vm1693, %v1705, %v1706
      %v1708 = vrot.slane %v1706, 4
      %v1709 = vrot.slane %v848, 5
      %v1710 = vsel %vm1693, %v1708, %v1709
      %v1711 = vrot.slane %v1709, 4
      %v1712 = vrot.slane %v849, 5
      %v1713 = vsel %vm1693, %v1711, %v1712
      %v1714 = vrot.slane %v850, 5
      %v1715 = vrot.slane %v1714, 4
      %v1716 = vrot.slane %v851, 5
      %v1717 = vsel %vm1693, %v1715, %v1716
      %v1718 = vrot.slane %v1716, 4
      %v1719 = vrot.slane %v852, 5
      %v1720 = vsel %vm1693, %v1718, %v1719
      %v1721 = vrot.slane %v1719, 4
      %v1722 = vrot.slane %v853, 5
      %v1723 = vsel %vm1693, %v1721, %v1722
      %v1724 = vrot.slane %v854, 5
      %v1725 = vrot.slane %v1724, 4
      %v1726 = vrot.slane %v855, 5
      %v1727 = vsel %vm1693, %v1725, %v1726
      %v1728 = vrot.slane %v1726, 4
      %v1729 = vrot.slane %v856, 5
      %v1730 = vsel %vm1693, %v1728, %v1729
      %v1731 = vrot.slane %v1729, 4
      %v1732 = vrot.slane %v857, 5
      %v1733 = vsel %vm1693, %v1731, %v1732
      %v1734 = vrot.slane %v858, 5
      %v1735 = vrot.slane %v1734, 4
      %v1736 = vrot.slane %v859, 5
      %v1737 = vsel %vm1693, %v1735, %v1736
      %v1738 = vrot.slane %v1736, 4
      %v1739 = vrot.slane %v860, 5
      %v1740 = vsel %vm1693, %v1738, %v1739
      %v1741 = vrot.slane %v1739, 4
      %v1742 = vrot.slane %v861, 5
      %v1743 = vsel %vm1693, %v1741, %v1742
      %v1744 = vrot.slane %v862, 5
      %v1745 = vrot.slane %v1744, 4
      %v1746 = vrot.slane %v863, 5
      %v1747 = vsel %vm1693, %v1745, %v1746
      %v1748 = vrot.slane %v1746, 4
      %v1749 = vrot.slane %v864, 5
      %v1750 = vsel %vm1693, %v1748, %v1749
      %v1751 = vrot.slane %v1749, 4
      %v1752 = vrot.slane %v865, 5
      %v1753 = vsel %vm1693, %v1751, %v1752
      %v1754 = vrot.slane %v866, 5
      %v1755 = vrot.slane %v1754, 4
      %v1756 = vrot.slane %v867, 5
      %v1757 = vsel %vm1693, %v1755, %v1756
      %v1758 = vrot.slane %v1756, 4
      %v1759 = vrot.slane %v868, 5
      %v1760 = vsel %vm1693, %v1758, %v1759
      %v1761 = vrot.slane %v1759, 4
      %v1762 = vrot.slane %v869, 5
      %v1763 = vsel %vm1693, %v1761, %v1762
      %v1764 = vrot.slane %v870, 5
      %v1765 = vrot.slane %v1764, 4
      %v1766 = vrot.slane %v871, 5
      %v1767 = vsel %vm1693, %v1765, %v1766
      %v1768 = vrot.slane %v1766, 4
      %v1769 = vrot.slane %v872, 5
      %v1770 = vsel %vm1693, %v1768, %v1769
      %v1771 = vrot.slane %v1769, 4
      %v1772 = vrot.slane %v873, 5
      %v1773 = vsel %vm1693, %v1771, %v1772
      %v1774 = vrot.slane %v874, 5
      %v1775 = vrot.slane %v1774, 4
      %v1776 = vrot.slane %v875, 5
      %v1777 = vsel %vm1693, %v1775, %v1776
      %v1778 = vrot.slane %v1776, 4
      %v1779 = vrot.slane %v876, 5
      %v1780 = vsel %vm1693, %v1778, %v1779
      %v1781 = vrot.slane %v1779, 4
      %v1782 = vrot.slane %v877, 5
      %v1783 = vsel %vm1693, %v1781, %v1782
      %v1784 = vrot.slane %v878, 5
      %v1785 = vrot.slane %v1784, 4
      %v1786 = vrot.slane %v879, 5
      %v1787 = vsel %vm1693, %v1785, %v1786
      %v1788 = vrot.slane %v1786, 4
      %v1789 = vrot.slane %v880, 5
      %v1790 = vsel %vm1693, %v1788, %v1789
      %v1791 = vrot.slane %v1789, 4
      %v1792 = vrot.slane %v881, 5
      %v1793 = vsel %vm1693, %v1791, %v1792
      %s1794 = scalar_lea.vmem %s2, 8
      %v1795 = vld [vmem:[%s1794] sm:$0xf]
      %v1796 = vunpack.c.l.b16 %v1697
      %v1797 = vunpack.c.l.b16 %v1700
      %v1798 = vunpack.c.l.b16 %v1703
      %v1799 = vunpack.c.l.b16 %v1707
      %v1800 = vunpack.c.l.b16 %v1710
      %v1801 = vunpack.c.l.b16 %v1713
      %v1802 = vunpack.c.l.b16 %v1717
      %v1803 = vunpack.c.l.b16 %v1720
      %v1804 = vunpack.c.l.b16 %v1723
      %v1805 = vunpack.c.l.b16 %v1727
      %v1806 = vunpack.c.l.b16 %v1730
      %v1807 = vunpack.c.l.b16 %v1733
      %v1808 = vunpack.c.l.b16 %v1737
      %v1809 = vunpack.c.l.b16 %v1740
      %v1810 = vunpack.c.l.b16 %v1743
      %v1811 = vunpack.c.l.b16 %v1747
      %v1812 = vunpack.c.l.b16 %v1750
      %v1813 = vunpack.c.l.b16 %v1753
      %v1814 = vunpack.c.l.b16 %v1757
      %v1815 = vunpack.c.l.b16 %v1760
      %v1816 = vunpack.c.l.b16 %v1763
      %v1817 = vunpack.c.l.b16 %v1767
      %v1818 = vunpack.c.l.b16 %v1770
      %v1819 = vunpack.c.l.b16 %v1773
      %v1820 = vunpack.c.l.b16 %v1777
      %v1821 = vunpack.c.l.b16 %v1780
      %v1822 = vunpack.c.l.b16 %v1783
      %v1823 = vunpack.c.l.b16 %v1787
      %v1824 = vunpack.c.l.b16 %v1790
      %v1825 = vunpack.c.l.b16 %v1793
      %v1826 = vpack.c.b16 %v1797, %v1796
      %v1827 = vpack.c.b16 %v1799, %v1798
      %v1828 = vpack.c.b16 %v1801, %v1800
      %v1829 = vpack.c.b16 %v1803, %v1802
      %v1830 = vpack.c.b16 %v1805, %v1804
      %v1831 = vpack.c.b16 %v1807, %v1806
      %v1832 = vpack.c.b16 %v1809, %v1808
      %v1833 = vpack.c.b16 %v1811, %v1810
      %v1834 = vpack.c.b16 %v1813, %v1812
      %v1835 = vpack.c.b16 %v1815, %v1814
      %v1836 = vpack.c.b16 %v1817, %v1816
      %v1837 = vpack.c.b16 %v1819, %v1818
      %v1838 = vpack.c.b16 %v1821, %v1820
      %v1839 = vpack.c.b16 %v1823, %v1822
      %v1840 = vpack.c.b16 %v1825, %v1824
      %v1842 = vsel %vm1272, %v1826, 0
      %v1845 = vsel %vm1272, %v1827, 0
      %v1848 = vsel %vm1272, %v1828, 0
      %v1851 = vsel %vm1272, %v1829, 0
      %v1854 = vsel %vm1272, %v1830, 0
      %v1857 = vsel %vm1272, %v1831, 0
      %v1860 = vsel %vm1272, %v1832, 0
      %v1863 = vsel %vm1272, %v1833, 0
      %v1866 = vsel %vm1272, %v1834, 0
      %v1869 = vsel %vm1272, %v1835, 0
      %v1872 = vsel %vm1272, %v1836, 0
      %v1875 = vsel %vm1272, %v1837, 0
      %v1878 = vsel %vm1272, %v1838, 0
      %v1881 = vsel %vm1272, %v1839, 0
      %v1884 = vsel %vm1272, %v1840, 0
      %v1887 = vsel %vm1318, %v1795, 0
      %1889 = vmatprep.subr.bf16.mxu0 0
      %1890 = vmatpush1.bf16.msra.mxu0 0
      %1891 = vmatprep.subr.bf16.mxu0 0
      %1892 = vmatpush1.bf16.msra.mxu0 0
      %1893 = vmatprep.subr.bf16.mxu0 0
      %1894 = vmatpush1.bf16.msra.mxu0 0
      %1895 = vmatprep.subr.bf16.mxu0 0
      %1896 = vmatpush1.bf16.msra.mxu0 0
      %1897 = vmatprep.subr.bf16.mxu0 0
      %1898 = vmatpush1.bf16.msra.mxu0 0
      %1899 = vmatprep.subr.bf16.mxu0 0
      %1900 = vmatpush1.bf16.msra.mxu0 0
      %1901 = vmatprep.subr.bf16.mxu0 0
      %1902 = vmatpush1.bf16.msra.mxu0 0
      %1903 = vmatprep.subr.bf16.mxu0 0
      %1904 = vmatpush1.bf16.msra.mxu0 %v1887
      %1905 = vmatprep.subr.bf16.mxu0 0
      %1906 = vmatpush2.bf16.msra.mxu0 0
      %1907 = vmatprep.subr.bf16.mxu0 0
      %1908 = vmatpush2.bf16.msra.mxu0 0
      %1909 = vmatprep.subr.bf16.mxu0 0
      %1910 = vmatpush2.bf16.msra.mxu0 0
      %1911 = vmatprep.subr.bf16.mxu0 0
      %1912 = vmatpush2.bf16.msra.mxu0 0
      %1913 = vmatprep.subr.bf16.mxu0 0
      %1914 = vmatpush2.bf16.msra.mxu0 0
      %1915 = vmatprep.subr.bf16.mxu0 0
      %1916 = vmatpush2.bf16.msra.mxu0 0
      %1917 = vmatprep.subr.bf16.mxu0 0
      %1918 = vmatpush2.bf16.msra.mxu0 0
      %1919 = vmatprep.subr.bf16.mxu0 0
      %1920 = vmatpush2.bf16.msra.mxu0 0
      %1921 = vmatprep.mubr.bf16.mxu0 0
      %1922 = vmatmul.mubr.bf16.gmra.mxu0 %v1842
      %v1923 = vpop.f32.mrf.mxu0
      %v1924 = vadd.f32 0.0, %v1923
      %v1925 = vpop.f32.mrf.mxu0
      %v1926 = vpop.f32.mrf.mxu0
      %v1927 = vadd.f32 0.0, %v1926
      %v1928 = vpop.f32.mrf.mxu0
      %1929 = vmatprep.mubr.bf16.mxu0 0
      %1930 = vmatmul.mubr.bf16.gmra.mxu0 %v1845
      %v1931 = vpop.f32.mrf.mxu0
      %v1932 = vadd.f32 0.0, %v1931
      %v1933 = vpop.f32.mrf.mxu0
      %v1934 = vpop.f32.mrf.mxu0
      %v1935 = vadd.f32 0.0, %v1934
      %v1936 = vpop.f32.mrf.mxu0
      %1937 = vmatprep.mubr.bf16.mxu0 0
      %1938 = vmatmul.mubr.bf16.gmra.mxu0 %v1848
      %v1939 = vpop.f32.mrf.mxu0
      %v1940 = vadd.f32 0.0, %v1939
      %v1941 = vpop.f32.mrf.mxu0
      %v1942 = vpop.f32.mrf.mxu0
      %v1943 = vadd.f32 0.0, %v1942
      %v1944 = vpop.f32.mrf.mxu0
      %1945 = vmatprep.mubr.bf16.mxu0 0
      %1946 = vmatmul.mubr.bf16.gmra.mxu0 %v1851
      %v1947 = vpop.f32.mrf.mxu0
      %v1948 = vadd.f32 0.0, %v1947
      %v1949 = vpop.f32.mrf.mxu0
      %v1950 = vpop.f32.mrf.mxu0
      %v1951 = vadd.f32 0.0, %v1950
      %v1952 = vpop.f32.mrf.mxu0
      %1953 = vmatprep.mubr.bf16.mxu0 0
      %1954 = vmatmul.mubr.bf16.gmra.mxu0 %v1854
      %v1955 = vpop.f32.mrf.mxu0
      %v1956 = vadd.f32 0.0, %v1955
      %v1957 = vpop.f32.mrf.mxu0
      %v1958 = vpop.f32.mrf.mxu0
      %v1959 = vadd.f32 0.0, %v1958
      %v1960 = vpop.f32.mrf.mxu0
      %1961 = vmatprep.mubr.bf16.mxu0 0
      %1962 = vmatmul.mubr.bf16.gmra.mxu0 %v1857
      %v1963 = vpop.f32.mrf.mxu0
      %v1964 = vadd.f32 0.0, %v1963
      %v1965 = vpop.f32.mrf.mxu0
      %v1966 = vpop.f32.mrf.mxu0
      %v1967 = vadd.f32 0.0, %v1966
      %v1968 = vpop.f32.mrf.mxu0
      %1969 = vmatprep.mubr.bf16.mxu0 0
      %1970 = vmatmul.mubr.bf16.gmra.mxu0 %v1860
      %v1971 = vpop.f32.mrf.mxu0
      %v1972 = vadd.f32 0.0, %v1971
      %v1973 = vpop.f32.mrf.mxu0
      %v1974 = vpop.f32.mrf.mxu0
      %v1975 = vadd.f32 0.0, %v1974
      %v1976 = vpop.f32.mrf.mxu0
      %1977 = vmatprep.mubr.bf16.mxu0 0
      %1978 = vmatmul.mubr.bf16.gmra.mxu0 %v1863
      %v1979 = vpop.f32.mrf.mxu0
      %v1980 = vadd.f32 0.0, %v1979
      %v1981 = vpop.f32.mrf.mxu0
      %v1982 = vpop.f32.mrf.mxu0
      %v1983 = vadd.f32 0.0, %v1982
      %v1984 = vpop.f32.mrf.mxu0
      %1985 = vmatprep.mubr.bf16.mxu0 0
      %1986 = vmatmul.mubr.bf16.gmra.mxu0 %v1866
      %v1987 = vpop.f32.mrf.mxu0
      %v1988 = vadd.f32 0.0, %v1987
      %v1989 = vpop.f32.mrf.mxu0
      %v1990 = vpop.f32.mrf.mxu0
      %v1991 = vadd.f32 0.0, %v1990
      %v1992 = vpop.f32.mrf.mxu0
      %1993 = vmatprep.mubr.bf16.mxu0 0
      %1994 = vmatmul.mubr.bf16.gmra.mxu0 %v1869
      %v1995 = vpop.f32.mrf.mxu0
      %v1996 = vadd.f32 0.0, %v1995
      %v1997 = vpop.f32.mrf.mxu0
      %v1998 = vpop.f32.mrf.mxu0
      %v1999 = vadd.f32 0.0, %v1998
      %v2000 = vpop.f32.mrf.mxu0
      %2001 = vmatprep.mubr.bf16.mxu0 0
      %2002 = vmatmul.mubr.bf16.gmra.mxu0 %v1872
      %v2003 = vpop.f32.mrf.mxu0
      %v2004 = vadd.f32 0.0, %v2003
      %v2005 = vpop.f32.mrf.mxu0
      %v2006 = vpop.f32.mrf.mxu0
      %v2007 = vadd.f32 0.0, %v2006
      %v2008 = vpop.f32.mrf.mxu0
      %2009 = vmatprep.mubr.bf16.mxu0 0
      %2010 = vmatmul.mubr.bf16.gmra.mxu0 %v1875
      %v2011 = vpop.f32.mrf.mxu0
      %v2012 = vadd.f32 0.0, %v2011
      %v2013 = vpop.f32.mrf.mxu0
      %v2014 = vpop.f32.mrf.mxu0
      %v2015 = vadd.f32 0.0, %v2014
      %v2016 = vpop.f32.mrf.mxu0
      %2017 = vmatprep.mubr.bf16.mxu0 0
      %2018 = vmatmul.mubr.bf16.gmra.mxu0 %v1878
      %v2019 = vpop.f32.mrf.mxu0
      %v2020 = vadd.f32 0.0, %v2019
      %v2021 = vpop.f32.mrf.mxu0
      %v2022 = vpop.f32.mrf.mxu0
      %v2023 = vadd.f32 0.0, %v2022
      %v2024 = vpop.f32.mrf.mxu0
      %2025 = vmatprep.mubr.bf16.mxu0 0
      %2026 = vmatmul.mubr.bf16.gmra.mxu0 %v1881
      %v2027 = vpop.f32.mrf.mxu0
      %v2028 = vadd.f32 0.0, %v2027
      %v2029 = vpop.f32.mrf.mxu0
      %v2030 = vpop.f32.mrf.mxu0
      %v2031 = vadd.f32 0.0, %v2030
      %v2032 = vpop.f32.mrf.mxu0
      %2033 = vmatprep.mubr.bf16.mxu0 0
      %2034 = vmatmul.mubr.bf16.gmra.mxu0 %v1884
      %v2035 = vpop.f32.mrf.mxu0
      %v2036 = vadd.f32 0.0, %v2035
      %v2037 = vpop.f32.mrf.mxu0
      %v2038 = vpop.f32.mrf.mxu0
      %v2039 = vadd.f32 0.0, %v2038
      %v2040 = vpop.f32.mrf.mxu0
      %2041 = vdwg.mxu0
      %v2042 = vadd.f32 %v1573, %v1924
      %v2043 = vadd.f32 %v1576, %v1927
      %v2044 = vadd.f32 %v1581, %v1932
      %v2045 = vadd.f32 %v1584, %v1935
      %v2046 = vadd.f32 %v1589, %v1940
      %v2047 = vadd.f32 %v1592, %v1943
      %v2048 = vadd.f32 %v1597, %v1948
      %v2049 = vadd.f32 %v1600, %v1951
      %v2050 = vadd.f32 %v1605, %v1956
      %v2051 = vadd.f32 %v1608, %v1959
      %v2052 = vadd.f32 %v1613, %v1964
      %v2053 = vadd.f32 %v1616, %v1967
      %v2054 = vadd.f32 %v1621, %v1972
      %v2055 = vadd.f32 %v1624, %v1975
      %v2056 = vadd.f32 %v1629, %v1980
      %v2057 = vadd.f32 %v1632, %v1983
      %v2058 = vadd.f32 %v1637, %v1988
      %v2059 = vadd.f32 %v1640, %v1991
      %v2060 = vadd.f32 %v1645, %v1996
      %v2061 = vadd.f32 %v1648, %v1999
      %v2062 = vadd.f32 %v1653, %v2004
      %v2063 = vadd.f32 %v1656, %v2007
      %v2064 = vadd.f32 %v1661, %v2012
      %v2065 = vadd.f32 %v1664, %v2015
      %v2066 = vadd.f32 %v1669, %v2020
      %v2067 = vadd.f32 %v1672, %v2023
      %v2068 = vadd.f32 %v1677, %v2028
      %v2069 = vadd.f32 %v1680, %v2031
      %v2070 = vadd.f32 %v1685, %v2036
      %v2071 = vadd.f32 %v1688, %v2039
      %v2074 = vunpack.c.l.b16 %v771
      %v2075 = vunpack.c.h.b16 %v771
      %v2076 = vunpack.c.l.b16 %v774
      %s2077 = scalar_lea.vmem %s2, 12
      %v2078 = vld [vmem:[%s2077] sm:$0xf]
      %v2079 = vpack.c.b16 %v805, %v804
      %v2080 = vpack.c.b16 %v807, %v806
      %v2081 = vpack.c.b16 %v809, %v808
      %v2082 = vpack.c.b16 %v811, %v810
      %v2083 = vpack.c.b16 %v813, %v812
      %v2084 = vpack.c.b16 %v815, %v814
      %v2085 = vpack.c.b16 %v817, %v816
      %v2086 = vpack.c.b16 %v819, %v818
      %v2087 = vpack.c.b16 %v821, %v820
      %v2088 = vpack.c.b16 %v823, %v822
      %v2089 = vpack.c.b16 %v825, %v824
      %v2090 = vpack.c.b16 %v827, %v826
      %v2091 = vpack.c.b16 %v829, %v828
      %v2092 = vpack.c.b16 %v2074, %v830
      %v2093 = vpack.c.b16 %v2076, %v2075
      %v2095 = vsel %vm1272, %v2079, 0
      %v2098 = vsel %vm1272, %v2080, 0
      %v2101 = vsel %vm1272, %v2081, 0
      %v2104 = vsel %vm1272, %v2082, 0
      %v2107 = vsel %vm1272, %v2083, 0
      %v2110 = vsel %vm1272, %v2084, 0
      %v2113 = vsel %vm1272, %v2085, 0
      %v2116 = vsel %vm1272, %v2086, 0
      %v2119 = vsel %vm1272, %v2087, 0
      %v2122 = vsel %vm1272, %v2088, 0
      %v2125 = vsel %vm1272, %v2089, 0
      %v2128 = vsel %vm1272, %v2090, 0
      %v2131 = vsel %vm1272, %v2091, 0
      %v2134 = vsel %vm1272, %v2092, 0
      %v2137 = vsel %vm1272, %v2093, 0
      %v2140 = vsel %vm1318, %v2078, 0
      %2142 = vmatprep.subr.bf16.mxu0 0
      %2143 = vmatpush1.bf16.msra.mxu0 0
      %2144 = vmatprep.subr.bf16.mxu0 0
      %2145 = vmatpush1.bf16.msra.mxu0 0
      %2146 = vmatprep.subr.bf16.mxu0 0
      %2147 = vmatpush1.bf16.msra.mxu0 0
      %2148 = vmatprep.subr.bf16.mxu0 0
      %2149 = vmatpush1.bf16.msra.mxu0 0
      %2150 = vmatprep.subr.bf16.mxu0 0
      %2151 = vmatpush1.bf16.msra.mxu0 0
      %2152 = vmatprep.subr.bf16.mxu0 0
      %2153 = vmatpush1.bf16.msra.mxu0 0
      %2154 = vmatprep.subr.bf16.mxu0 0
      %2155 = vmatpush1.bf16.msra.mxu0 0
      %2156 = vmatprep.subr.bf16.mxu0 0
      %2157 = vmatpush1.bf16.msra.mxu0 %v2140
      %2158 = vmatprep.subr.bf16.mxu0 0
      %2159 = vmatpush2.bf16.msra.mxu0 0
      %2160 = vmatprep.subr.bf16.mxu0 0
      %2161 = vmatpush2.bf16.msra.mxu0 0
      %2162 = vmatprep.subr.bf16.mxu0 0
      %2163 = vmatpush2.bf16.msra.mxu0 0
      %2164 = vmatprep.subr.bf16.mxu0 0
      %2165 = vmatpush2.bf16.msra.mxu0 0
      %2166 = vmatprep.subr.bf16.mxu0 0
      %2167 = vmatpush2.bf16.msra.mxu0 0
      %2168 = vmatprep.subr.bf16.mxu0 0
      %2169 = vmatpush2.bf16.msra.mxu0 0
      %2170 = vmatprep.subr.bf16.mxu0 0
      %2171 = vmatpush2.bf16.msra.mxu0 0
      %2172 = vmatprep.subr.bf16.mxu0 0
      %2173 = vmatpush2.bf16.msra.mxu0 0
      %2174 = vmatprep.mubr.bf16.mxu0 0
      %2175 = vmatmul.mubr.bf16.gmra.mxu0 %v2095
      %v2176 = vpop.f32.mrf.mxu0
      %v2177 = vadd.f32 0.0, %v2176
      %v2178 = vpop.f32.mrf.mxu0
      %v2179 = vpop.f32.mrf.mxu0
      %v2180 = vadd.f32 0.0, %v2179
      %v2181 = vpop.f32.mrf.mxu0
      %2182 = vmatprep.mubr.bf16.mxu0 0
      %2183 = vmatmul.mubr.bf16.gmra.mxu0 %v2098
      %v2184 = vpop.f32.mrf.mxu0
      %v2185 = vadd.f32 0.0, %v2184
      %v2186 = vpop.f32.mrf.mxu0
      %v2187 = vpop.f32.mrf.mxu0
      %v2188 = vadd.f32 0.0, %v2187
      %v2189 = vpop.f32.mrf.mxu0
      %2190 = vmatprep.mubr.bf16.mxu0 0
      %2191 = vmatmul.mubr.bf16.gmra.mxu0 %v2101
      %v2192 = vpop.f32.mrf.mxu0
      %v2193 = vadd.f32 0.0, %v2192
      %v2194 = vpop.f32.mrf.mxu0
      %v2195 = vpop.f32.mrf.mxu0
      %v2196 = vadd.f32 0.0, %v2195
      %v2197 = vpop.f32.mrf.mxu0
      %2198 = vmatprep.mubr.bf16.mxu0 0
      %2199 = vmatmul.mubr.bf16.gmra.mxu0 %v2104
      %v2200 = vpop.f32.mrf.mxu0
      %v2201 = vadd.f32 0.0, %v2200
      %v2202 = vpop.f32.mrf.mxu0
      %v2203 = vpop.f32.mrf.mxu0
      %v2204 = vadd.f32 0.0, %v2203
      %v2205 = vpop.f32.mrf.mxu0
      %2206 = vmatprep.mubr.bf16.mxu0 0
      %2207 = vmatmul.mubr.bf16.gmra.mxu0 %v2107
      %v2208 = vpop.f32.mrf.mxu0
      %v2209 = vadd.f32 0.0, %v2208
      %v2210 = vpop.f32.mrf.mxu0
      %v2211 = vpop.f32.mrf.mxu0
      %v2212 = vadd.f32 0.0, %v2211
      %v2213 = vpop.f32.mrf.mxu0
      %2214 = vmatprep.mubr.bf16.mxu0 0
      %2215 = vmatmul.mubr.bf16.gmra.mxu0 %v2110
      %v2216 = vpop.f32.mrf.mxu0
      %v2217 = vadd.f32 0.0, %v2216
      %v2218 = vpop.f32.mrf.mxu0
      %v2219 = vpop.f32.mrf.mxu0
      %v2220 = vadd.f32 0.0, %v2219
      %v2221 = vpop.f32.mrf.mxu0
      %2222 = vmatprep.mubr.bf16.mxu0 0
      %2223 = vmatmul.mubr.bf16.gmra.mxu0 %v2113
      %v2224 = vpop.f32.mrf.mxu0
      %v2225 = vadd.f32 0.0, %v2224
      %v2226 = vpop.f32.mrf.mxu0
      %v2227 = vpop.f32.mrf.mxu0
      %v2228 = vadd.f32 0.0, %v2227
      %v2229 = vpop.f32.mrf.mxu0
      %2230 = vmatprep.mubr.bf16.mxu0 0
      %2231 = vmatmul.mubr.bf16.gmra.mxu0 %v2116
      %v2232 = vpop.f32.mrf.mxu0
      %v2233 = vadd.f32 0.0, %v2232
      %v2234 = vpop.f32.mrf.mxu0
      %v2235 = vpop.f32.mrf.mxu0
      %v2236 = vadd.f32 0.0, %v2235
      %v2237 = vpop.f32.mrf.mxu0
      %2238 = vmatprep.mubr.bf16.mxu0 0
      %2239 = vmatmul.mubr.bf16.gmra.mxu0 %v2119
      %v2240 = vpop.f32.mrf.mxu0
      %v2241 = vadd.f32 0.0, %v2240
      %v2242 = vpop.f32.mrf.mxu0
      %v2243 = vpop.f32.mrf.mxu0
      %v2244 = vadd.f32 0.0, %v2243
      %v2245 = vpop.f32.mrf.mxu0
      %2246 = vmatprep.mubr.bf16.mxu0 0
      %2247 = vmatmul.mubr.bf16.gmra.mxu0 %v2122
      %v2248 = vpop.f32.mrf.mxu0
      %v2249 = vadd.f32 0.0, %v2248
      %v2250 = vpop.f32.mrf.mxu0
      %v2251 = vpop.f32.mrf.mxu0
      %v2252 = vadd.f32 0.0, %v2251
      %v2253 = vpop.f32.mrf.mxu0
      %2254 = vmatprep.mubr.bf16.mxu0 0
      %2255 = vmatmul.mubr.bf16.gmra.mxu0 %v2125
      %v2256 = vpop.f32.mrf.mxu0
      %v2257 = vadd.f32 0.0, %v2256
      %v2258 = vpop.f32.mrf.mxu0
      %v2259 = vpop.f32.mrf.mxu0
      %v2260 = vadd.f32 0.0, %v2259
      %v2261 = vpop.f32.mrf.mxu0
      %2262 = vmatprep.mubr.bf16.mxu0 0
      %2263 = vmatmul.mubr.bf16.gmra.mxu0 %v2128
      %v2264 = vpop.f32.mrf.mxu0
      %v2265 = vadd.f32 0.0, %v2264
      %v2266 = vpop.f32.mrf.mxu0
      %v2267 = vpop.f32.mrf.mxu0
      %v2268 = vadd.f32 0.0, %v2267
      %v2269 = vpop.f32.mrf.mxu0
      %2270 = vmatprep.mubr.bf16.mxu0 0
      %2271 = vmatmul.mubr.bf16.gmra.mxu0 %v2131
      %v2272 = vpop.f32.mrf.mxu0
      %v2273 = vadd.f32 0.0, %v2272
      %v2274 = vpop.f32.mrf.mxu0
      %v2275 = vpop.f32.mrf.mxu0
      %v2276 = vadd.f32 0.0, %v2275
      %v2277 = vpop.f32.mrf.mxu0
      %2278 = vmatprep.mubr.bf16.mxu0 0
      %2279 = vmatmul.mubr.bf16.gmra.mxu0 %v2134
      %v2280 = vpop.f32.mrf.mxu0
      %v2281 = vadd.f32 0.0, %v2280
      %v2282 = vpop.f32.mrf.mxu0
      %v2283 = vpop.f32.mrf.mxu0
      %v2284 = vadd.f32 0.0, %v2283
      %v2285 = vpop.f32.mrf.mxu0
      %2286 = vmatprep.mubr.bf16.mxu0 0
      %2287 = vmatmul.mubr.bf16.gmra.mxu0 %v2137
      %v2288 = vpop.f32.mrf.mxu0
      %v2289 = vadd.f32 0.0, %v2288
      %v2290 = vpop.f32.mrf.mxu0
      %v2291 = vpop.f32.mrf.mxu0
      %v2292 = vadd.f32 0.0, %v2291
      %v2293 = vpop.f32.mrf.mxu0
      %2294 = vdwg.mxu0
      %v2295 = vadd.f32 %v2042, %v2177
      %v2296 = vadd.f32 %v2043, %v2180
      %v2297 = vadd.f32 %v2044, %v2185
      %v2298 = vadd.f32 %v2045, %v2188
      %v2299 = vadd.f32 %v2046, %v2193
      %v2300 = vadd.f32 %v2047, %v2196
      %v2301 = vadd.f32 %v2048, %v2201
      %v2302 = vadd.f32 %v2049, %v2204
      %v2303 = vadd.f32 %v2050, %v2209
      %v2304 = vadd.f32 %v2051, %v2212
      %v2305 = vadd.f32 %v2052, %v2217
      %v2306 = vadd.f32 %v2053, %v2220
      %v2307 = vadd.f32 %v2054, %v2225
      %v2308 = vadd.f32 %v2055, %v2228
      %v2309 = vadd.f32 %v2056, %v2233
      %v2310 = vadd.f32 %v2057, %v2236
      %v2311 = vadd.f32 %v2058, %v2241
      %v2312 = vadd.f32 %v2059, %v2244
      %v2313 = vadd.f32 %v2060, %v2249
      %v2314 = vadd.f32 %v2061, %v2252
      %v2315 = vadd.f32 %v2062, %v2257
      %v2316 = vadd.f32 %v2063, %v2260
      %v2317 = vadd.f32 %v2064, %v2265
      %v2318 = vadd.f32 %v2065, %v2268
      %v2319 = vadd.f32 %v2066, %v2273
      %v2320 = vadd.f32 %v2067, %v2276
      %v2321 = vadd.f32 %v2068, %v2281
      %v2322 = vadd.f32 %v2069, %v2284
      %v2323 = vadd.f32 %v2070, %v2289
      %v2324 = vadd.f32 %v2071, %v2292
      %v2325 = vunpack.c.h.b16 %v774
      %v2326 = vpack.c.b16 %v2074, %v2074
      %v2327 = vpack.c.b16 %v2075, %v2075
      %v2328 = vpack.c.b16 %v2076, %v2076
      %v2329 = vpack.c.b16 %v2325, %v2325
      %v2331 = vshrl.u32 %v2326, 16
      %v2333 = vrot.slane %v2331, 4
      %v2334 = vshll.u32 %v2326, 16
      %v2336 = vrot.slane %v2334, 5
      %v2337 = vor.u32 %v2333, %v2336
      %v2338 = vrot.slane %v2337, 4
      %v2340 = vshll.u32 %v2327, 16
      %v2342 = vrot.slane %v2340, 5
      %v2343 = vsel %vm884, %v2338, %v2342
      %v2344 = vshrl.u32 %v2327, 16
      %v2346 = vrot.slane %v2344, 4
      %v2347 = vor.u32 %v2346, %v2342
      %v2348 = vrot.slane %v2347, 4
      %v2350 = vshll.u32 %v2328, 16
      %v2352 = vrot.slane %v2350, 5
      %v2353 = vsel %vm884, %v2348, %v2352
      %v2354 = vshrl.u32 %v2328, 16
      %v2356 = vrot.slane %v2354, 4
      %v2357 = vor.u32 %v2356, %v2352
      %v2358 = vrot.slane %v2357, 4
      %v2360 = vshll.u32 %v2329, 16
      %v2362 = vrot.slane %v2360, 5
      %v2363 = vsel %vm884, %v2358, %v2362
      %s2364 = scalar_lea.vmem %s2, 16
      %v2365 = vld [vmem:[%s2364] sm:$0xf]
      %v2366 = vunpack.c.l.b16 %v2343
      %v2367 = vunpack.c.l.b16 %v2353
      %v2368 = vunpack.c.l.b16 %v2363
      %v2369 = vpack.c.b16 %v1231, %v1230
      %v2370 = vpack.c.b16 %v1233, %v1232
      %v2371 = vpack.c.b16 %v1235, %v1234
      %v2372 = vpack.c.b16 %v1237, %v1236
      %v2373 = vpack.c.b16 %v1239, %v1238
      %v2374 = vpack.c.b16 %v1241, %v1240
      %v2375 = vpack.c.b16 %v1243, %v1242
      %v2376 = vpack.c.b16 %v1245, %v1244
      %v2377 = vpack.c.b16 %v1247, %v1246
      %v2378 = vpack.c.b16 %v1249, %v1248
      %v2379 = vpack.c.b16 %v1251, %v1250
      %v2380 = vpack.c.b16 %v1253, %v1252
      %v2381 = vpack.c.b16 %v1255, %v1254
      %v2382 = vpack.c.b16 %v2366, %v1256
      %v2383 = vpack.c.b16 %v2368, %v2367
      %v2385 = vsel %vm1272, %v2369, 0
      %v2388 = vsel %vm1272, %v2370, 0
      %v2391 = vsel %vm1272, %v2371, 0
      %v2394 = vsel %vm1272, %v2372, 0
      %v2397 = vsel %vm1272, %v2373, 0
      %v2400 = vsel %vm1272, %v2374, 0
      %v2403 = vsel %vm1272, %v2375, 0
      %v2406 = vsel %vm1272, %v2376, 0
      %v2409 = vsel %vm1272, %v2377, 0
      %v2412 = vsel %vm1272, %v2378, 0
      %v2415 = vsel %vm1272, %v2379, 0
      %v2418 = vsel %vm1272, %v2380, 0
      %v2421 = vsel %vm1272, %v2381, 0
      %v2424 = vsel %vm1272, %v2382, 0
      %v2427 = vsel %vm1272, %v2383, 0
      %v2430 = vsel %vm1318, %v2365, 0
      %2432 = vmatprep.subr.bf16.mxu0 0
      %2433 = vmatpush1.bf16.msra.mxu0 0
      %2434 = vmatprep.subr.bf16.mxu0 0
      %2435 = vmatpush1.bf16.msra.mxu0 0
      %2436 = vmatprep.subr.bf16.mxu0 0
      %2437 = vmatpush1.bf16.msra.mxu0 0
      %2438 = vmatprep.subr.bf16.mxu0 0
      %2439 = vmatpush1.bf16.msra.mxu0 0
      %2440 = vmatprep.subr.bf16.mxu0 0
      %2441 = vmatpush1.bf16.msra.mxu0 0
      %2442 = vmatprep.subr.bf16.mxu0 0
      %2443 = vmatpush1.bf16.msra.mxu0 0
      %2444 = vmatprep.subr.bf16.mxu0 0
      %2445 = vmatpush1.bf16.msra.mxu0 0
      %2446 = vmatprep.subr.bf16.mxu0 0
      %2447 = vmatpush1.bf16.msra.mxu0 %v2430
      %2448 = vmatprep.subr.bf16.mxu0 0
      %2449 = vmatpush2.bf16.msra.mxu0 0
      %2450 = vmatprep.subr.bf16.mxu0 0
      %2451 = vmatpush2.bf16.msra.mxu0 0
      %2452 = vmatprep.subr.bf16.mxu0 0
      %2453 = vmatpush2.bf16.msra.mxu0 0
      %2454 = vmatprep.subr.bf16.mxu0 0
      %2455 = vmatpush2.bf16.msra.mxu0 0
      %2456 = vmatprep.subr.bf16.mxu0 0
      %2457 = vmatpush2.bf16.msra.mxu0 0
      %2458 = vmatprep.subr.bf16.mxu0 0
      %2459 = vmatpush2.bf16.msra.mxu0 0
      %2460 = vmatprep.subr.bf16.mxu0 0
      %2461 = vmatpush2.bf16.msra.mxu0 0
      %2462 = vmatprep.subr.bf16.mxu0 0
      %2463 = vmatpush2.bf16.msra.mxu0 0
      %2464 = vmatprep.mubr.bf16.mxu0 0
      %2465 = vmatmul.mubr.bf16.gmra.mxu0 %v2385
      %v2466 = vpop.f32.mrf.mxu0
      %v2467 = vadd.f32 0.0, %v2466
      %v2468 = vpop.f32.mrf.mxu0
      %v2469 = vpop.f32.mrf.mxu0
      %v2470 = vadd.f32 0.0, %v2469
      %v2471 = vpop.f32.mrf.mxu0
      %2472 = vmatprep.mubr.bf16.mxu0 0
      %2473 = vmatmul.mubr.bf16.gmra.mxu0 %v2388
      %v2474 = vpop.f32.mrf.mxu0
      %v2475 = vadd.f32 0.0, %v2474
      %v2476 = vpop.f32.mrf.mxu0
      %v2477 = vpop.f32.mrf.mxu0
      %v2478 = vadd.f32 0.0, %v2477
      %v2479 = vpop.f32.mrf.mxu0
      %2480 = vmatprep.mubr.bf16.mxu0 0
      %2481 = vmatmul.mubr.bf16.gmra.mxu0 %v2391
      %v2482 = vpop.f32.mrf.mxu0
      %v2483 = vadd.f32 0.0, %v2482
      %v2484 = vpop.f32.mrf.mxu0
      %v2485 = vpop.f32.mrf.mxu0
      %v2486 = vadd.f32 0.0, %v2485
      %v2487 = vpop.f32.mrf.mxu0
      %2488 = vmatprep.mubr.bf16.mxu0 0
      %2489 = vmatmul.mubr.bf16.gmra.mxu0 %v2394
      %v2490 = vpop.f32.mrf.mxu0
      %v2491 = vadd.f32 0.0, %v2490
      %v2492 = vpop.f32.mrf.mxu0
      %v2493 = vpop.f32.mrf.mxu0
      %v2494 = vadd.f32 0.0, %v2493
      %v2495 = vpop.f32.mrf.mxu0
      %2496 = vmatprep.mubr.bf16.mxu0 0
      %2497 = vmatmul.mubr.bf16.gmra.mxu0 %v2397
      %v2498 = vpop.f32.mrf.mxu0
      %v2499 = vadd.f32 0.0, %v2498
      %v2500 = vpop.f32.mrf.mxu0
      %v2501 = vpop.f32.mrf.mxu0
      %v2502 = vadd.f32 0.0, %v2501
      %v2503 = vpop.f32.mrf.mxu0
      %2504 = vmatprep.mubr.bf16.mxu0 0
      %2505 = vmatmul.mubr.bf16.gmra.mxu0 %v2400
      %v2506 = vpop.f32.mrf.mxu0
      %v2507 = vadd.f32 0.0, %v2506
      %v2508 = vpop.f32.mrf.mxu0
      %v2509 = vpop.f32.mrf.mxu0
      %v2510 = vadd.f32 0.0, %v2509
      %v2511 = vpop.f32.mrf.mxu0
      %2512 = vmatprep.mubr.bf16.mxu0 0
      %2513 = vmatmul.mubr.bf16.gmra.mxu0 %v2403
      %v2514 = vpop.f32.mrf.mxu0
      %v2515 = vadd.f32 0.0, %v2514
      %v2516 = vpop.f32.mrf.mxu0
      %v2517 = vpop.f32.mrf.mxu0
      %v2518 = vadd.f32 0.0, %v2517
      %v2519 = vpop.f32.mrf.mxu0
      %2520 = vmatprep.mubr.bf16.mxu0 0
      %2521 = vmatmul.mubr.bf16.gmra.mxu0 %v2406
      %v2522 = vpop.f32.mrf.mxu0
      %v2523 = vadd.f32 0.0, %v2522
      %v2524 = vpop.f32.mrf.mxu0
      %v2525 = vpop.f32.mrf.mxu0
      %v2526 = vadd.f32 0.0, %v2525
      %v2527 = vpop.f32.mrf.mxu0
      %2528 = vmatprep.mubr.bf16.mxu0 0
      %2529 = vmatmul.mubr.bf16.gmra.mxu0 %v2409
      %v2530 = vpop.f32.mrf.mxu0
      %v2531 = vadd.f32 0.0, %v2530
      %v2532 = vpop.f32.mrf.mxu0
      %v2533 = vpop.f32.mrf.mxu0
      %v2534 = vadd.f32 0.0, %v2533
      %v2535 = vpop.f32.mrf.mxu0
      %2536 = vmatprep.mubr.bf16.mxu0 0
      %2537 = vmatmul.mubr.bf16.gmra.mxu0 %v2412
      %v2538 = vpop.f32.mrf.mxu0
      %v2539 = vadd.f32 0.0, %v2538
      %v2540 = vpop.f32.mrf.mxu0
      %v2541 = vpop.f32.mrf.mxu0
      %v2542 = vadd.f32 0.0, %v2541
      %v2543 = vpop.f32.mrf.mxu0
      %2544 = vmatprep.mubr.bf16.mxu0 0
      %2545 = vmatmul.mubr.bf16.gmra.mxu0 %v2415
      %v2546 = vpop.f32.mrf.mxu0
      %v2547 = vadd.f32 0.0, %v2546
      %v2548 = vpop.f32.mrf.mxu0
      %v2549 = vpop.f32.mrf.mxu0
      %v2550 = vadd.f32 0.0, %v2549
      %v2551 = vpop.f32.mrf.mxu0
      %2552 = vmatprep.mubr.bf16.mxu0 0
      %2553 = vmatmul.mubr.bf16.gmra.mxu0 %v2418
      %v2554 = vpop.f32.mrf.mxu0
      %v2555 = vadd.f32 0.0, %v2554
      %v2556 = vpop.f32.mrf.mxu0
      %v2557 = vpop.f32.mrf.mxu0
      %v2558 = vadd.f32 0.0, %v2557
      %v2559 = vpop.f32.mrf.mxu0
      %2560 = vmatprep.mubr.bf16.mxu0 0
      %2561 = vmatmul.mubr.bf16.gmra.mxu0 %v2421
      %v2562 = vpop.f32.mrf.mxu0
      %v2563 = vadd.f32 0.0, %v2562
      %v2564 = vpop.f32.mrf.mxu0
      %v2565 = vpop.f32.mrf.mxu0
      %v2566 = vadd.f32 0.0, %v2565
      %v2567 = vpop.f32.mrf.mxu0
      %2568 = vmatprep.mubr.bf16.mxu0 0
      %2569 = vmatmul.mubr.bf16.gmra.mxu0 %v2424
      %v2570 = vpop.f32.mrf.mxu0
      %v2571 = vadd.f32 0.0, %v2570
      %v2572 = vpop.f32.mrf.mxu0
      %v2573 = vpop.f32.mrf.mxu0
      %v2574 = vadd.f32 0.0, %v2573
      %v2575 = vpop.f32.mrf.mxu0
      %2576 = vmatprep.mubr.bf16.mxu0 0
      %2577 = vmatmul.mubr.bf16.gmra.mxu0 %v2427
      %v2578 = vpop.f32.mrf.mxu0
      %v2579 = vadd.f32 0.0, %v2578
      %v2580 = vpop.f32.mrf.mxu0
      %v2581 = vpop.f32.mrf.mxu0
      %v2582 = vadd.f32 0.0, %v2581
      %v2583 = vpop.f32.mrf.mxu0
      %2584 = vdwg.mxu0
      %v2585 = vadd.f32 %v2295, %v2467
      %v2586 = vadd.f32 %v2296, %v2470
      %v2587 = vadd.f32 %v2297, %v2475
      %v2588 = vadd.f32 %v2298, %v2478
      %v2589 = vadd.f32 %v2299, %v2483
      %v2590 = vadd.f32 %v2300, %v2486
      %v2591 = vadd.f32 %v2301, %v2491
      %v2592 = vadd.f32 %v2302, %v2494
      %v2593 = vadd.f32 %v2303, %v2499
      %v2594 = vadd.f32 %v2304, %v2502
      %v2595 = vadd.f32 %v2305, %v2507
      %v2596 = vadd.f32 %v2306, %v2510
      %v2597 = vadd.f32 %v2307, %v2515
      %v2598 = vadd.f32 %v2308, %v2518
      %v2599 = vadd.f32 %v2309, %v2523
      %v2600 = vadd.f32 %v2310, %v2526
      %v2601 = vadd.f32 %v2311, %v2531
      %v2602 = vadd.f32 %v2312, %v2534
      %v2603 = vadd.f32 %v2313, %v2539
      %v2604 = vadd.f32 %v2314, %v2542
      %v2605 = vadd.f32 %v2315, %v2547
      %v2606 = vadd.f32 %v2316, %v2550
      %v2607 = vadd.f32 %v2317, %v2555
      %v2608 = vadd.f32 %v2318, %v2558
      %v2609 = vadd.f32 %v2319, %v2563
      %v2610 = vadd.f32 %v2320, %v2566
      %v2611 = vadd.f32 %v2321, %v2571
      %v2612 = vadd.f32 %v2322, %v2574
      %v2613 = vadd.f32 %v2323, %v2579
      %v2614 = vadd.f32 %v2324, %v2582
      %v2615 = vrot.slane %v2326, 5
      %v2616 = vrot.slane %v2615, 4
      %v2617 = vrot.slane %v2327, 5
      %v2618 = vsel %vm1693, %v2616, %v2617
      %v2619 = vrot.slane %v2617, 4
      %v2620 = vrot.slane %v2328, 5
      %v2621 = vsel %vm1693, %v2619, %v2620
      %v2622 = vrot.slane %v2620, 4
      %v2623 = vrot.slane %v2329, 5
      %v2624 = vsel %vm1693, %v2622, %v2623
      %s2625 = scalar_lea.vmem %s2, 20
      %v2626 = vld [vmem:[%s2625] sm:$0xf]
      %v2627 = vunpack.c.l.b16 %v2618
      %v2628 = vunpack.c.l.b16 %v2621
      %v2629 = vunpack.c.l.b16 %v2624
      %v2630 = vpack.c.b16 %v1800, %v1799
      %v2631 = vpack.c.b16 %v1802, %v1801
      %v2632 = vpack.c.b16 %v1804, %v1803
      %v2633 = vpack.c.b16 %v1806, %v1805
      %v2634 = vpack.c.b16 %v1808, %v1807
      %v2635 = vpack.c.b16 %v1810, %v1809
      %v2636 = vpack.c.b16 %v1812, %v1811
      %v2637 = vpack.c.b16 %v1814, %v1813
      %v2638 = vpack.c.b16 %v1816, %v1815
      %v2639 = vpack.c.b16 %v1818, %v1817
      %v2640 = vpack.c.b16 %v1820, %v1819
      %v2641 = vpack.c.b16 %v1822, %v1821
      %v2642 = vpack.c.b16 %v1824, %v1823
      %v2643 = vpack.c.b16 %v2627, %v1825
      %v2644 = vpack.c.b16 %v2629, %v2628
      %v2646 = vsel %vm1272, %v2630, 0
      %v2649 = vsel %vm1272, %v2631, 0
      %v2652 = vsel %vm1272, %v2632, 0
      %v2655 = vsel %vm1272, %v2633, 0
      %v2658 = vsel %vm1272, %v2634, 0
      %v2661 = vsel %vm1272, %v2635, 0
      %v2664 = vsel %vm1272, %v2636, 0
      %v2667 = vsel %vm1272, %v2637, 0
      %v2670 = vsel %vm1272, %v2638, 0
      %v2673 = vsel %vm1272, %v2639, 0
      %v2676 = vsel %vm1272, %v2640, 0
      %v2679 = vsel %vm1272, %v2641, 0
      %v2682 = vsel %vm1272, %v2642, 0
      %v2685 = vsel %vm1272, %v2643, 0
      %v2688 = vsel %vm1272, %v2644, 0
      %v2691 = vsel %vm1318, %v2626, 0
      %2693 = vmatprep.subr.bf16.mxu0 0
      %2694 = vmatpush1.bf16.msra.mxu0 0
      %2695 = vmatprep.subr.bf16.mxu0 0
      %2696 = vmatpush1.bf16.msra.mxu0 0
      %2697 = vmatprep.subr.bf16.mxu0 0
      %2698 = vmatpush1.bf16.msra.mxu0 0
      %2699 = vmatprep.subr.bf16.mxu0 0
      %2700 = vmatpush1.bf16.msra.mxu0 0
      %2701 = vmatprep.subr.bf16.mxu0 0
      %2702 = vmatpush1.bf16.msra.mxu0 0
      %2703 = vmatprep.subr.bf16.mxu0 0
      %2704 = vmatpush1.bf16.msra.mxu0 0
      %2705 = vmatprep.subr.bf16.mxu0 0
      %2706 = vmatpush1.bf16.msra.mxu0 0
      %2707 = vmatprep.subr.bf16.mxu0 0
      %2708 = vmatpush1.bf16.msra.mxu0 %v2691
      %2709 = vmatprep.subr.bf16.mxu0 0
      %2710 = vmatpush2.bf16.msra.mxu0 0
      %2711 = vmatprep.subr.bf16.mxu0 0
      %2712 = vmatpush2.bf16.msra.mxu0 0
      %2713 = vmatprep.subr.bf16.mxu0 0
      %2714 = vmatpush2.bf16.msra.mxu0 0
      %2715 = vmatprep.subr.bf16.mxu0 0
      %2716 = vmatpush2.bf16.msra.mxu0 0
      %2717 = vmatprep.subr.bf16.mxu0 0
      %2718 = vmatpush2.bf16.msra.mxu0 0
      %2719 = vmatprep.subr.bf16.mxu0 0
      %2720 = vmatpush2.bf16.msra.mxu0 0
      %2721 = vmatprep.subr.bf16.mxu0 0
      %2722 = vmatpush2.bf16.msra.mxu0 0
      %2723 = vmatprep.subr.bf16.mxu0 0
      %2724 = vmatpush2.bf16.msra.mxu0 0
      %2725 = vmatprep.mubr.bf16.mxu0 0
      %2726 = vmatmul.mubr.bf16.gmra.mxu0 %v2646
      %v2727 = vpop.f32.mrf.mxu0
      %v2728 = vadd.f32 0.0, %v2727
      %v2729 = vpop.f32.mrf.mxu0
      %v2730 = vpop.f32.mrf.mxu0
      %v2731 = vadd.f32 0.0, %v2730
      %v2732 = vpop.f32.mrf.mxu0
      %2733 = vmatprep.mubr.bf16.mxu0 0
      %2734 = vmatmul.mubr.bf16.gmra.mxu0 %v2649
      %v2735 = vpop.f32.mrf.mxu0
      %v2736 = vadd.f32 0.0, %v2735
      %v2737 = vpop.f32.mrf.mxu0
      %v2738 = vpop.f32.mrf.mxu0
      %v2739 = vadd.f32 0.0, %v2738
      %v2740 = vpop.f32.mrf.mxu0
      %2741 = vmatprep.mubr.bf16.mxu0 0
      %2742 = vmatmul.mubr.bf16.gmra.mxu0 %v2652
      %v2743 = vpop.f32.mrf.mxu0
      %v2744 = vadd.f32 0.0, %v2743
      %v2745 = vpop.f32.mrf.mxu0
      %v2746 = vpop.f32.mrf.mxu0
      %v2747 = vadd.f32 0.0, %v2746
      %v2748 = vpop.f32.mrf.mxu0
      %2749 = vmatprep.mubr.bf16.mxu0 0
      %2750 = vmatmul.mubr.bf16.gmra.mxu0 %v2655
      %v2751 = vpop.f32.mrf.mxu0
      %v2752 = vadd.f32 0.0, %v2751
      %v2753 = vpop.f32.mrf.mxu0
      %v2754 = vpop.f32.mrf.mxu0
      %v2755 = vadd.f32 0.0, %v2754
      %v2756 = vpop.f32.mrf.mxu0
      %2757 = vmatprep.mubr.bf16.mxu0 0
      %2758 = vmatmul.mubr.bf16.gmra.mxu0 %v2658
      %v2759 = vpop.f32.mrf.mxu0
      %v2760 = vadd.f32 0.0, %v2759
      %v2761 = vpop.f32.mrf.mxu0
      %v2762 = vpop.f32.mrf.mxu0
      %v2763 = vadd.f32 0.0, %v2762
      %v2764 = vpop.f32.mrf.mxu0
      %2765 = vmatprep.mubr.bf16.mxu0 0
      %2766 = vmatmul.mubr.bf16.gmra.mxu0 %v2661
      %v2767 = vpop.f32.mrf.mxu0
      %v2768 = vadd.f32 0.0, %v2767
      %v2769 = vpop.f32.mrf.mxu0
      %v2770 = vpop.f32.mrf.mxu0
      %v2771 = vadd.f32 0.0, %v2770
      %v2772 = vpop.f32.mrf.mxu0
      %2773 = vmatprep.mubr.bf16.mxu0 0
      %2774 = vmatmul.mubr.bf16.gmra.mxu0 %v2664
      %v2775 = vpop.f32.mrf.mxu0
      %v2776 = vadd.f32 0.0, %v2775
      %v2777 = vpop.f32.mrf.mxu0
      %v2778 = vpop.f32.mrf.mxu0
      %v2779 = vadd.f32 0.0, %v2778
      %v2780 = vpop.f32.mrf.mxu0
      %2781 = vmatprep.mubr.bf16.mxu0 0
      %2782 = vmatmul.mubr.bf16.gmra.mxu0 %v2667
      %v2783 = vpop.f32.mrf.mxu0
      %v2784 = vadd.f32 0.0, %v2783
      %v2785 = vpop.f32.mrf.mxu0
      %v2786 = vpop.f32.mrf.mxu0
      %v2787 = vadd.f32 0.0, %v2786
      %v2788 = vpop.f32.mrf.mxu0
      %2789 = vmatprep.mubr.bf16.mxu0 0
      %2790 = vmatmul.mubr.bf16.gmra.mxu0 %v2670
      %v2791 = vpop.f32.mrf.mxu0
      %v2792 = vadd.f32 0.0, %v2791
      %v2793 = vpop.f32.mrf.mxu0
      %v2794 = vpop.f32.mrf.mxu0
      %v2795 = vadd.f32 0.0, %v2794
      %v2796 = vpop.f32.mrf.mxu0
      %2797 = vmatprep.mubr.bf16.mxu0 0
      %2798 = vmatmul.mubr.bf16.gmra.mxu0 %v2673
      %v2799 = vpop.f32.mrf.mxu0
      %v2800 = vadd.f32 0.0, %v2799
      %v2801 = vpop.f32.mrf.mxu0
      %v2802 = vpop.f32.mrf.mxu0
      %v2803 = vadd.f32 0.0, %v2802
      %v2804 = vpop.f32.mrf.mxu0
      %2805 = vmatprep.mubr.bf16.mxu0 0
      %2806 = vmatmul.mubr.bf16.gmra.mxu0 %v2676
      %v2807 = vpop.f32.mrf.mxu0
      %v2808 = vadd.f32 0.0, %v2807
      %v2809 = vpop.f32.mrf.mxu0
      %v2810 = vpop.f32.mrf.mxu0
      %v2811 = vadd.f32 0.0, %v2810
      %v2812 = vpop.f32.mrf.mxu0
      %2813 = vmatprep.mubr.bf16.mxu0 0
      %2814 = vmatmul.mubr.bf16.gmra.mxu0 %v2679
      %v2815 = vpop.f32.mrf.mxu0
      %v2816 = vadd.f32 0.0, %v2815
      %v2817 = vpop.f32.mrf.mxu0
      %v2818 = vpop.f32.mrf.mxu0
      %v2819 = vadd.f32 0.0, %v2818
      %v2820 = vpop.f32.mrf.mxu0
      %2821 = vmatprep.mubr.bf16.mxu0 0
      %2822 = vmatmul.mubr.bf16.gmra.mxu0 %v2682
      %v2823 = vpop.f32.mrf.mxu0
      %v2824 = vadd.f32 0.0, %v2823
      %v2825 = vpop.f32.mrf.mxu0
      %v2826 = vpop.f32.mrf.mxu0
      %v2827 = vadd.f32 0.0, %v2826
      %v2828 = vpop.f32.mrf.mxu0
      %2829 = vmatprep.mubr.bf16.mxu0 0
      %2830 = vmatmul.mubr.bf16.gmra.mxu0 %v2685
      %v2831 = vpop.f32.mrf.mxu0
      %v2832 = vadd.f32 0.0, %v2831
      %v2833 = vpop.f32.mrf.mxu0
      %v2834 = vpop.f32.mrf.mxu0
      %v2835 = vadd.f32 0.0, %v2834
      %v2836 = vpop.f32.mrf.mxu0
      %2837 = vmatprep.mubr.bf16.mxu0 0
      %2838 = vmatmul.mubr.bf16.gmra.mxu0 %v2688
      %v2839 = vpop.f32.mrf.mxu0
      %v2840 = vadd.f32 0.0, %v2839
      %v2841 = vpop.f32.mrf.mxu0
      %v2842 = vpop.f32.mrf.mxu0
      %v2843 = vadd.f32 0.0, %v2842
      %v2844 = vpop.f32.mrf.mxu0
      %2845 = vdwg.mxu0
      %v2846 = vadd.f32 %v2585, %v2728
      %v2847 = vadd.f32 %v2586, %v2731
      %v2848 = vadd.f32 %v2587, %v2736
      %v2849 = vadd.f32 %v2588, %v2739
      %v2850 = vadd.f32 %v2589, %v2744
      %v2851 = vadd.f32 %v2590, %v2747
      %v2852 = vadd.f32 %v2591, %v2752
      %v2853 = vadd.f32 %v2592, %v2755
      %v2854 = vadd.f32 %v2593, %v2760
      %v2855 = vadd.f32 %v2594, %v2763
      %v2856 = vadd.f32 %v2595, %v2768
      %v2857 = vadd.f32 %v2596, %v2771
      %v2858 = vadd.f32 %v2597, %v2776
      %v2859 = vadd.f32 %v2598, %v2779
      %v2860 = vadd.f32 %v2599, %v2784
      %v2861 = vadd.f32 %v2600, %v2787
      %v2862 = vadd.f32 %v2601, %v2792
      %v2863 = vadd.f32 %v2602, %v2795
      %v2864 = vadd.f32 %v2603, %v2800
      %v2865 = vadd.f32 %v2604, %v2803
      %v2866 = vadd.f32 %v2605, %v2808
      %v2867 = vadd.f32 %v2606, %v2811
      %v2868 = vadd.f32 %v2607, %v2816
      %v2869 = vadd.f32 %v2608, %v2819
      %v2870 = vadd.f32 %v2609, %v2824
      %v2871 = vadd.f32 %v2610, %v2827
      %v2872 = vadd.f32 %v2611, %v2832
      %v2873 = vadd.f32 %v2612, %v2835
      %v2874 = vadd.f32 %v2613, %v2840
      %v2875 = vadd.f32 %v2614, %v2843
      %v2878 = vunpack.c.l.b16 %v777
      %v2879 = vunpack.c.h.b16 %v777
      %v2880 = vunpack.c.l.b16 %v780
      %s2881 = scalar_lea.vmem %s2, 24
      %v2882 = vld [vmem:[%s2881] sm:$0xf]
      %v2883 = vpack.c.b16 %v2075, %v2074
      %v2884 = vpack.c.b16 %v2878, %v2076
      %v2885 = vpack.c.b16 %v2880, %v2879
      %v2887 = vsel %vm1272, %v2883, 0
      %v2890 = vsel %vm1272, %v2884, 0
      %v2893 = vsel %vm1272, %v2885, 0
      %v2896 = vsel %vm1318, %v2882, 0
      %2898 = vmatprep.subr.bf16.mxu0 0
      %2899 = vmatpush1.bf16.msra.mxu0 0
      %2900 = vmatprep.subr.bf16.mxu0 0
      %2901 = vmatpush1.bf16.msra.mxu0 0
      %2902 = vmatprep.subr.bf16.mxu0 0
      %2903 = vmatpush1.bf16.msra.mxu0 0
      %2904 = vmatprep.subr.bf16.mxu0 0
      %2905 = vmatpush1.bf16.msra.mxu0 0
      %2906 = vmatprep.subr.bf16.mxu0 0
      %2907 = vmatpush1.bf16.msra.mxu0 0
      %2908 = vmatprep.subr.bf16.mxu0 0
      %2909 = vmatpush1.bf16.msra.mxu0 0
      %2910 = vmatprep.subr.bf16.mxu0 0
      %2911 = vmatpush1.bf16.msra.mxu0 0
      %2912 = vmatprep.subr.bf16.mxu0 0
      %2913 = vmatpush1.bf16.msra.mxu0 %v2896
      %2914 = vmatprep.subr.bf16.mxu0 0
      %2915 = vmatpush2.bf16.msra.mxu0 0
      %2916 = vmatprep.subr.bf16.mxu0 0
      %2917 = vmatpush2.bf16.msra.mxu0 0
      %2918 = vmatprep.subr.bf16.mxu0 0
      %2919 = vmatpush2.bf16.msra.mxu0 0
      %2920 = vmatprep.subr.bf16.mxu0 0
      %2921 = vmatpush2.bf16.msra.mxu0 0
      %2922 = vmatprep.subr.bf16.mxu0 0
      %2923 = vmatpush2.bf16.msra.mxu0 0
      %2924 = vmatprep.subr.bf16.mxu0 0
      %2925 = vmatpush2.bf16.msra.mxu0 0
      %2926 = vmatprep.subr.bf16.mxu0 0
      %2927 = vmatpush2.bf16.msra.mxu0 0
      %2928 = vmatprep.subr.bf16.mxu0 0
      %2929 = vmatpush2.bf16.msra.mxu0 0
      %2930 = vmatprep.mubr.bf16.mxu0 0
      %2931 = vmatmul.mubr.bf16.gmra.mxu0 %v1500
      %v2932 = vpop.f32.mrf.mxu0
      %v2933 = vadd.f32 0.0, %v2932
      %v2934 = vpop.f32.mrf.mxu0
      %v2935 = vpop.f32.mrf.mxu0
      %v2936 = vadd.f32 0.0, %v2935
      %v2937 = vpop.f32.mrf.mxu0
      %2938 = vmatprep.mubr.bf16.mxu0 0
      %2939 = vmatmul.mubr.bf16.gmra.mxu0 %v1503
      %v2940 = vpop.f32.mrf.mxu0
      %v2941 = vadd.f32 0.0, %v2940
      %v2942 = vpop.f32.mrf.mxu0
      %v2943 = vpop.f32.mrf.mxu0
      %v2944 = vadd.f32 0.0, %v2943
      %v2945 = vpop.f32.mrf.mxu0
      %2946 = vmatprep.mubr.bf16.mxu0 0
      %2947 = vmatmul.mubr.bf16.gmra.mxu0 %v1506
      %v2948 = vpop.f32.mrf.mxu0
      %v2949 = vadd.f32 0.0, %v2948
      %v2950 = vpop.f32.mrf.mxu0
      %v2951 = vpop.f32.mrf.mxu0
      %v2952 = vadd.f32 0.0, %v2951
      %v2953 = vpop.f32.mrf.mxu0
      %2954 = vmatprep.mubr.bf16.mxu0 0
      %2955 = vmatmul.mubr.bf16.gmra.mxu0 %v1509
      %v2956 = vpop.f32.mrf.mxu0
      %v2957 = vadd.f32 0.0, %v2956
      %v2958 = vpop.f32.mrf.mxu0
      %v2959 = vpop.f32.mrf.mxu0
      %v2960 = vadd.f32 0.0, %v2959
      %v2961 = vpop.f32.mrf.mxu0
      %2962 = vmatprep.mubr.bf16.mxu0 0
      %2963 = vmatmul.mubr.bf16.gmra.mxu0 %v1512
      %v2964 = vpop.f32.mrf.mxu0
      %v2965 = vadd.f32 0.0, %v2964
      %v2966 = vpop.f32.mrf.mxu0
      %v2967 = vpop.f32.mrf.mxu0
      %v2968 = vadd.f32 0.0, %v2967
      %v2969 = vpop.f32.mrf.mxu0
      %2970 = vmatprep.mubr.bf16.mxu0 0
      %2971 = vmatmul.mubr.bf16.gmra.mxu0 %v1515
      %v2972 = vpop.f32.mrf.mxu0
      %v2973 = vadd.f32 0.0, %v2972
      %v2974 = vpop.f32.mrf.mxu0
      %v2975 = vpop.f32.mrf.mxu0
      %v2976 = vadd.f32 0.0, %v2975
      %v2977 = vpop.f32.mrf.mxu0
      %2978 = vmatprep.mubr.bf16.mxu0 0
      %2979 = vmatmul.mubr.bf16.gmra.mxu0 %v1518
      %v2980 = vpop.f32.mrf.mxu0
      %v2981 = vadd.f32 0.0, %v2980
      %v2982 = vpop.f32.mrf.mxu0
      %v2983 = vpop.f32.mrf.mxu0
      %v2984 = vadd.f32 0.0, %v2983
      %v2985 = vpop.f32.mrf.mxu0
      %2986 = vmatprep.mubr.bf16.mxu0 0
      %2987 = vmatmul.mubr.bf16.gmra.mxu0 %v1521
      %v2988 = vpop.f32.mrf.mxu0
      %v2989 = vadd.f32 0.0, %v2988
      %v2990 = vpop.f32.mrf.mxu0
      %v2991 = vpop.f32.mrf.mxu0
      %v2992 = vadd.f32 0.0, %v2991
      %v2993 = vpop.f32.mrf.mxu0
      %2994 = vmatprep.mubr.bf16.mxu0 0
      %2995 = vmatmul.mubr.bf16.gmra.mxu0 %v1524
      %v2996 = vpop.f32.mrf.mxu0
      %v2997 = vadd.f32 0.0, %v2996
      %v2998 = vpop.f32.mrf.mxu0
      %v2999 = vpop.f32.mrf.mxu0
      %v3000 = vadd.f32 0.0, %v2999
      %v3001 = vpop.f32.mrf.mxu0
      %3002 = vmatprep.mubr.bf16.mxu0 0
      %3003 = vmatmul.mubr.bf16.gmra.mxu0 %v1527
      %v3004 = vpop.f32.mrf.mxu0
      %v3005 = vadd.f32 0.0, %v3004
      %v3006 = vpop.f32.mrf.mxu0
      %v3007 = vpop.f32.mrf.mxu0
      %v3008 = vadd.f32 0.0, %v3007
      %v3009 = vpop.f32.mrf.mxu0
      %3010 = vmatprep.mubr.bf16.mxu0 0
      %3011 = vmatmul.mubr.bf16.gmra.mxu0 %v1530
      %v3012 = vpop.f32.mrf.mxu0
      %v3013 = vadd.f32 0.0, %v3012
      %v3014 = vpop.f32.mrf.mxu0
      %v3015 = vpop.f32.mrf.mxu0
      %v3016 = vadd.f32 0.0, %v3015
      %v3017 = vpop.f32.mrf.mxu0
      %3018 = vmatprep.mubr.bf16.mxu0 0
      %3019 = vmatmul.mubr.bf16.gmra.mxu0 %v1533
      %v3020 = vpop.f32.mrf.mxu0
      %v3021 = vadd.f32 0.0, %v3020
      %v3022 = vpop.f32.mrf.mxu0
      %v3023 = vpop.f32.mrf.mxu0
      %v3024 = vadd.f32 0.0, %v3023
      %v3025 = vpop.f32.mrf.mxu0
      %3026 = vmatprep.mubr.bf16.mxu0 0
      %3027 = vmatmul.mubr.bf16.gmra.mxu0 %v2887
      %v3028 = vpop.f32.mrf.mxu0
      %v3029 = vadd.f32 0.0, %v3028
      %v3030 = vpop.f32.mrf.mxu0
      %v3031 = vpop.f32.mrf.mxu0
      %v3032 = vadd.f32 0.0, %v3031
      %v3033 = vpop.f32.mrf.mxu0
      %3034 = vmatprep.mubr.bf16.mxu0 0
      %3035 = vmatmul.mubr.bf16.gmra.mxu0 %v2890
      %v3036 = vpop.f32.mrf.mxu0
      %v3037 = vadd.f32 0.0, %v3036
      %v3038 = vpop.f32.mrf.mxu0
      %v3039 = vpop.f32.mrf.mxu0
      %v3040 = vadd.f32 0.0, %v3039
      %v3041 = vpop.f32.mrf.mxu0
      %3042 = vmatprep.mubr.bf16.mxu0 0
      %3043 = vmatmul.mubr.bf16.gmra.mxu0 %v2893
      %v3044 = vpop.f32.mrf.mxu0
      %v3045 = vadd.f32 0.0, %v3044
      %v3046 = vpop.f32.mrf.mxu0
      %v3047 = vpop.f32.mrf.mxu0
      %v3048 = vadd.f32 0.0, %v3047
      %v3049 = vpop.f32.mrf.mxu0
      %3050 = vdwg.mxu0
      %v3051 = vadd.f32 %v2846, %v2933
      %v3052 = vadd.f32 %v2847, %v2936
      %v3053 = vadd.f32 %v2848, %v2941
      %v3054 = vadd.f32 %v2849, %v2944
      %v3055 = vadd.f32 %v2850, %v2949
      %v3056 = vadd.f32 %v2851, %v2952
      %v3057 = vadd.f32 %v2852, %v2957
      %v3058 = vadd.f32 %v2853, %v2960
      %v3059 = vadd.f32 %v2854, %v2965
      %v3060 = vadd.f32 %v2855, %v2968
      %v3061 = vadd.f32 %v2856, %v2973
      %v3062 = vadd.f32 %v2857, %v2976
      %v3063 = vadd.f32 %v2858, %v2981
      %v3064 = vadd.f32 %v2859, %v2984
      %v3065 = vadd.f32 %v2860, %v2989
      %v3066 = vadd.f32 %v2861, %v2992
      %v3067 = vadd.f32 %v2862, %v2997
      %v3068 = vadd.f32 %v2863, %v3000
      %v3069 = vadd.f32 %v2864, %v3005
      %v3070 = vadd.f32 %v2865, %v3008
      %v3071 = vadd.f32 %v2866, %v3013
      %v3072 = vadd.f32 %v2867, %v3016
      %v3073 = vadd.f32 %v2868, %v3021
      %v3074 = vadd.f32 %v2869, %v3024
      %v3075 = vadd.f32 %v2870, %v3029
      %v3076 = vadd.f32 %v2871, %v3032
      %v3077 = vadd.f32 %v2872, %v3037
      %v3078 = vadd.f32 %v2873, %v3040
      %v3079 = vadd.f32 %v2874, %v3045
      %v3080 = vadd.f32 %v2875, %v3048
      %v3081 = vunpack.c.h.b16 %v780
      %v3082 = vpack.c.b16 %v2878, %v2878
      %v3083 = vpack.c.b16 %v2879, %v2879
      %v3084 = vpack.c.b16 %v2880, %v2880
      %v3085 = vpack.c.b16 %v3081, %v3081
      %v3087 = vshrl.u32 %v3082, 16
      %v3089 = vrot.slane %v3087, 4
      %v3090 = vshll.u32 %v3082, 16
      %v3092 = vrot.slane %v3090, 5
      %v3093 = vor.u32 %v3089, %v3092
      %v3094 = vrot.slane %v3093, 4
      %v3096 = vshll.u32 %v3083, 16
      %v3098 = vrot.slane %v3096, 5
      %v3099 = vsel %vm884, %v3094, %v3098
      %v3100 = vshrl.u32 %v3083, 16
      %v3102 = vrot.slane %v3100, 4
      %v3103 = vor.u32 %v3102, %v3098
      %v3104 = vrot.slane %v3103, 4
      %v3106 = vshll.u32 %v3084, 16
      %v3108 = vrot.slane %v3106, 5
      %v3109 = vsel %vm884, %v3104, %v3108
      %v3110 = vshrl.u32 %v3084, 16
      %v3112 = vrot.slane %v3110, 4
      %v3113 = vor.u32 %v3112, %v3108
      %v3114 = vrot.slane %v3113, 4
      %v3116 = vshll.u32 %v3085, 16
      %v3118 = vrot.slane %v3116, 5
      %v3119 = vsel %vm884, %v3114, %v3118
      %s3120 = scalar_lea.vmem %s2, 28
      %v3121 = vld [vmem:[%s3120] sm:$0xf]
      %v3122 = vunpack.c.l.b16 %v3099
      %v3123 = vunpack.c.l.b16 %v3109
      %v3124 = vunpack.c.l.b16 %v3119
      %v3125 = vpack.c.b16 %v2367, %v2366
      %v3126 = vpack.c.b16 %v3122, %v2368
      %v3127 = vpack.c.b16 %v3124, %v3123
      %v3129 = vsel %vm1272, %v3125, 0
      %v3132 = vsel %vm1272, %v3126, 0
      %v3135 = vsel %vm1272, %v3127, 0
      %v3138 = vsel %vm1318, %v3121, 0
      %3140 = vmatprep.subr.bf16.mxu0 0
      %3141 = vmatpush1.bf16.msra.mxu0 0
      %3142 = vmatprep.subr.bf16.mxu0 0
      %3143 = vmatpush1.bf16.msra.mxu0 0
      %3144 = vmatprep.subr.bf16.mxu0 0
      %3145 = vmatpush1.bf16.msra.mxu0 0
      %3146 = vmatprep.subr.bf16.mxu0 0
      %3147 = vmatpush1.bf16.msra.mxu0 0
      %3148 = vmatprep.subr.bf16.mxu0 0
      %3149 = vmatpush1.bf16.msra.mxu0 0
      %3150 = vmatprep.subr.bf16.mxu0 0
      %3151 = vmatpush1.bf16.msra.mxu0 0
      %3152 = vmatprep.subr.bf16.mxu0 0
      %3153 = vmatpush1.bf16.msra.mxu0 0
      %3154 = vmatprep.subr.bf16.mxu0 0
      %3155 = vmatpush1.bf16.msra.mxu0 %v3138
      %3156 = vmatprep.subr.bf16.mxu0 0
      %3157 = vmatpush2.bf16.msra.mxu0 0
      %3158 = vmatprep.subr.bf16.mxu0 0
      %3159 = vmatpush2.bf16.msra.mxu0 0
      %3160 = vmatprep.subr.bf16.mxu0 0
      %3161 = vmatpush2.bf16.msra.mxu0 0
      %3162 = vmatprep.subr.bf16.mxu0 0
      %3163 = vmatpush2.bf16.msra.mxu0 0
      %3164 = vmatprep.subr.bf16.mxu0 0
      %3165 = vmatpush2.bf16.msra.mxu0 0
      %3166 = vmatprep.subr.bf16.mxu0 0
      %3167 = vmatpush2.bf16.msra.mxu0 0
      %3168 = vmatprep.subr.bf16.mxu0 0
      %3169 = vmatpush2.bf16.msra.mxu0 0
      %3170 = vmatprep.subr.bf16.mxu0 0
      %3171 = vmatpush2.bf16.msra.mxu0 0
      %3172 = vmatprep.mubr.bf16.mxu0 0
      %3173 = vmatmul.mubr.bf16.gmra.mxu0 %v1283
      %v3174 = vpop.f32.mrf.mxu0
      %v3175 = vadd.f32 0.0, %v3174
      %v3176 = vpop.f32.mrf.mxu0
      %v3177 = vpop.f32.mrf.mxu0
      %v3178 = vadd.f32 0.0, %v3177
      %v3179 = vpop.f32.mrf.mxu0
      %3180 = vmatprep.mubr.bf16.mxu0 0
      %3181 = vmatmul.mubr.bf16.gmra.mxu0 %v1286
      %v3182 = vpop.f32.mrf.mxu0
      %v3183 = vadd.f32 0.0, %v3182
      %v3184 = vpop.f32.mrf.mxu0
      %v3185 = vpop.f32.mrf.mxu0
      %v3186 = vadd.f32 0.0, %v3185
      %v3187 = vpop.f32.mrf.mxu0
      %3188 = vmatprep.mubr.bf16.mxu0 0
      %3189 = vmatmul.mubr.bf16.gmra.mxu0 %v1289
      %v3190 = vpop.f32.mrf.mxu0
      %v3191 = vadd.f32 0.0, %v3190
      %v3192 = vpop.f32.mrf.mxu0
      %v3193 = vpop.f32.mrf.mxu0
      %v3194 = vadd.f32 0.0, %v3193
      %v3195 = vpop.f32.mrf.mxu0
      %3196 = vmatprep.mubr.bf16.mxu0 0
      %3197 = vmatmul.mubr.bf16.gmra.mxu0 %v1292
      %v3198 = vpop.f32.mrf.mxu0
      %v3199 = vadd.f32 0.0, %v3198
      %v3200 = vpop.f32.mrf.mxu0
      %v3201 = vpop.f32.mrf.mxu0
      %v3202 = vadd.f32 0.0, %v3201
      %v3203 = vpop.f32.mrf.mxu0
      %3204 = vmatprep.mubr.bf16.mxu0 0
      %3205 = vmatmul.mubr.bf16.gmra.mxu0 %v1295
      %v3206 = vpop.f32.mrf.mxu0
      %v3207 = vadd.f32 0.0, %v3206
      %v3208 = vpop.f32.mrf.mxu0
      %v3209 = vpop.f32.mrf.mxu0
      %v3210 = vadd.f32 0.0, %v3209
      %v3211 = vpop.f32.mrf.mxu0
      %3212 = vmatprep.mubr.bf16.mxu0 0
      %3213 = vmatmul.mubr.bf16.gmra.mxu0 %v1298
      %v3214 = vpop.f32.mrf.mxu0
      %v3215 = vadd.f32 0.0, %v3214
      %v3216 = vpop.f32.mrf.mxu0
      %v3217 = vpop.f32.mrf.mxu0
      %v3218 = vadd.f32 0.0, %v3217
      %v3219 = vpop.f32.mrf.mxu0
      %3220 = vmatprep.mubr.bf16.mxu0 0
      %3221 = vmatmul.mubr.bf16.gmra.mxu0 %v1301
      %v3222 = vpop.f32.mrf.mxu0
      %v3223 = vadd.f32 0.0, %v3222
      %v3224 = vpop.f32.mrf.mxu0
      %v3225 = vpop.f32.mrf.mxu0
      %v3226 = vadd.f32 0.0, %v3225
      %v3227 = vpop.f32.mrf.mxu0
      %3228 = vmatprep.mubr.bf16.mxu0 0
      %3229 = vmatmul.mubr.bf16.gmra.mxu0 %v1304
      %v3230 = vpop.f32.mrf.mxu0
      %v3231 = vadd.f32 0.0, %v3230
      %v3232 = vpop.f32.mrf.mxu0
      %v3233 = vpop.f32.mrf.mxu0
      %v3234 = vadd.f32 0.0, %v3233
      %v3235 = vpop.f32.mrf.mxu0
      %3236 = vmatprep.mubr.bf16.mxu0 0
      %3237 = vmatmul.mubr.bf16.gmra.mxu0 %v1307
      %v3238 = vpop.f32.mrf.mxu0
      %v3239 = vadd.f32 0.0, %v3238
      %v3240 = vpop.f32.mrf.mxu0
      %v3241 = vpop.f32.mrf.mxu0
      %v3242 = vadd.f32 0.0, %v3241
      %v3243 = vpop.f32.mrf.mxu0
      %3244 = vmatprep.mubr.bf16.mxu0 0
      %3245 = vmatmul.mubr.bf16.gmra.mxu0 %v1310
      %v3246 = vpop.f32.mrf.mxu0
      %v3247 = vadd.f32 0.0, %v3246
      %v3248 = vpop.f32.mrf.mxu0
      %v3249 = vpop.f32.mrf.mxu0
      %v3250 = vadd.f32 0.0, %v3249
      %v3251 = vpop.f32.mrf.mxu0
      %3252 = vmatprep.mubr.bf16.mxu0 0
      %3253 = vmatmul.mubr.bf16.gmra.mxu0 %v1313
      %v3254 = vpop.f32.mrf.mxu0
      %v3255 = vadd.f32 0.0, %v3254
      %v3256 = vpop.f32.mrf.mxu0
      %v3257 = vpop.f32.mrf.mxu0
      %v3258 = vadd.f32 0.0, %v3257
      %v3259 = vpop.f32.mrf.mxu0
      %3260 = vmatprep.mubr.bf16.mxu0 0
      %3261 = vmatmul.mubr.bf16.gmra.mxu0 %v1316
      %v3262 = vpop.f32.mrf.mxu0
      %v3263 = vadd.f32 0.0, %v3262
      %v3264 = vpop.f32.mrf.mxu0
      %v3265 = vpop.f32.mrf.mxu0
      %v3266 = vadd.f32 0.0, %v3265
      %v3267 = vpop.f32.mrf.mxu0
      %3268 = vmatprep.mubr.bf16.mxu0 0
      %3269 = vmatmul.mubr.bf16.gmra.mxu0 %v3129
      %v3270 = vpop.f32.mrf.mxu0
      %v3271 = vadd.f32 0.0, %v3270
      %v3272 = vpop.f32.mrf.mxu0
      %v3273 = vpop.f32.mrf.mxu0
      %v3274 = vadd.f32 0.0, %v3273
      %v3275 = vpop.f32.mrf.mxu0
      %3276 = vmatprep.mubr.bf16.mxu0 0
      %3277 = vmatmul.mubr.bf16.gmra.mxu0 %v3132
      %v3278 = vpop.f32.mrf.mxu0
      %v3279 = vadd.f32 0.0, %v3278
      %v3280 = vpop.f32.mrf.mxu0
      %v3281 = vpop.f32.mrf.mxu0
      %v3282 = vadd.f32 0.0, %v3281
      %v3283 = vpop.f32.mrf.mxu0
      %3284 = vmatprep.mubr.bf16.mxu0 0
      %3285 = vmatmul.mubr.bf16.gmra.mxu0 %v3135
      %v3286 = vpop.f32.mrf.mxu0
      %v3287 = vadd.f32 0.0, %v3286
      %v3288 = vpop.f32.mrf.mxu0
      %v3289 = vpop.f32.mrf.mxu0
      %v3290 = vadd.f32 0.0, %v3289
      %v3291 = vpop.f32.mrf.mxu0
      %3292 = vdwg.mxu0
      %v3293 = vadd.f32 %v3051, %v3175
      %v3294 = vadd.f32 %v3052, %v3178
      %v3295 = vadd.f32 %v3053, %v3183
      %v3296 = vadd.f32 %v3054, %v3186
      %v3297 = vadd.f32 %v3055, %v3191
      %v3298 = vadd.f32 %v3056, %v3194
      %v3299 = vadd.f32 %v3057, %v3199
      %v3300 = vadd.f32 %v3058, %v3202
      %v3301 = vadd.f32 %v3059, %v3207
      %v3302 = vadd.f32 %v3060, %v3210
      %v3303 = vadd.f32 %v3061, %v3215
      %v3304 = vadd.f32 %v3062, %v3218
      %v3305 = vadd.f32 %v3063, %v3223
      %v3306 = vadd.f32 %v3064, %v3226
      %v3307 = vadd.f32 %v3065, %v3231
      %v3308 = vadd.f32 %v3066, %v3234
      %v3309 = vadd.f32 %v3067, %v3239
      %v3310 = vadd.f32 %v3068, %v3242
      %v3311 = vadd.f32 %v3069, %v3247
      %v3312 = vadd.f32 %v3070, %v3250
      %v3313 = vadd.f32 %v3071, %v3255
      %v3314 = vadd.f32 %v3072, %v3258
      %v3315 = vadd.f32 %v3073, %v3263
      %v3316 = vadd.f32 %v3074, %v3266
      %v3317 = vadd.f32 %v3075, %v3271
      %v3318 = vadd.f32 %v3076, %v3274
      %v3319 = vadd.f32 %v3077, %v3279
      %v3320 = vadd.f32 %v3078, %v3282
      %v3321 = vadd.f32 %v3079, %v3287
      %v3322 = vadd.f32 %v3080, %v3290
      %v3323 = vrot.slane %v3082, 5
      %v3324 = vrot.slane %v3323, 4
      %v3325 = vrot.slane %v3083, 5
      %v3326 = vsel %vm1693, %v3324, %v3325
      %v3327 = vrot.slane %v3325, 4
      %v3328 = vrot.slane %v3084, 5
      %v3329 = vsel %vm1693, %v3327, %v3328
      %v3330 = vrot.slane %v3328, 4
      %v3331 = vrot.slane %v3085, 5
      %v3332 = vsel %vm1693, %v3330, %v3331
      %s3333 = scalar_lea.vmem %s2, 32
      %v3334 = vld [vmem:[%s3333] sm:$0xf]
      %v3335 = vunpack.c.l.b16 %v3326
      %v3336 = vunpack.c.l.b16 %v3329
      %v3337 = vunpack.c.l.b16 %v3332
      %v3338 = vpack.c.b16 %v2628, %v2627
      %v3339 = vpack.c.b16 %v3335, %v2629
      %v3340 = vpack.c.b16 %v3337, %v3336
      %v3342 = vsel %vm1272, %v3338, 0
      %v3345 = vsel %vm1272, %v3339, 0
      %v3348 = vsel %vm1272, %v3340, 0
      %v3351 = vsel %vm1318, %v3334, 0
      %3353 = vmatprep.subr.bf16.mxu0 0
      %3354 = vmatpush1.bf16.msra.mxu0 0
      %3355 = vmatprep.subr.bf16.mxu0 0
      %3356 = vmatpush1.bf16.msra.mxu0 0
      %3357 = vmatprep.subr.bf16.mxu0 0
      %3358 = vmatpush1.bf16.msra.mxu0 0
      %3359 = vmatprep.subr.bf16.mxu0 0
      %3360 = vmatpush1.bf16.msra.mxu0 0
      %3361 = vmatprep.subr.bf16.mxu0 0
      %3362 = vmatpush1.bf16.msra.mxu0 0
      %3363 = vmatprep.subr.bf16.mxu0 0
      %3364 = vmatpush1.bf16.msra.mxu0 0
      %3365 = vmatprep.subr.bf16.mxu0 0
      %3366 = vmatpush1.bf16.msra.mxu0 0
      %3367 = vmatprep.subr.bf16.mxu0 0
      %3368 = vmatpush1.bf16.msra.mxu0 %v3351
      %3369 = vmatprep.subr.bf16.mxu0 0
      %3370 = vmatpush2.bf16.msra.mxu0 0
      %3371 = vmatprep.subr.bf16.mxu0 0
      %3372 = vmatpush2.bf16.msra.mxu0 0
      %3373 = vmatprep.subr.bf16.mxu0 0
      %3374 = vmatpush2.bf16.msra.mxu0 0
      %3375 = vmatprep.subr.bf16.mxu0 0
      %3376 = vmatpush2.bf16.msra.mxu0 0
      %3377 = vmatprep.subr.bf16.mxu0 0
      %3378 = vmatpush2.bf16.msra.mxu0 0
      %3379 = vmatprep.subr.bf16.mxu0 0
      %3380 = vmatpush2.bf16.msra.mxu0 0
      %3381 = vmatprep.subr.bf16.mxu0 0
      %3382 = vmatpush2.bf16.msra.mxu0 0
      %3383 = vmatprep.subr.bf16.mxu0 0
      %3384 = vmatpush2.bf16.msra.mxu0 0
      %3385 = vmatprep.mubr.bf16.mxu0 0
      %3386 = vmatmul.mubr.bf16.gmra.mxu0 %v1851
      %v3387 = vpop.f32.mrf.mxu0
      %v3388 = vadd.f32 0.0, %v3387
      %v3389 = vpop.f32.mrf.mxu0
      %v3390 = vpop.f32.mrf.mxu0
      %v3391 = vadd.f32 0.0, %v3390
      %v3392 = vpop.f32.mrf.mxu0
      %3393 = vmatprep.mubr.bf16.mxu0 0
      %3394 = vmatmul.mubr.bf16.gmra.mxu0 %v1854
      %v3395 = vpop.f32.mrf.mxu0
      %v3396 = vadd.f32 0.0, %v3395
      %v3397 = vpop.f32.mrf.mxu0
      %v3398 = vpop.f32.mrf.mxu0
      %v3399 = vadd.f32 0.0, %v3398
      %v3400 = vpop.f32.mrf.mxu0
      %3401 = vmatprep.mubr.bf16.mxu0 0
      %3402 = vmatmul.mubr.bf16.gmra.mxu0 %v1857
      %v3403 = vpop.f32.mrf.mxu0
      %v3404 = vadd.f32 0.0, %v3403
      %v3405 = vpop.f32.mrf.mxu0
      %v3406 = vpop.f32.mrf.mxu0
      %v3407 = vadd.f32 0.0, %v3406
      %v3408 = vpop.f32.mrf.mxu0
      %3409 = vmatprep.mubr.bf16.mxu0 0
      %3410 = vmatmul.mubr.bf16.gmra.mxu0 %v1860
      %v3411 = vpop.f32.mrf.mxu0
      %v3412 = vadd.f32 0.0, %v3411
      %v3413 = vpop.f32.mrf.mxu0
      %v3414 = vpop.f32.mrf.mxu0
      %v3415 = vadd.f32 0.0, %v3414
      %v3416 = vpop.f32.mrf.mxu0
      %3417 = vmatprep.mubr.bf16.mxu0 0
      %3418 = vmatmul.mubr.bf16.gmra.mxu0 %v1863
      %v3419 = vpop.f32.mrf.mxu0
      %v3420 = vadd.f32 0.0, %v3419
      %v3421 = vpop.f32.mrf.mxu0
      %v3422 = vpop.f32.mrf.mxu0
      %v3423 = vadd.f32 0.0, %v3422
      %v3424 = vpop.f32.mrf.mxu0
      %3425 = vmatprep.mubr.bf16.mxu0 0
      %3426 = vmatmul.mubr.bf16.gmra.mxu0 %v1866
      %v3427 = vpop.f32.mrf.mxu0
      %v3428 = vadd.f32 0.0, %v3427
      %v3429 = vpop.f32.mrf.mxu0
      %v3430 = vpop.f32.mrf.mxu0
      %v3431 = vadd.f32 0.0, %v3430
      %v3432 = vpop.f32.mrf.mxu0
      %3433 = vmatprep.mubr.bf16.mxu0 0
      %3434 = vmatmul.mubr.bf16.gmra.mxu0 %v1869
      %v3435 = vpop.f32.mrf.mxu0
      %v3436 = vadd.f32 0.0, %v3435
      %v3437 = vpop.f32.mrf.mxu0
      %v3438 = vpop.f32.mrf.mxu0
      %v3439 = vadd.f32 0.0, %v3438
      %v3440 = vpop.f32.mrf.mxu0
      %3441 = vmatprep.mubr.bf16.mxu0 0
      %3442 = vmatmul.mubr.bf16.gmra.mxu0 %v1872
      %v3443 = vpop.f32.mrf.mxu0
      %v3444 = vadd.f32 0.0, %v3443
      %v3445 = vpop.f32.mrf.mxu0
      %v3446 = vpop.f32.mrf.mxu0
      %v3447 = vadd.f32 0.0, %v3446
      %v3448 = vpop.f32.mrf.mxu0
      %3449 = vmatprep.mubr.bf16.mxu0 0
      %3450 = vmatmul.mubr.bf16.gmra.mxu0 %v1875
      %v3451 = vpop.f32.mrf.mxu0
      %v3452 = vadd.f32 0.0, %v3451
      %v3453 = vpop.f32.mrf.mxu0
      %v3454 = vpop.f32.mrf.mxu0
      %v3455 = vadd.f32 0.0, %v3454
      %v3456 = vpop.f32.mrf.mxu0
      %3457 = vmatprep.mubr.bf16.mxu0 0
      %3458 = vmatmul.mubr.bf16.gmra.mxu0 %v1878
      %v3459 = vpop.f32.mrf.mxu0
      %v3460 = vadd.f32 0.0, %v3459
      %v3461 = vpop.f32.mrf.mxu0
      %v3462 = vpop.f32.mrf.mxu0
      %v3463 = vadd.f32 0.0, %v3462
      %v3464 = vpop.f32.mrf.mxu0
      %3465 = vmatprep.mubr.bf16.mxu0 0
      %3466 = vmatmul.mubr.bf16.gmra.mxu0 %v1881
      %v3467 = vpop.f32.mrf.mxu0
      %v3468 = vadd.f32 0.0, %v3467
      %v3469 = vpop.f32.mrf.mxu0
      %v3470 = vpop.f32.mrf.mxu0
      %v3471 = vadd.f32 0.0, %v3470
      %v3472 = vpop.f32.mrf.mxu0
      %3473 = vmatprep.mubr.bf16.mxu0 0
      %3474 = vmatmul.mubr.bf16.gmra.mxu0 %v1884
      %v3475 = vpop.f32.mrf.mxu0
      %v3476 = vadd.f32 0.0, %v3475
      %v3477 = vpop.f32.mrf.mxu0
      %v3478 = vpop.f32.mrf.mxu0
      %v3479 = vadd.f32 0.0, %v3478
      %v3480 = vpop.f32.mrf.mxu0
      %3481 = vmatprep.mubr.bf16.mxu0 0
      %3482 = vmatmul.mubr.bf16.gmra.mxu0 %v3342
      %v3483 = vpop.f32.mrf.mxu0
      %v3484 = vadd.f32 0.0, %v3483
      %v3485 = vpop.f32.mrf.mxu0
      %v3486 = vpop.f32.mrf.mxu0
      %v3487 = vadd.f32 0.0, %v3486
      %v3488 = vpop.f32.mrf.mxu0
      %3489 = vmatprep.mubr.bf16.mxu0 0
      %3490 = vmatmul.mubr.bf16.gmra.mxu0 %v3345
      %v3491 = vpop.f32.mrf.mxu0
      %v3492 = vadd.f32 0.0, %v3491
      %v3493 = vpop.f32.mrf.mxu0
      %v3494 = vpop.f32.mrf.mxu0
      %v3495 = vadd.f32 0.0, %v3494
      %v3496 = vpop.f32.mrf.mxu0
      %3497 = vmatprep.mubr.bf16.mxu0 0
      %3498 = vmatmul.mubr.bf16.gmra.mxu0 %v3348
      %v3499 = vpop.f32.mrf.mxu0
      %v3500 = vadd.f32 0.0, %v3499
      %v3501 = vpop.f32.mrf.mxu0
      %v3502 = vpop.f32.mrf.mxu0
      %v3503 = vadd.f32 0.0, %v3502
      %v3504 = vpop.f32.mrf.mxu0
      %3505 = vdwg.mxu0
      %v3506 = vadd.f32 %v3293, %v3388
      %v3507 = vadd.f32 %v3294, %v3391
      %v3508 = vadd.f32 %v3295, %v3396
      %v3509 = vadd.f32 %v3296, %v3399
      %v3510 = vadd.f32 %v3297, %v3404
      %v3511 = vadd.f32 %v3298, %v3407
      %v3512 = vadd.f32 %v3299, %v3412
      %v3513 = vadd.f32 %v3300, %v3415
      %v3514 = vadd.f32 %v3301, %v3420
      %v3515 = vadd.f32 %v3302, %v3423
      %v3516 = vadd.f32 %v3303, %v3428
      %v3517 = vadd.f32 %v3304, %v3431
      %v3518 = vadd.f32 %v3305, %v3436
      %v3519 = vadd.f32 %v3306, %v3439
      %v3520 = vadd.f32 %v3307, %v3444
      %v3521 = vadd.f32 %v3308, %v3447
      %v3522 = vadd.f32 %v3309, %v3452
      %v3523 = vadd.f32 %v3310, %v3455
      %v3524 = vadd.f32 %v3311, %v3460
      %v3525 = vadd.f32 %v3312, %v3463
      %v3526 = vadd.f32 %v3313, %v3468
      %v3527 = vadd.f32 %v3314, %v3471
      %v3528 = vadd.f32 %v3315, %v3476
      %v3529 = vadd.f32 %v3316, %v3479
      %v3530 = vadd.f32 %v3317, %v3484
      %v3531 = vadd.f32 %v3318, %v3487
      %v3532 = vadd.f32 %v3319, %v3492
      %v3533 = vadd.f32 %v3320, %v3495
      %v3534 = vadd.f32 %v3321, %v3500
      %v3535 = vadd.f32 %v3322, %v3503
      %v3536 = vld [vmem:[%s3] sm:$0x1]
      %v3538 = vlaneseq
      %v3539 = vshrl.u32 %v3538, 7
      %v3540 = vsub.s32 0, %v3539
      %v3541 = vrot.slane %v3536, %v3540
      %v3543 = vadd.f32 %v3506, %v3541
      %v3544 = vadd.f32 %v3507, %v3541
      %v3545 = vadd.f32 %v3508, %v3541
      %v3546 = vadd.f32 %v3509, %v3541
      %v3547 = vadd.f32 %v3510, %v3541
      %v3548 = vadd.f32 %v3511, %v3541
      %v3549 = vadd.f32 %v3512, %v3541
      %v3550 = vadd.f32 %v3513, %v3541
      %v3551 = vadd.f32 %v3514, %v3541
      %v3552 = vadd.f32 %v3515, %v3541
      %v3553 = vadd.f32 %v3516, %v3541
      %v3554 = vadd.f32 %v3517, %v3541
      %v3555 = vadd.f32 %v3518, %v3541
      %v3556 = vadd.f32 %v3519, %v3541
      %v3557 = vadd.f32 %v3520, %v3541
      %v3558 = vadd.f32 %v3521, %v3541
      %v3559 = vadd.f32 %v3522, %v3541
      %v3560 = vadd.f32 %v3523, %v3541
      %v3561 = vadd.f32 %v3524, %v3541
      %v3562 = vadd.f32 %v3525, %v3541
      %v3563 = vadd.f32 %v3526, %v3541
      %v3564 = vadd.f32 %v3527, %v3541
      %v3565 = vadd.f32 %v3528, %v3541
      %v3566 = vadd.f32 %v3529, %v3541
      %v3567 = vadd.f32 %v3530, %v3541
      %v3568 = vadd.f32 %v3531, %v3541
      %v3569 = vadd.f32 %v3532, %v3541
      %v3570 = vadd.f32 %v3533, %v3541
      %v3571 = vadd.f32 %v3534, %v3541
      %v3572 = vadd.f32 %v3535, %v3541
      %v3573 = vmax.f32 %v3543, 0.0
      %v3574 = vmax.f32 %v3544, 0.0
      %v3575 = vmax.f32 %v3545, 0.0
      %v3576 = vmax.f32 %v3546, 0.0
      %v3577 = vmax.f32 %v3547, 0.0
      %v3578 = vmax.f32 %v3548, 0.0
      %v3579 = vmax.f32 %v3549, 0.0
      %v3580 = vmax.f32 %v3550, 0.0
      %v3581 = vmax.f32 %v3551, 0.0
      %v3582 = vmax.f32 %v3552, 0.0
      %v3583 = vmax.f32 %v3553, 0.0
      %v3584 = vmax.f32 %v3554, 0.0
      %v3585 = vmax.f32 %v3555, 0.0
      %v3586 = vmax.f32 %v3556, 0.0
      %v3587 = vmax.f32 %v3557, 0.0
      %v3588 = vmax.f32 %v3558, 0.0
      %v3589 = vmax.f32 %v3559, 0.0
      %v3590 = vmax.f32 %v3560, 0.0
      %v3591 = vmax.f32 %v3561, 0.0
      %v3592 = vmax.f32 %v3562, 0.0
      %v3593 = vmax.f32 %v3563, 0.0
      %v3594 = vmax.f32 %v3564, 0.0
      %v3595 = vmax.f32 %v3565, 0.0
      %v3596 = vmax.f32 %v3566, 0.0
      %v3597 = vmax.f32 %v3567, 0.0
      %v3598 = vmax.f32 %v3568, 0.0
      %v3599 = vmax.f32 %v3569, 0.0
      %v3600 = vmax.f32 %v3570, 0.0
      %v3601 = vmax.f32 %v3571, 0.0
      %v3602 = vmax.f32 %v3572, 0.0
      %v3603 = vlaneseq
      %v3604 = vshrl.u32 %v3603, 7
      %v3605 = vadd.s32 %v3604, 8
      %v3606 = vadd.s32 %v3604, 16
      %vm3607 = vcmp.eq.s32.totalorder %v3604, 0
      %vm3608 = vcmp.eq.s32.totalorder %v3605, 0
      %vm3609 = vcmp.eq.s32.totalorder %v3606, 0
      %vm3610 = vcmp.ge.s32.totalorder %v3604, 17
      %vm3611 = vcmp.ge.s32.totalorder %v3605, 17
      %vm3612 = vcmp.ge.s32.totalorder %v3606, 17
      %vm3613 = vmor %vm3607, %vm3610
      %vm3614 = vmor %vm3608, %vm3611
      %vm3615 = vmor %vm3609, %vm3612
      %p3616 = scmp.eq.s32.totalorder %s22, 0
      %s3617 = scalar_select %p3616, 1, 0
      %v3618 = vstv %s3617
      %vm3619 = vcmp.eq.s32.totalorder %v3618, 1
      %vm3620 = vmor %vm3613, %vm3619
      %vm3621 = vmor %vm3614, %vm3619
      %vm3622 = vmor %vm3615, %vm3619
      %vm3623 = vmor %vm3613, 0
      %vm3624 = vmor %vm3614, 0
      %vm3625 = vmor %vm3615, 0
      %p3626 = scmp.eq.s32.totalorder %s22, 1
      %s3627 = scalar_select %p3626, 1, 0
      %v3628 = vstv %s3627
      %vm3629 = vcmp.eq.s32.totalorder %v3628, 1
      %vm3630 = vmor %vm3620, 0
      %vm3631 = vmor %vm3621, 0
      %vm3632 = vmor %vm3622, 0
      %vm3633 = vmor %vm3623, 0
      %vm3634 = vmor %vm3624, 0
      %vm3635 = vmor %vm3625, 0
      %vm3636 = vmor %vm3623, %vm3629
      %vm3637 = vmor %vm3624, %vm3629
      %vm3638 = vmor %vm3625, %vm3629
      %v3639 = vsel %vm3630, 0.0, %v3573
      %v3640 = vsel %vm3631, 0.0, %v3574
      %v3641 = vsel %vm3632, 0.0, %v3575
      %v3642 = vsel %vm3633, 0.0, %v3576
      %v3643 = vsel %vm3634, 0.0, %v3577
      %v3644 = vsel %vm3635, 0.0, %v3578
      %v3645 = vsel %vm3633, 0.0, %v3579
      %v3646 = vsel %vm3634, 0.0, %v3580
      %v3647 = vsel %vm3635, 0.0, %v3581
      %v3648 = vsel %vm3633, 0.0, %v3582
      %v3649 = vsel %vm3634, 0.0, %v3583
      %v3650 = vsel %vm3635, 0.0, %v3584
      %v3651 = vsel %vm3633, 0.0, %v3585
      %v3652 = vsel %vm3634, 0.0, %v3586
      %v3653 = vsel %vm3635, 0.0, %v3587
      %v3654 = vsel %vm3633, 0.0, %v3588
      %v3655 = vsel %vm3634, 0.0, %v3589
      %v3656 = vsel %vm3635, 0.0, %v3590
      %v3657 = vsel %vm3633, 0.0, %v3591
      %v3658 = vsel %vm3634, 0.0, %v3592
      %v3659 = vsel %vm3635, 0.0, %v3593
      %v3660 = vsel %vm3633, 0.0, %v3594
      %v3661 = vsel %vm3634, 0.0, %v3595
      %v3662 = vsel %vm3635, 0.0, %v3596
      %v3663 = vsel %vm3633, 0.0, %v3597
      %v3664 = vsel %vm3634, 0.0, %v3598
      %v3665 = vsel %vm3635, 0.0, %v3599
      %v3666 = vsel %vm3636, 0.0, %v3600
      %v3667 = vsel %vm3637, 0.0, %v3601
      %v3668 = vsel %vm3638, 0.0, %v3602
      %v3669 = vpack.c.bf16 %v3640, %v3639
      %v3670 = vpack.c.bf16 %v3641, %v3641
      %v3671 = vpack.c.bf16 %v3643, %v3642
      %v3672 = vpack.c.bf16 %v3644, %v3644
      %v3673 = vpack.c.bf16 %v3646, %v3645
      %v3674 = vpack.c.bf16 %v3647, %v3647
      %v3675 = vpack.c.bf16 %v3649, %v3648
      %v3676 = vpack.c.bf16 %v3650, %v3650
      %v3677 = vpack.c.bf16 %v3652, %v3651
      %v3678 = vpack.c.bf16 %v3653, %v3653
      %v3679 = vpack.c.bf16 %v3655, %v3654
      %v3680 = vpack.c.bf16 %v3656, %v3656
      %v3681 = vpack.c.bf16 %v3658, %v3657
      %v3682 = vpack.c.bf16 %v3659, %v3659
      %v3683 = vpack.c.bf16 %v3661, %v3660
      %v3684 = vpack.c.bf16 %v3662, %v3662
      %v3685 = vpack.c.bf16 %v3664, %v3663
      %v3686 = vpack.c.bf16 %v3665, %v3665
      %v3687 = vpack.c.bf16 %v3667, %v3666
      %v3688 = vpack.c.bf16 %v3668, %v3668
      %v3689 = vld [vmem:[%s4] sm:$0x3]
      %vm3690 = vsmask.f32 7424
      %v3692 = vshrl.u32 %v3669, 16
      %v3694 = vshll.u32 %v3669, 16
      %v3696 = vrot.slane %v3694, 1
      %v3697 = vor.u32 %v3692, %v3696
      %v3699 = vshll.u32 %v3670, 16
      %v3701 = vrot.slane %v3699, 1
      %v3702 = vsel %vm3690, %v3697, %v3701
      %v3704 = vshrl.u32 %v3671, 16
      %v3706 = vshll.u32 %v3671, 16
      %v3708 = vrot.slane %v3706, 1
      %v3709 = vor.u32 %v3704, %v3708
      %v3711 = vshll.u32 %v3672, 16
      %v3713 = vrot.slane %v3711, 1
      %v3714 = vsel %vm3690, %v3709, %v3713
      %v3716 = vshrl.u32 %v3673, 16
      %v3718 = vshll.u32 %v3673, 16
      %v3720 = vrot.slane %v3718, 1
      %v3721 = vor.u32 %v3716, %v3720
      %v3723 = vshll.u32 %v3674, 16
      %v3725 = vrot.slane %v3723, 1
      %v3726 = vsel %vm3690, %v3721, %v3725
      %v3728 = vshrl.u32 %v3675, 16
      %v3730 = vshll.u32 %v3675, 16
      %v3732 = vrot.slane %v3730, 1
      %v3733 = vor.u32 %v3728, %v3732
      %v3735 = vshll.u32 %v3676, 16
      %v3737 = vrot.slane %v3735, 1
      %v3738 = vsel %vm3690, %v3733, %v3737
      %v3740 = vshrl.u32 %v3677, 16
      %v3742 = vshll.u32 %v3677, 16
      %v3744 = vrot.slane %v3742, 1
      %v3745 = vor.u32 %v3740, %v3744
      %v3747 = vshll.u32 %v3678, 16
      %v3749 = vrot.slane %v3747, 1
      %v3750 = vsel %vm3690, %v3745, %v3749
      %v3752 = vshrl.u32 %v3679, 16
      %v3754 = vshll.u32 %v3679, 16
      %v3756 = vrot.slane %v3754, 1
      %v3757 = vor.u32 %v3752, %v3756
      %v3759 = vshll.u32 %v3680, 16
      %v3761 = vrot.slane %v3759, 1
      %v3762 = vsel %vm3690, %v3757, %v3761
      %v3764 = vshrl.u32 %v3681, 16
      %v3766 = vshll.u32 %v3681, 16
      %v3768 = vrot.slane %v3766, 1
      %v3769 = vor.u32 %v3764, %v3768
      %v3771 = vshll.u32 %v3682, 16
      %v3773 = vrot.slane %v3771, 1
      %v3774 = vsel %vm3690, %v3769, %v3773
      %v3776 = vshrl.u32 %v3683, 16
      %v3778 = vshll.u32 %v3683, 16
      %v3780 = vrot.slane %v3778, 1
      %v3781 = vor.u32 %v3776, %v3780
      %v3783 = vshll.u32 %v3684, 16
      %v3785 = vrot.slane %v3783, 1
      %v3786 = vsel %vm3690, %v3781, %v3785
      %s3787 = scalar_lea.vmem %s4, 2
      %v3788 = vld [vmem:[%s3787] sm:$0x3]
      %v3790 = vsel %vm708, %v3702, 0
      %v3793 = vsel %vm708, %v3714, 0
      %v3796 = vsel %vm708, %v3726, 0
      %v3799 = vsel %vm708, %v3738, 0
      %v3802 = vsel %vm708, %v3750, 0
      %v3805 = vsel %vm708, %v3762, 0
      %v3808 = vsel %vm708, %v3774, 0
      %v3811 = vsel %vm708, %v3786, 0
      %vm3813 = vcmask 1041408
      %v3815 = vsel %vm3813, %v3788, 0
      %3817 = vmatprep.subr.bf16.mxu0 0
      %3818 = vmatpush1.bf16.msra.mxu0 0
      %3819 = vmatprep.subr.bf16.mxu0 0
      %3820 = vmatpush1.bf16.msra.mxu0 0
      %3821 = vmatprep.subr.bf16.mxu0 0
      %3822 = vmatpush1.bf16.msra.mxu0 0
      %3823 = vmatprep.subr.bf16.mxu0 0
      %3824 = vmatpush1.bf16.msra.mxu0 0
      %3825 = vmatprep.subr.bf16.mxu0 0
      %3826 = vmatpush1.bf16.msra.mxu0 0
      %3827 = vmatprep.subr.bf16.mxu0 0
      %3828 = vmatpush1.bf16.msra.mxu0 0
      %3829 = vmatprep.subr.bf16.mxu0 0
      %3830 = vmatpush1.bf16.msra.mxu0 0
      %3831 = vmatprep.subr.bf16.mxu0 0
      %3832 = vmatpush1.bf16.msra.mxu0 %v3815
      %3833 = vmatprep.subr.bf16.mxu0 0
      %3834 = vmatpush2.bf16.msra.mxu0 0
      %3835 = vmatprep.subr.bf16.mxu0 0
      %3836 = vmatpush2.bf16.msra.mxu0 0
      %3837 = vmatprep.subr.bf16.mxu0 0
      %3838 = vmatpush2.bf16.msra.mxu0 0
      %3839 = vmatprep.subr.bf16.mxu0 0
      %3840 = vmatpush2.bf16.msra.mxu0 0
      %3841 = vmatprep.subr.bf16.mxu0 0
      %3842 = vmatpush2.bf16.msra.mxu0 0
      %3843 = vmatprep.subr.bf16.mxu0 0
      %3844 = vmatpush2.bf16.msra.mxu0 0
      %3845 = vmatprep.subr.bf16.mxu0 0
      %3846 = vmatpush2.bf16.msra.mxu0 0
      %3847 = vmatprep.subr.bf16.mxu0 0
      %3848 = vmatpush2.bf16.msra.mxu0 0
      %3849 = vmatprep.mubr.bf16.mxu0 0
      %3850 = vmatmul.mubr.bf16.gmra.mxu0 %v3790
      %v3851 = vpop.f32.mrf.mxu0
      %v3852 = vadd.f32 0.0, %v3851
      %v3853 = vpop.f32.mrf.mxu0
      %v3854 = vpop.f32.mrf.mxu0
      %v3855 = vadd.f32 0.0, %v3854
      %v3856 = vpop.f32.mrf.mxu0
      %3857 = vmatprep.mubr.bf16.mxu0 0
      %3858 = vmatmul.mubr.bf16.gmra.mxu0 %v3793
      %v3859 = vpop.f32.mrf.mxu0
      %v3860 = vadd.f32 0.0, %v3859
      %v3861 = vpop.f32.mrf.mxu0
      %v3862 = vpop.f32.mrf.mxu0
      %v3863 = vadd.f32 0.0, %v3862
      %v3864 = vpop.f32.mrf.mxu0
      %3865 = vmatprep.mubr.bf16.mxu0 0
      %3866 = vmatmul.mubr.bf16.gmra.mxu0 %v3796
      %v3867 = vpop.f32.mrf.mxu0
      %v3868 = vadd.f32 0.0, %v3867
      %v3869 = vpop.f32.mrf.mxu0
      %v3870 = vpop.f32.mrf.mxu0
      %v3871 = vadd.f32 0.0, %v3870
      %v3872 = vpop.f32.mrf.mxu0
      %3873 = vmatprep.mubr.bf16.mxu0 0
      %3874 = vmatmul.mubr.bf16.gmra.mxu0 %v3799
      %v3875 = vpop.f32.mrf.mxu0
      %v3876 = vadd.f32 0.0, %v3875
      %v3877 = vpop.f32.mrf.mxu0
      %v3878 = vpop.f32.mrf.mxu0
      %v3879 = vadd.f32 0.0, %v3878
      %v3880 = vpop.f32.mrf.mxu0
      %3881 = vmatprep.mubr.bf16.mxu0 0
      %3882 = vmatmul.mubr.bf16.gmra.mxu0 %v3802
      %v3883 = vpop.f32.mrf.mxu0
      %v3884 = vadd.f32 0.0, %v3883
      %v3885 = vpop.f32.mrf.mxu0
      %v3886 = vpop.f32.mrf.mxu0
      %v3887 = vadd.f32 0.0, %v3886
      %v3888 = vpop.f32.mrf.mxu0
      %3889 = vmatprep.mubr.bf16.mxu0 0
      %3890 = vmatmul.mubr.bf16.gmra.mxu0 %v3805
      %v3891 = vpop.f32.mrf.mxu0
      %v3892 = vadd.f32 0.0, %v3891
      %v3893 = vpop.f32.mrf.mxu0
      %v3894 = vpop.f32.mrf.mxu0
      %v3895 = vadd.f32 0.0, %v3894
      %v3896 = vpop.f32.mrf.mxu0
      %3897 = vmatprep.mubr.bf16.mxu0 0
      %3898 = vmatmul.mubr.bf16.gmra.mxu0 %v3808
      %v3899 = vpop.f32.mrf.mxu0
      %v3900 = vadd.f32 0.0, %v3899
      %v3901 = vpop.f32.mrf.mxu0
      %v3902 = vpop.f32.mrf.mxu0
      %v3903 = vadd.f32 0.0, %v3902
      %v3904 = vpop.f32.mrf.mxu0
      %3905 = vmatprep.mubr.bf16.mxu0 0
      %3906 = vmatmul.mubr.bf16.gmra.mxu0 %v3811
      %v3907 = vpop.f32.mrf.mxu0
      %v3908 = vadd.f32 0.0, %v3907
      %v3909 = vpop.f32.mrf.mxu0
      %v3910 = vpop.f32.mrf.mxu0
      %v3911 = vadd.f32 0.0, %v3910
      %v3912 = vpop.f32.mrf.mxu0
      %3913 = vdwg.mxu0
      %v3914 = vsel %vm708, %v3669, 0
      %v3916 = vsel %vm708, %v3671, 0
      %v3918 = vsel %vm708, %v3673, 0
      %v3920 = vsel %vm708, %v3675, 0
      %v3922 = vsel %vm708, %v3677, 0
      %v3924 = vsel %vm708, %v3679, 0
      %v3926 = vsel %vm708, %v3681, 0
      %v3928 = vsel %vm708, %v3683, 0
      %v3931 = vsel %vm3813, %v3689, 0
      %3933 = vmatprep.subr.bf16.mxu0 0
      %3934 = vmatpush1.bf16.msra.mxu0 0
      %3935 = vmatprep.subr.bf16.mxu0 0
      %3936 = vmatpush1.bf16.msra.mxu0 0
      %3937 = vmatprep.subr.bf16.mxu0 0
      %3938 = vmatpush1.bf16.msra.mxu0 0
      %3939 = vmatprep.subr.bf16.mxu0 0
      %3940 = vmatpush1.bf16.msra.mxu0 0
      %3941 = vmatprep.subr.bf16.mxu0 0
      %3942 = vmatpush1.bf16.msra.mxu0 0
      %3943 = vmatprep.subr.bf16.mxu0 0
      %3944 = vmatpush1.bf16.msra.mxu0 0
      %3945 = vmatprep.subr.bf16.mxu0 0
      %3946 = vmatpush1.bf16.msra.mxu0 0
      %3947 = vmatprep.subr.bf16.mxu0 0
      %3948 = vmatpush1.bf16.msra.mxu0 %v3931
      %3949 = vmatprep.subr.bf16.mxu0 0
      %3950 = vmatpush2.bf16.msra.mxu0 0
      %3951 = vmatprep.subr.bf16.mxu0 0
      %3952 = vmatpush2.bf16.msra.mxu0 0
      %3953 = vmatprep.subr.bf16.mxu0 0
      %3954 = vmatpush2.bf16.msra.mxu0 0
      %3955 = vmatprep.subr.bf16.mxu0 0
      %3956 = vmatpush2.bf16.msra.mxu0 0
      %3957 = vmatprep.subr.bf16.mxu0 0
      %3958 = vmatpush2.bf16.msra.mxu0 0
      %3959 = vmatprep.subr.bf16.mxu0 0
      %3960 = vmatpush2.bf16.msra.mxu0 0
      %3961 = vmatprep.subr.bf16.mxu0 0
      %3962 = vmatpush2.bf16.msra.mxu0 0
      %3963 = vmatprep.subr.bf16.mxu0 0
      %3964 = vmatpush2.bf16.msra.mxu0 0
      %3965 = vmatprep.mubr.bf16.mxu0 0
      %3966 = vmatmul.mubr.bf16.gmra.mxu0 %v3914
      %v3967 = vpop.f32.mrf.mxu0
      %v3968 = vadd.f32 %v3852, %v3967
      %v3969 = vpop.f32.mrf.mxu0
      %v3970 = vpop.f32.mrf.mxu0
      %v3971 = vadd.f32 %v3855, %v3970
      %v3972 = vpop.f32.mrf.mxu0
      %3973 = vmatprep.mubr.bf16.mxu0 0
      %3974 = vmatmul.mubr.bf16.gmra.mxu0 %v3916
      %v3975 = vpop.f32.mrf.mxu0
      %v3976 = vadd.f32 %v3860, %v3975
      %v3977 = vpop.f32.mrf.mxu0
      %v3978 = vpop.f32.mrf.mxu0
      %v3979 = vadd.f32 %v3863, %v3978
      %v3980 = vpop.f32.mrf.mxu0
      %3981 = vmatprep.mubr.bf16.mxu0 0
      %3982 = vmatmul.mubr.bf16.gmra.mxu0 %v3918
      %v3983 = vpop.f32.mrf.mxu0
      %v3984 = vadd.f32 %v3868, %v3983
      %v3985 = vpop.f32.mrf.mxu0
      %v3986 = vpop.f32.mrf.mxu0
      %v3987 = vadd.f32 %v3871, %v3986
      %v3988 = vpop.f32.mrf.mxu0
      %3989 = vmatprep.mubr.bf16.mxu0 0
      %3990 = vmatmul.mubr.bf16.gmra.mxu0 %v3920
      %v3991 = vpop.f32.mrf.mxu0
      %v3992 = vadd.f32 %v3876, %v3991
      %v3993 = vpop.f32.mrf.mxu0
      %v3994 = vpop.f32.mrf.mxu0
      %v3995 = vadd.f32 %v3879, %v3994
      %v3996 = vpop.f32.mrf.mxu0
      %3997 = vmatprep.mubr.bf16.mxu0 0
      %3998 = vmatmul.mubr.bf16.gmra.mxu0 %v3922
      %v3999 = vpop.f32.mrf.mxu0
      %v4000 = vadd.f32 %v3884, %v3999
      %v4001 = vpop.f32.mrf.mxu0
      %v4002 = vpop.f32.mrf.mxu0
      %v4003 = vadd.f32 %v3887, %v4002
      %v4004 = vpop.f32.mrf.mxu0
      %4005 = vmatprep.mubr.bf16.mxu0 0
      %4006 = vmatmul.mubr.bf16.gmra.mxu0 %v3924
      %v4007 = vpop.f32.mrf.mxu0
      %v4008 = vadd.f32 %v3892, %v4007
      %v4009 = vpop.f32.mrf.mxu0
      %v4010 = vpop.f32.mrf.mxu0
      %v4011 = vadd.f32 %v3895, %v4010
      %v4012 = vpop.f32.mrf.mxu0
      %4013 = vmatprep.mubr.bf16.mxu0 0
      %4014 = vmatmul.mubr.bf16.gmra.mxu0 %v3926
      %v4015 = vpop.f32.mrf.mxu0
      %v4016 = vadd.f32 %v3900, %v4015
      %v4017 = vpop.f32.mrf.mxu0
      %v4018 = vpop.f32.mrf.mxu0
      %v4019 = vadd.f32 %v3903, %v4018
      %v4020 = vpop.f32.mrf.mxu0
      %4021 = vmatprep.mubr.bf16.mxu0 0
      %4022 = vmatmul.mubr.bf16.gmra.mxu0 %v3928
      %v4023 = vpop.f32.mrf.mxu0
      %v4024 = vadd.f32 %v3908, %v4023
      %v4025 = vpop.f32.mrf.mxu0
      %v4026 = vpop.f32.mrf.mxu0
      %v4027 = vadd.f32 %v3911, %v4026
      %v4028 = vpop.f32.mrf.mxu0
      %4029 = vdwg.mxu0
      %vm4046 = vcmask 1046528
      %v4047 = vrot.slane %v3669, 1
      %v4048 = vrot.slane %v3670, 1
      %v4049 = vsel %vm4046, %v4047, %v4048
      %v4050 = vrot.slane %v3671, 1
      %v4051 = vrot.slane %v3672, 1
      %v4052 = vsel %vm4046, %v4050, %v4051
      %v4053 = vrot.slane %v3673, 1
      %v4054 = vrot.slane %v3674, 1
      %v4055 = vsel %vm4046, %v4053, %v4054
      %v4056 = vrot.slane %v3675, 1
      %v4057 = vrot.slane %v3676, 1
      %v4058 = vsel %vm4046, %v4056, %v4057
      %v4059 = vrot.slane %v3677, 1
      %v4060 = vrot.slane %v3678, 1
      %v4061 = vsel %vm4046, %v4059, %v4060
      %v4062 = vrot.slane %v3679, 1
      %v4063 = vrot.slane %v3680, 1
      %v4064 = vsel %vm4046, %v4062, %v4063
      %v4065 = vrot.slane %v3681, 1
      %v4066 = vrot.slane %v3682, 1
      %v4067 = vsel %vm4046, %v4065, %v4066
      %v4068 = vrot.slane %v3683, 1
      %v4069 = vrot.slane %v3684, 1
      %v4070 = vsel %vm4046, %v4068, %v4069
      %s4071 = scalar_lea.vmem %s4, 4
      %v4072 = vld [vmem:[%s4071] sm:$0x3]
      %v4074 = vsel %vm708, %v4049, 0
      %v4077 = vsel %vm708, %v4052, 0
      %v4080 = vsel %vm708, %v4055, 0
      %v4083 = vsel %vm708, %v4058, 0
      %v4086 = vsel %vm708, %v4061, 0
      %v4089 = vsel %vm708, %v4064, 0
      %v4092 = vsel %vm708, %v4067, 0
      %v4095 = vsel %vm708, %v4070, 0
      %v4098 = vsel %vm3813, %v4072, 0
      %4100 = vmatprep.subr.bf16.mxu0 0
      %4101 = vmatpush1.bf16.msra.mxu0 0
      %4102 = vmatprep.subr.bf16.mxu0 0
      %4103 = vmatpush1.bf16.msra.mxu0 0
      %4104 = vmatprep.subr.bf16.mxu0 0
      %4105 = vmatpush1.bf16.msra.mxu0 0
      %4106 = vmatprep.subr.bf16.mxu0 0
      %4107 = vmatpush1.bf16.msra.mxu0 0
      %4108 = vmatprep.subr.bf16.mxu0 0
      %4109 = vmatpush1.bf16.msra.mxu0 0
      %4110 = vmatprep.subr.bf16.mxu0 0
      %4111 = vmatpush1.bf16.msra.mxu0 0
      %4112 = vmatprep.subr.bf16.mxu0 0
      %4113 = vmatpush1.bf16.msra.mxu0 0
      %4114 = vmatprep.subr.bf16.mxu0 0
      %4115 = vmatpush1.bf16.msra.mxu0 %v4098
      %4116 = vmatprep.subr.bf16.mxu0 0
      %4117 = vmatpush2.bf16.msra.mxu0 0
      %4118 = vmatprep.subr.bf16.mxu0 0
      %4119 = vmatpush2.bf16.msra.mxu0 0
      %4120 = vmatprep.subr.bf16.mxu0 0
      %4121 = vmatpush2.bf16.msra.mxu0 0
      %4122 = vmatprep.subr.bf16.mxu0 0
      %4123 = vmatpush2.bf16.msra.mxu0 0
      %4124 = vmatprep.subr.bf16.mxu0 0
      %4125 = vmatpush2.bf16.msra.mxu0 0
      %4126 = vmatprep.subr.bf16.mxu0 0
      %4127 = vmatpush2.bf16.msra.mxu0 0
      %4128 = vmatprep.subr.bf16.mxu0 0
      %4129 = vmatpush2.bf16.msra.mxu0 0
      %4130 = vmatprep.subr.bf16.mxu0 0
      %4131 = vmatpush2.bf16.msra.mxu0 0
      %4132 = vmatprep.mubr.bf16.mxu0 0
      %4133 = vmatmul.mubr.bf16.gmra.mxu0 %v4074
      %v4134 = vpop.f32.mrf.mxu0
      %v4135 = vadd.f32 0.0, %v4134
      %v4136 = vpop.f32.mrf.mxu0
      %v4137 = vpop.f32.mrf.mxu0
      %v4138 = vadd.f32 0.0, %v4137
      %v4139 = vpop.f32.mrf.mxu0
      %4140 = vmatprep.mubr.bf16.mxu0 0
      %4141 = vmatmul.mubr.bf16.gmra.mxu0 %v4077
      %v4142 = vpop.f32.mrf.mxu0
      %v4143 = vadd.f32 0.0, %v4142
      %v4144 = vpop.f32.mrf.mxu0
      %v4145 = vpop.f32.mrf.mxu0
      %v4146 = vadd.f32 0.0, %v4145
      %v4147 = vpop.f32.mrf.mxu0
      %4148 = vmatprep.mubr.bf16.mxu0 0
      %4149 = vmatmul.mubr.bf16.gmra.mxu0 %v4080
      %v4150 = vpop.f32.mrf.mxu0
      %v4151 = vadd.f32 0.0, %v4150
      %v4152 = vpop.f32.mrf.mxu0
      %v4153 = vpop.f32.mrf.mxu0
      %v4154 = vadd.f32 0.0, %v4153
      %v4155 = vpop.f32.mrf.mxu0
      %4156 = vmatprep.mubr.bf16.mxu0 0
      %4157 = vmatmul.mubr.bf16.gmra.mxu0 %v4083
      %v4158 = vpop.f32.mrf.mxu0
      %v4159 = vadd.f32 0.0, %v4158
      %v4160 = vpop.f32.mrf.mxu0
      %v4161 = vpop.f32.mrf.mxu0
      %v4162 = vadd.f32 0.0, %v4161
      %v4163 = vpop.f32.mrf.mxu0
      %4164 = vmatprep.mubr.bf16.mxu0 0
      %4165 = vmatmul.mubr.bf16.gmra.mxu0 %v4086
      %v4166 = vpop.f32.mrf.mxu0
      %v4167 = vadd.f32 0.0, %v4166
      %v4168 = vpop.f32.mrf.mxu0
      %v4169 = vpop.f32.mrf.mxu0
      %v4170 = vadd.f32 0.0, %v4169
      %v4171 = vpop.f32.mrf.mxu0
      %4172 = vmatprep.mubr.bf16.mxu0 0
      %4173 = vmatmul.mubr.bf16.gmra.mxu0 %v4089
      %v4174 = vpop.f32.mrf.mxu0
      %v4175 = vadd.f32 0.0, %v4174
      %v4176 = vpop.f32.mrf.mxu0
      %v4177 = vpop.f32.mrf.mxu0
      %v4178 = vadd.f32 0.0, %v4177
      %v4179 = vpop.f32.mrf.mxu0
      %4180 = vmatprep.mubr.bf16.mxu0 0
      %4181 = vmatmul.mubr.bf16.gmra.mxu0 %v4092
      %v4182 = vpop.f32.mrf.mxu0
      %v4183 = vadd.f32 0.0, %v4182
      %v4184 = vpop.f32.mrf.mxu0
      %v4185 = vpop.f32.mrf.mxu0
      %v4186 = vadd.f32 0.0, %v4185
      %v4187 = vpop.f32.mrf.mxu0
      %4188 = vmatprep.mubr.bf16.mxu0 0
      %4189 = vmatmul.mubr.bf16.gmra.mxu0 %v4095
      %v4190 = vpop.f32.mrf.mxu0
      %v4191 = vadd.f32 0.0, %v4190
      %v4192 = vpop.f32.mrf.mxu0
      %v4193 = vpop.f32.mrf.mxu0
      %v4194 = vadd.f32 0.0, %v4193
      %v4195 = vpop.f32.mrf.mxu0
      %4196 = vdwg.mxu0
      %v4197 = vadd.f32 %v3968, %v4135
      %v4198 = vadd.f32 %v3971, %v4138
      %v4199 = vadd.f32 %v3976, %v4143
      %v4200 = vadd.f32 %v3979, %v4146
      %v4201 = vadd.f32 %v3984, %v4151
      %v4202 = vadd.f32 %v3987, %v4154
      %v4203 = vadd.f32 %v3992, %v4159
      %v4204 = vadd.f32 %v3995, %v4162
      %v4205 = vadd.f32 %v4000, %v4167
      %v4206 = vadd.f32 %v4003, %v4170
      %v4207 = vadd.f32 %v4008, %v4175
      %v4208 = vadd.f32 %v4011, %v4178
      %v4209 = vadd.f32 %v4016, %v4183
      %v4210 = vadd.f32 %v4019, %v4186
      %v4211 = vadd.f32 %v4024, %v4191
      %v4212 = vadd.f32 %v4027, %v4194
      %s4213 = scalar_lea.vmem %s4, 6
      %v4214 = vld [vmem:[%s4213] sm:$0x3]
      %v4216 = vsel %vm708, %v3685, 0
      %v4219 = vsel %vm3813, %v4214, 0
      %4221 = vmatprep.subr.bf16.mxu0 0
      %4222 = vmatpush1.bf16.msra.mxu0 0
      %4223 = vmatprep.subr.bf16.mxu0 0
      %4224 = vmatpush1.bf16.msra.mxu0 0
      %4225 = vmatprep.subr.bf16.mxu0 0
      %4226 = vmatpush1.bf16.msra.mxu0 0
      %4227 = vmatprep.subr.bf16.mxu0 0
      %4228 = vmatpush1.bf16.msra.mxu0 0
      %4229 = vmatprep.subr.bf16.mxu0 0
      %4230 = vmatpush1.bf16.msra.mxu0 0
      %4231 = vmatprep.subr.bf16.mxu0 0
      %4232 = vmatpush1.bf16.msra.mxu0 0
      %4233 = vmatprep.subr.bf16.mxu0 0
      %4234 = vmatpush1.bf16.msra.mxu0 0
      %4235 = vmatprep.subr.bf16.mxu0 0
      %4236 = vmatpush1.bf16.msra.mxu0 %v4219
      %4237 = vmatprep.subr.bf16.mxu0 0
      %4238 = vmatpush2.bf16.msra.mxu0 0
      %4239 = vmatprep.subr.bf16.mxu0 0
      %4240 = vmatpush2.bf16.msra.mxu0 0
      %4241 = vmatprep.subr.bf16.mxu0 0
      %4242 = vmatpush2.bf16.msra.mxu0 0
      %4243 = vmatprep.subr.bf16.mxu0 0
      %4244 = vmatpush2.bf16.msra.mxu0 0
      %4245 = vmatprep.subr.bf16.mxu0 0
      %4246 = vmatpush2.bf16.msra.mxu0 0
      %4247 = vmatprep.subr.bf16.mxu0 0
      %4248 = vmatpush2.bf16.msra.mxu0 0
      %4249 = vmatprep.subr.bf16.mxu0 0
      %4250 = vmatpush2.bf16.msra.mxu0 0
      %4251 = vmatprep.subr.bf16.mxu0 0
      %4252 = vmatpush2.bf16.msra.mxu0 0
      %4253 = vmatprep.mubr.bf16.mxu0 0
      %4254 = vmatmul.mubr.bf16.gmra.mxu0 %v3916
      %v4255 = vpop.f32.mrf.mxu0
      %v4256 = vadd.f32 0.0, %v4255
      %v4257 = vpop.f32.mrf.mxu0
      %v4258 = vpop.f32.mrf.mxu0
      %v4259 = vadd.f32 0.0, %v4258
      %v4260 = vpop.f32.mrf.mxu0
      %4261 = vmatprep.mubr.bf16.mxu0 0
      %4262 = vmatmul.mubr.bf16.gmra.mxu0 %v3918
      %v4263 = vpop.f32.mrf.mxu0
      %v4264 = vadd.f32 0.0, %v4263
      %v4265 = vpop.f32.mrf.mxu0
      %v4266 = vpop.f32.mrf.mxu0
      %v4267 = vadd.f32 0.0, %v4266
      %v4268 = vpop.f32.mrf.mxu0
      %4269 = vmatprep.mubr.bf16.mxu0 0
      %4270 = vmatmul.mubr.bf16.gmra.mxu0 %v3920
      %v4271 = vpop.f32.mrf.mxu0
      %v4272 = vadd.f32 0.0, %v4271
      %v4273 = vpop.f32.mrf.mxu0
      %v4274 = vpop.f32.mrf.mxu0
      %v4275 = vadd.f32 0.0, %v4274
      %v4276 = vpop.f32.mrf.mxu0
      %4277 = vmatprep.mubr.bf16.mxu0 0
      %4278 = vmatmul.mubr.bf16.gmra.mxu0 %v3922
      %v4279 = vpop.f32.mrf.mxu0
      %v4280 = vadd.f32 0.0, %v4279
      %v4281 = vpop.f32.mrf.mxu0
      %v4282 = vpop.f32.mrf.mxu0
      %v4283 = vadd.f32 0.0, %v4282
      %v4284 = vpop.f32.mrf.mxu0
      %4285 = vmatprep.mubr.bf16.mxu0 0
      %4286 = vmatmul.mubr.bf16.gmra.mxu0 %v3924
      %v4287 = vpop.f32.mrf.mxu0
      %v4288 = vadd.f32 0.0, %v4287
      %v4289 = vpop.f32.mrf.mxu0
      %v4290 = vpop.f32.mrf.mxu0
      %v4291 = vadd.f32 0.0, %v4290
      %v4292 = vpop.f32.mrf.mxu0
      %4293 = vmatprep.mubr.bf16.mxu0 0
      %4294 = vmatmul.mubr.bf16.gmra.mxu0 %v3926
      %v4295 = vpop.f32.mrf.mxu0
      %v4296 = vadd.f32 0.0, %v4295
      %v4297 = vpop.f32.mrf.mxu0
      %v4298 = vpop.f32.mrf.mxu0
      %v4299 = vadd.f32 0.0, %v4298
      %v4300 = vpop.f32.mrf.mxu0
      %4301 = vmatprep.mubr.bf16.mxu0 0
      %4302 = vmatmul.mubr.bf16.gmra.mxu0 %v3928
      %v4303 = vpop.f32.mrf.mxu0
      %v4304 = vadd.f32 0.0, %v4303
      %v4305 = vpop.f32.mrf.mxu0
      %v4306 = vpop.f32.mrf.mxu0
      %v4307 = vadd.f32 0.0, %v4306
      %v4308 = vpop.f32.mrf.mxu0
      %4309 = vmatprep.mubr.bf16.mxu0 0
      %4310 = vmatmul.mubr.bf16.gmra.mxu0 %v4216
      %v4311 = vpop.f32.mrf.mxu0
      %v4312 = vadd.f32 0.0, %v4311
      %v4313 = vpop.f32.mrf.mxu0
      %v4314 = vpop.f32.mrf.mxu0
      %v4315 = vadd.f32 0.0, %v4314
      %v4316 = vpop.f32.mrf.mxu0
      %4317 = vdwg.mxu0
      %v4318 = vadd.f32 %v4197, %v4256
      %v4319 = vadd.f32 %v4198, %v4259
      %v4320 = vadd.f32 %v4199, %v4264
      %v4321 = vadd.f32 %v4200, %v4267
      %v4322 = vadd.f32 %v4201, %v4272
      %v4323 = vadd.f32 %v4202, %v4275
      %v4324 = vadd.f32 %v4203, %v4280
      %v4325 = vadd.f32 %v4204, %v4283
      %v4326 = vadd.f32 %v4205, %v4288
      %v4327 = vadd.f32 %v4206, %v4291
      %v4328 = vadd.f32 %v4207, %v4296
      %v4329 = vadd.f32 %v4208, %v4299
      %v4330 = vadd.f32 %v4209, %v4304
      %v4331 = vadd.f32 %v4210, %v4307
      %v4332 = vadd.f32 %v4211, %v4312
      %v4333 = vadd.f32 %v4212, %v4315
      %v4334 = vshrl.u32 %v3685, 16
      %v4336 = vshll.u32 %v3685, 16
      %v4338 = vrot.slane %v4336, 1
      %v4339 = vor.u32 %v4334, %v4338
      %v4341 = vshll.u32 %v3686, 16
      %v4343 = vrot.slane %v4341, 1
      %v4344 = vsel %vm3690, %v4339, %v4343
      %s4345 = scalar_lea.vmem %s4, 8
      %v4346 = vld [vmem:[%s4345] sm:$0x3]
      %v4348 = vsel %vm708, %v4344, 0
      %v4351 = vsel %vm3813, %v4346, 0
      %4353 = vmatprep.subr.bf16.mxu0 0
      %4354 = vmatpush1.bf16.msra.mxu0 0
      %4355 = vmatprep.subr.bf16.mxu0 0
      %4356 = vmatpush1.bf16.msra.mxu0 0
      %4357 = vmatprep.subr.bf16.mxu0 0
      %4358 = vmatpush1.bf16.msra.mxu0 0
      %4359 = vmatprep.subr.bf16.mxu0 0
      %4360 = vmatpush1.bf16.msra.mxu0 0
      %4361 = vmatprep.subr.bf16.mxu0 0
      %4362 = vmatpush1.bf16.msra.mxu0 0
      %4363 = vmatprep.subr.bf16.mxu0 0
      %4364 = vmatpush1.bf16.msra.mxu0 0
      %4365 = vmatprep.subr.bf16.mxu0 0
      %4366 = vmatpush1.bf16.msra.mxu0 0
      %4367 = vmatprep.subr.bf16.mxu0 0
      %4368 = vmatpush1.bf16.msra.mxu0 %v4351
      %4369 = vmatprep.subr.bf16.mxu0 0
      %4370 = vmatpush2.bf16.msra.mxu0 0
      %4371 = vmatprep.subr.bf16.mxu0 0
      %4372 = vmatpush2.bf16.msra.mxu0 0
      %4373 = vmatprep.subr.bf16.mxu0 0
      %4374 = vmatpush2.bf16.msra.mxu0 0
      %4375 = vmatprep.subr.bf16.mxu0 0
      %4376 = vmatpush2.bf16.msra.mxu0 0
      %4377 = vmatprep.subr.bf16.mxu0 0
      %4378 = vmatpush2.bf16.msra.mxu0 0
      %4379 = vmatprep.subr.bf16.mxu0 0
      %4380 = vmatpush2.bf16.msra.mxu0 0
      %4381 = vmatprep.subr.bf16.mxu0 0
      %4382 = vmatpush2.bf16.msra.mxu0 0
      %4383 = vmatprep.subr.bf16.mxu0 0
      %4384 = vmatpush2.bf16.msra.mxu0 0
      %4385 = vmatprep.mubr.bf16.mxu0 0
      %4386 = vmatmul.mubr.bf16.gmra.mxu0 %v3793
      %v4387 = vpop.f32.mrf.mxu0
      %v4388 = vadd.f32 0.0, %v4387
      %v4389 = vpop.f32.mrf.mxu0
      %v4390 = vpop.f32.mrf.mxu0
      %v4391 = vadd.f32 0.0, %v4390
      %v4392 = vpop.f32.mrf.mxu0
      %4393 = vmatprep.mubr.bf16.mxu0 0
      %4394 = vmatmul.mubr.bf16.gmra.mxu0 %v3796
      %v4395 = vpop.f32.mrf.mxu0
      %v4396 = vadd.f32 0.0, %v4395
      %v4397 = vpop.f32.mrf.mxu0
      %v4398 = vpop.f32.mrf.mxu0
      %v4399 = vadd.f32 0.0, %v4398
      %v4400 = vpop.f32.mrf.mxu0
      %4401 = vmatprep.mubr.bf16.mxu0 0
      %4402 = vmatmul.mubr.bf16.gmra.mxu0 %v3799
      %v4403 = vpop.f32.mrf.mxu0
      %v4404 = vadd.f32 0.0, %v4403
      %v4405 = vpop.f32.mrf.mxu0
      %v4406 = vpop.f32.mrf.mxu0
      %v4407 = vadd.f32 0.0, %v4406
      %v4408 = vpop.f32.mrf.mxu0
      %4409 = vmatprep.mubr.bf16.mxu0 0
      %4410 = vmatmul.mubr.bf16.gmra.mxu0 %v3802
      %v4411 = vpop.f32.mrf.mxu0
      %v4412 = vadd.f32 0.0, %v4411
      %v4413 = vpop.f32.mrf.mxu0
      %v4414 = vpop.f32.mrf.mxu0
      %v4415 = vadd.f32 0.0, %v4414
      %v4416 = vpop.f32.mrf.mxu0
      %4417 = vmatprep.mubr.bf16.mxu0 0
      %4418 = vmatmul.mubr.bf16.gmra.mxu0 %v3805
      %v4419 = vpop.f32.mrf.mxu0
      %v4420 = vadd.f32 0.0, %v4419
      %v4421 = vpop.f32.mrf.mxu0
      %v4422 = vpop.f32.mrf.mxu0
      %v4423 = vadd.f32 0.0, %v4422
      %v4424 = vpop.f32.mrf.mxu0
      %4425 = vmatprep.mubr.bf16.mxu0 0
      %4426 = vmatmul.mubr.bf16.gmra.mxu0 %v3808
      %v4427 = vpop.f32.mrf.mxu0
      %v4428 = vadd.f32 0.0, %v4427
      %v4429 = vpop.f32.mrf.mxu0
      %v4430 = vpop.f32.mrf.mxu0
      %v4431 = vadd.f32 0.0, %v4430
      %v4432 = vpop.f32.mrf.mxu0
      %4433 = vmatprep.mubr.bf16.mxu0 0
      %4434 = vmatmul.mubr.bf16.gmra.mxu0 %v3811
      %v4435 = vpop.f32.mrf.mxu0
      %v4436 = vadd.f32 0.0, %v4435
      %v4437 = vpop.f32.mrf.mxu0
      %v4438 = vpop.f32.mrf.mxu0
      %v4439 = vadd.f32 0.0, %v4438
      %v4440 = vpop.f32.mrf.mxu0
      %4441 = vmatprep.mubr.bf16.mxu0 0
      %4442 = vmatmul.mubr.bf16.gmra.mxu0 %v4348
      %v4443 = vpop.f32.mrf.mxu0
      %v4444 = vadd.f32 0.0, %v4443
      %v4445 = vpop.f32.mrf.mxu0
      %v4446 = vpop.f32.mrf.mxu0
      %v4447 = vadd.f32 0.0, %v4446
      %v4448 = vpop.f32.mrf.mxu0
      %4449 = vdwg.mxu0
      %v4450 = vadd.f32 %v4318, %v4388
      %v4451 = vadd.f32 %v4319, %v4391
      %v4452 = vadd.f32 %v4320, %v4396
      %v4453 = vadd.f32 %v4321, %v4399
      %v4454 = vadd.f32 %v4322, %v4404
      %v4455 = vadd.f32 %v4323, %v4407
      %v4456 = vadd.f32 %v4324, %v4412
      %v4457 = vadd.f32 %v4325, %v4415
      %v4458 = vadd.f32 %v4326, %v4420
      %v4459 = vadd.f32 %v4327, %v4423
      %v4460 = vadd.f32 %v4328, %v4428
      %v4461 = vadd.f32 %v4329, %v4431
      %v4462 = vadd.f32 %v4330, %v4436
      %v4463 = vadd.f32 %v4331, %v4439
      %v4464 = vadd.f32 %v4332, %v4444
      %v4465 = vadd.f32 %v4333, %v4447
      %v4468 = vrot.slane %v3685, 1
      %v4469 = vrot.slane %v3686, 1
      %v4470 = vsel %vm4046, %v4468, %v4469
      %s4471 = scalar_lea.vmem %s4, 10
      %v4472 = vld [vmem:[%s4471] sm:$0x3]
      %v4474 = vsel %vm708, %v4470, 0
      %v4477 = vsel %vm3813, %v4472, 0
      %4479 = vmatprep.subr.bf16.mxu0 0
      %4480 = vmatpush1.bf16.msra.mxu0 0
      %4481 = vmatprep.subr.bf16.mxu0 0
      %4482 = vmatpush1.bf16.msra.mxu0 0
      %4483 = vmatprep.subr.bf16.mxu0 0
      %4484 = vmatpush1.bf16.msra.mxu0 0
      %4485 = vmatprep.subr.bf16.mxu0 0
      %4486 = vmatpush1.bf16.msra.mxu0 0
      %4487 = vmatprep.subr.bf16.mxu0 0
      %4488 = vmatpush1.bf16.msra.mxu0 0
      %4489 = vmatprep.subr.bf16.mxu0 0
      %4490 = vmatpush1.bf16.msra.mxu0 0
      %4491 = vmatprep.subr.bf16.mxu0 0
      %4492 = vmatpush1.bf16.msra.mxu0 0
      %4493 = vmatprep.subr.bf16.mxu0 0
      %4494 = vmatpush1.bf16.msra.mxu0 %v4477
      %4495 = vmatprep.subr.bf16.mxu0 0
      %4496 = vmatpush2.bf16.msra.mxu0 0
      %4497 = vmatprep.subr.bf16.mxu0 0
      %4498 = vmatpush2.bf16.msra.mxu0 0
      %4499 = vmatprep.subr.bf16.mxu0 0
      %4500 = vmatpush2.bf16.msra.mxu0 0
      %4501 = vmatprep.subr.bf16.mxu0 0
      %4502 = vmatpush2.bf16.msra.mxu0 0
      %4503 = vmatprep.subr.bf16.mxu0 0
      %4504 = vmatpush2.bf16.msra.mxu0 0
      %4505 = vmatprep.subr.bf16.mxu0 0
      %4506 = vmatpush2.bf16.msra.mxu0 0
      %4507 = vmatprep.subr.bf16.mxu0 0
      %4508 = vmatpush2.bf16.msra.mxu0 0
      %4509 = vmatprep.subr.bf16.mxu0 0
      %4510 = vmatpush2.bf16.msra.mxu0 0
      %4511 = vmatprep.mubr.bf16.mxu0 0
      %4512 = vmatmul.mubr.bf16.gmra.mxu0 %v4077
      %v4513 = vpop.f32.mrf.mxu0
      %v4514 = vadd.f32 0.0, %v4513
      %v4515 = vpop.f32.mrf.mxu0
      %v4516 = vpop.f32.mrf.mxu0
      %v4517 = vadd.f32 0.0, %v4516
      %v4518 = vpop.f32.mrf.mxu0
      %4519 = vmatprep.mubr.bf16.mxu0 0
      %4520 = vmatmul.mubr.bf16.gmra.mxu0 %v4080
      %v4521 = vpop.f32.mrf.mxu0
      %v4522 = vadd.f32 0.0, %v4521
      %v4523 = vpop.f32.mrf.mxu0
      %v4524 = vpop.f32.mrf.mxu0
      %v4525 = vadd.f32 0.0, %v4524
      %v4526 = vpop.f32.mrf.mxu0
      %4527 = vmatprep.mubr.bf16.mxu0 0
      %4528 = vmatmul.mubr.bf16.gmra.mxu0 %v4083
      %v4529 = vpop.f32.mrf.mxu0
      %v4530 = vadd.f32 0.0, %v4529
      %v4531 = vpop.f32.mrf.mxu0
      %v4532 = vpop.f32.mrf.mxu0
      %v4533 = vadd.f32 0.0, %v4532
      %v4534 = vpop.f32.mrf.mxu0
      %4535 = vmatprep.mubr.bf16.mxu0 0
      %4536 = vmatmul.mubr.bf16.gmra.mxu0 %v4086
      %v4537 = vpop.f32.mrf.mxu0
      %v4538 = vadd.f32 0.0, %v4537
      %v4539 = vpop.f32.mrf.mxu0
      %v4540 = vpop.f32.mrf.mxu0
      %v4541 = vadd.f32 0.0, %v4540
      %v4542 = vpop.f32.mrf.mxu0
      %4543 = vmatprep.mubr.bf16.mxu0 0
      %4544 = vmatmul.mubr.bf16.gmra.mxu0 %v4089
      %v4545 = vpop.f32.mrf.mxu0
      %v4546 = vadd.f32 0.0, %v4545
      %v4547 = vpop.f32.mrf.mxu0
      %v4548 = vpop.f32.mrf.mxu0
      %v4549 = vadd.f32 0.0, %v4548
      %v4550 = vpop.f32.mrf.mxu0
      %4551 = vmatprep.mubr.bf16.mxu0 0
      %4552 = vmatmul.mubr.bf16.gmra.mxu0 %v4092
      %v4553 = vpop.f32.mrf.mxu0
      %v4554 = vadd.f32 0.0, %v4553
      %v4555 = vpop.f32.mrf.mxu0
      %v4556 = vpop.f32.mrf.mxu0
      %v4557 = vadd.f32 0.0, %v4556
      %v4558 = vpop.f32.mrf.mxu0
      %4559 = vmatprep.mubr.bf16.mxu0 0
      %4560 = vmatmul.mubr.bf16.gmra.mxu0 %v4095
      %v4561 = vpop.f32.mrf.mxu0
      %v4562 = vadd.f32 0.0, %v4561
      %v4563 = vpop.f32.mrf.mxu0
      %v4564 = vpop.f32.mrf.mxu0
      %v4565 = vadd.f32 0.0, %v4564
      %v4566 = vpop.f32.mrf.mxu0
      %4567 = vmatprep.mubr.bf16.mxu0 0
      %4568 = vmatmul.mubr.bf16.gmra.mxu0 %v4474
      %v4569 = vpop.f32.mrf.mxu0
      %v4570 = vadd.f32 0.0, %v4569
      %v4571 = vpop.f32.mrf.mxu0
      %v4572 = vpop.f32.mrf.mxu0
      %v4573 = vadd.f32 0.0, %v4572
      %v4574 = vpop.f32.mrf.mxu0
      %4575 = vdwg.mxu0
      %v4576 = vadd.f32 %v4450, %v4514
      %v4577 = vadd.f32 %v4451, %v4517
      %v4578 = vadd.f32 %v4452, %v4522
      %v4579 = vadd.f32 %v4453, %v4525
      %v4580 = vadd.f32 %v4454, %v4530
      %v4581 = vadd.f32 %v4455, %v4533
      %v4582 = vadd.f32 %v4456, %v4538
      %v4583 = vadd.f32 %v4457, %v4541
      %v4584 = vadd.f32 %v4458, %v4546
      %v4585 = vadd.f32 %v4459, %v4549
      %v4586 = vadd.f32 %v4460, %v4554
      %v4587 = vadd.f32 %v4461, %v4557
      %v4588 = vadd.f32 %v4462, %v4562
      %v4589 = vadd.f32 %v4463, %v4565
      %v4590 = vadd.f32 %v4464, %v4570
      %v4591 = vadd.f32 %v4465, %v4573
      %s4592 = scalar_lea.vmem %s4, 12
      %v4593 = vld [vmem:[%s4592] sm:$0x3]
      %v4595 = vsel %vm708, %v3687, 0
      %v4598 = vsel %vm3813, %v4593, 0
      %4600 = vmatprep.subr.bf16.mxu0 0
      %4601 = vmatpush1.bf16.msra.mxu0 0
      %4602 = vmatprep.subr.bf16.mxu0 0
      %4603 = vmatpush1.bf16.msra.mxu0 0
      %4604 = vmatprep.subr.bf16.mxu0 0
      %4605 = vmatpush1.bf16.msra.mxu0 0
      %4606 = vmatprep.subr.bf16.mxu0 0
      %4607 = vmatpush1.bf16.msra.mxu0 0
      %4608 = vmatprep.subr.bf16.mxu0 0
      %4609 = vmatpush1.bf16.msra.mxu0 0
      %4610 = vmatprep.subr.bf16.mxu0 0
      %4611 = vmatpush1.bf16.msra.mxu0 0
      %4612 = vmatprep.subr.bf16.mxu0 0
      %4613 = vmatpush1.bf16.msra.mxu0 0
      %4614 = vmatprep.subr.bf16.mxu0 0
      %4615 = vmatpush1.bf16.msra.mxu0 %v4598
      %4616 = vmatprep.subr.bf16.mxu0 0
      %4617 = vmatpush2.bf16.msra.mxu0 0
      %4618 = vmatprep.subr.bf16.mxu0 0
      %4619 = vmatpush2.bf16.msra.mxu0 0
      %4620 = vmatprep.subr.bf16.mxu0 0
      %4621 = vmatpush2.bf16.msra.mxu0 0
      %4622 = vmatprep.subr.bf16.mxu0 0
      %4623 = vmatpush2.bf16.msra.mxu0 0
      %4624 = vmatprep.subr.bf16.mxu0 0
      %4625 = vmatpush2.bf16.msra.mxu0 0
      %4626 = vmatprep.subr.bf16.mxu0 0
      %4627 = vmatpush2.bf16.msra.mxu0 0
      %4628 = vmatprep.subr.bf16.mxu0 0
      %4629 = vmatpush2.bf16.msra.mxu0 0
      %4630 = vmatprep.subr.bf16.mxu0 0
      %4631 = vmatpush2.bf16.msra.mxu0 0
      %4632 = vmatprep.mubr.bf16.mxu0 0
      %4633 = vmatmul.mubr.bf16.gmra.mxu0 %v3918
      %v4634 = vpop.f32.mrf.mxu0
      %v4635 = vadd.f32 0.0, %v4634
      %v4636 = vpop.f32.mrf.mxu0
      %v4637 = vpop.f32.mrf.mxu0
      %v4638 = vadd.f32 0.0, %v4637
      %v4639 = vpop.f32.mrf.mxu0
      %4640 = vmatprep.mubr.bf16.mxu0 0
      %4641 = vmatmul.mubr.bf16.gmra.mxu0 %v3920
      %v4642 = vpop.f32.mrf.mxu0
      %v4643 = vadd.f32 0.0, %v4642
      %v4644 = vpop.f32.mrf.mxu0
      %v4645 = vpop.f32.mrf.mxu0
      %v4646 = vadd.f32 0.0, %v4645
      %v4647 = vpop.f32.mrf.mxu0
      %4648 = vmatprep.mubr.bf16.mxu0 0
      %4649 = vmatmul.mubr.bf16.gmra.mxu0 %v3922
      %v4650 = vpop.f32.mrf.mxu0
      %v4651 = vadd.f32 0.0, %v4650
      %v4652 = vpop.f32.mrf.mxu0
      %v4653 = vpop.f32.mrf.mxu0
      %v4654 = vadd.f32 0.0, %v4653
      %v4655 = vpop.f32.mrf.mxu0
      %4656 = vmatprep.mubr.bf16.mxu0 0
      %4657 = vmatmul.mubr.bf16.gmra.mxu0 %v3924
      %v4658 = vpop.f32.mrf.mxu0
      %v4659 = vadd.f32 0.0, %v4658
      %v4660 = vpop.f32.mrf.mxu0
      %v4661 = vpop.f32.mrf.mxu0
      %v4662 = vadd.f32 0.0, %v4661
      %v4663 = vpop.f32.mrf.mxu0
      %4664 = vmatprep.mubr.bf16.mxu0 0
      %4665 = vmatmul.mubr.bf16.gmra.mxu0 %v3926
      %v4666 = vpop.f32.mrf.mxu0
      %v4667 = vadd.f32 0.0, %v4666
      %v4668 = vpop.f32.mrf.mxu0
      %v4669 = vpop.f32.mrf.mxu0
      %v4670 = vadd.f32 0.0, %v4669
      %v4671 = vpop.f32.mrf.mxu0
      %4672 = vmatprep.mubr.bf16.mxu0 0
      %4673 = vmatmul.mubr.bf16.gmra.mxu0 %v3928
      %v4674 = vpop.f32.mrf.mxu0
      %v4675 = vadd.f32 0.0, %v4674
      %v4676 = vpop.f32.mrf.mxu0
      %v4677 = vpop.f32.mrf.mxu0
      %v4678 = vadd.f32 0.0, %v4677
      %v4679 = vpop.f32.mrf.mxu0
      %4680 = vmatprep.mubr.bf16.mxu0 0
      %4681 = vmatmul.mubr.bf16.gmra.mxu0 %v4216
      %v4682 = vpop.f32.mrf.mxu0
      %v4683 = vadd.f32 0.0, %v4682
      %v4684 = vpop.f32.mrf.mxu0
      %v4685 = vpop.f32.mrf.mxu0
      %v4686 = vadd.f32 0.0, %v4685
      %v4687 = vpop.f32.mrf.mxu0
      %4688 = vmatprep.mubr.bf16.mxu0 0
      %4689 = vmatmul.mubr.bf16.gmra.mxu0 %v4595
      %v4690 = vpop.f32.mrf.mxu0
      %v4691 = vadd.f32 0.0, %v4690
      %v4692 = vpop.f32.mrf.mxu0
      %v4693 = vpop.f32.mrf.mxu0
      %v4694 = vadd.f32 0.0, %v4693
      %v4695 = vpop.f32.mrf.mxu0
      %4696 = vdwg.mxu0
      %v4697 = vadd.f32 %v4576, %v4635
      %v4698 = vadd.f32 %v4577, %v4638
      %v4699 = vadd.f32 %v4578, %v4643
      %v4700 = vadd.f32 %v4579, %v4646
      %v4701 = vadd.f32 %v4580, %v4651
      %v4702 = vadd.f32 %v4581, %v4654
      %v4703 = vadd.f32 %v4582, %v4659
      %v4704 = vadd.f32 %v4583, %v4662
      %v4705 = vadd.f32 %v4584, %v4667
      %v4706 = vadd.f32 %v4585, %v4670
      %v4707 = vadd.f32 %v4586, %v4675
      %v4708 = vadd.f32 %v4587, %v4678
      %v4709 = vadd.f32 %v4588, %v4683
      %v4710 = vadd.f32 %v4589, %v4686
      %v4711 = vadd.f32 %v4590, %v4691
      %v4712 = vadd.f32 %v4591, %v4694
      %v4713 = vshrl.u32 %v3687, 16
      %v4715 = vshll.u32 %v3687, 16
      %v4717 = vrot.slane %v4715, 1
      %v4718 = vor.u32 %v4713, %v4717
      %v4720 = vshll.u32 %v3688, 16
      %v4722 = vrot.slane %v4720, 1
      %v4723 = vsel %vm3690, %v4718, %v4722
      %s4724 = scalar_lea.vmem %s4, 14
      %v4725 = vld [vmem:[%s4724] sm:$0x3]
      %v4727 = vsel %vm708, %v4723, 0
      %v4730 = vsel %vm3813, %v4725, 0
      %4732 = vmatprep.subr.bf16.mxu0 0
      %4733 = vmatpush1.bf16.msra.mxu0 0
      %4734 = vmatprep.subr.bf16.mxu0 0
      %4735 = vmatpush1.bf16.msra.mxu0 0
      %4736 = vmatprep.subr.bf16.mxu0 0
      %4737 = vmatpush1.bf16.msra.mxu0 0
      %4738 = vmatprep.subr.bf16.mxu0 0
      %4739 = vmatpush1.bf16.msra.mxu0 0
      %4740 = vmatprep.subr.bf16.mxu0 0
      %4741 = vmatpush1.bf16.msra.mxu0 0
      %4742 = vmatprep.subr.bf16.mxu0 0
      %4743 = vmatpush1.bf16.msra.mxu0 0
      %4744 = vmatprep.subr.bf16.mxu0 0
      %4745 = vmatpush1.bf16.msra.mxu0 0
      %4746 = vmatprep.subr.bf16.mxu0 0
      %4747 = vmatpush1.bf16.msra.mxu0 %v4730
      %4748 = vmatprep.subr.bf16.mxu0 0
      %4749 = vmatpush2.bf16.msra.mxu0 0
      %4750 = vmatprep.subr.bf16.mxu0 0
      %4751 = vmatpush2.bf16.msra.mxu0 0
      %4752 = vmatprep.subr.bf16.mxu0 0
      %4753 = vmatpush2.bf16.msra.mxu0 0
      %4754 = vmatprep.subr.bf16.mxu0 0
      %4755 = vmatpush2.bf16.msra.mxu0 0
      %4756 = vmatprep.subr.bf16.mxu0 0
      %4757 = vmatpush2.bf16.msra.mxu0 0
      %4758 = vmatprep.subr.bf16.mxu0 0
      %4759 = vmatpush2.bf16.msra.mxu0 0
      %4760 = vmatprep.subr.bf16.mxu0 0
      %4761 = vmatpush2.bf16.msra.mxu0 0
      %4762 = vmatprep.subr.bf16.mxu0 0
      %4763 = vmatpush2.bf16.msra.mxu0 0
      %4764 = vmatprep.mubr.bf16.mxu0 0
      %4765 = vmatmul.mubr.bf16.gmra.mxu0 %v3796
      %v4766 = vpop.f32.mrf.mxu0
      %v4767 = vadd.f32 0.0, %v4766
      %v4768 = vpop.f32.mrf.mxu0
      %v4769 = vpop.f32.mrf.mxu0
      %v4770 = vadd.f32 0.0, %v4769
      %v4771 = vpop.f32.mrf.mxu0
      %4772 = vmatprep.mubr.bf16.mxu0 0
      %4773 = vmatmul.mubr.bf16.gmra.mxu0 %v3799
      %v4774 = vpop.f32.mrf.mxu0
      %v4775 = vadd.f32 0.0, %v4774
      %v4776 = vpop.f32.mrf.mxu0
      %v4777 = vpop.f32.mrf.mxu0
      %v4778 = vadd.f32 0.0, %v4777
      %v4779 = vpop.f32.mrf.mxu0
      %4780 = vmatprep.mubr.bf16.mxu0 0
      %4781 = vmatmul.mubr.bf16.gmra.mxu0 %v3802
      %v4782 = vpop.f32.mrf.mxu0
      %v4783 = vadd.f32 0.0, %v4782
      %v4784 = vpop.f32.mrf.mxu0
      %v4785 = vpop.f32.mrf.mxu0
      %v4786 = vadd.f32 0.0, %v4785
      %v4787 = vpop.f32.mrf.mxu0
      %4788 = vmatprep.mubr.bf16.mxu0 0
      %4789 = vmatmul.mubr.bf16.gmra.mxu0 %v3805
      %v4790 = vpop.f32.mrf.mxu0
      %v4791 = vadd.f32 0.0, %v4790
      %v4792 = vpop.f32.mrf.mxu0
      %v4793 = vpop.f32.mrf.mxu0
      %v4794 = vadd.f32 0.0, %v4793
      %v4795 = vpop.f32.mrf.mxu0
      %4796 = vmatprep.mubr.bf16.mxu0 0
      %4797 = vmatmul.mubr.bf16.gmra.mxu0 %v3808
      %v4798 = vpop.f32.mrf.mxu0
      %v4799 = vadd.f32 0.0, %v4798
      %v4800 = vpop.f32.mrf.mxu0
      %v4801 = vpop.f32.mrf.mxu0
      %v4802 = vadd.f32 0.0, %v4801
      %v4803 = vpop.f32.mrf.mxu0
      %4804 = vmatprep.mubr.bf16.mxu0 0
      %4805 = vmatmul.mubr.bf16.gmra.mxu0 %v3811
      %v4806 = vpop.f32.mrf.mxu0
      %v4807 = vadd.f32 0.0, %v4806
      %v4808 = vpop.f32.mrf.mxu0
      %v4809 = vpop.f32.mrf.mxu0
      %v4810 = vadd.f32 0.0, %v4809
      %v4811 = vpop.f32.mrf.mxu0
      %4812 = vmatprep.mubr.bf16.mxu0 0
      %4813 = vmatmul.mubr.bf16.gmra.mxu0 %v4348
      %v4814 = vpop.f32.mrf.mxu0
      %v4815 = vadd.f32 0.0, %v4814
      %v4816 = vpop.f32.mrf.mxu0
      %v4817 = vpop.f32.mrf.mxu0
      %v4818 = vadd.f32 0.0, %v4817
      %v4819 = vpop.f32.mrf.mxu0
      %4820 = vmatprep.mubr.bf16.mxu0 0
      %4821 = vmatmul.mubr.bf16.gmra.mxu0 %v4727
      %v4822 = vpop.f32.mrf.mxu0
      %v4823 = vadd.f32 0.0, %v4822
      %v4824 = vpop.f32.mrf.mxu0
      %v4825 = vpop.f32.mrf.mxu0
      %v4826 = vadd.f32 0.0, %v4825
      %v4827 = vpop.f32.mrf.mxu0
      %4828 = vdwg.mxu0
      %v4829 = vadd.f32 %v4697, %v4767
      %v4830 = vadd.f32 %v4698, %v4770
      %v4831 = vadd.f32 %v4699, %v4775
      %v4832 = vadd.f32 %v4700, %v4778
      %v4833 = vadd.f32 %v4701, %v4783
      %v4834 = vadd.f32 %v4702, %v4786
      %v4835 = vadd.f32 %v4703, %v4791
      %v4836 = vadd.f32 %v4704, %v4794
      %v4837 = vadd.f32 %v4705, %v4799
      %v4838 = vadd.f32 %v4706, %v4802
      %v4839 = vadd.f32 %v4707, %v4807
      %v4840 = vadd.f32 %v4708, %v4810
      %v4841 = vadd.f32 %v4709, %v4815
      %v4842 = vadd.f32 %v4710, %v4818
      %v4843 = vadd.f32 %v4711, %v4823
      %v4844 = vadd.f32 %v4712, %v4826
      %v4847 = vrot.slane %v3687, 1
      %v4848 = vrot.slane %v3688, 1
      %v4849 = vsel %vm4046, %v4847, %v4848
      %s4850 = scalar_lea.vmem %s4, 16
      %v4851 = vld [vmem:[%s4850] sm:$0x3]
      %v4853 = vsel %vm708, %v4849, 0
      %v4856 = vsel %vm3813, %v4851, 0
      %4858 = vmatprep.subr.bf16.mxu0 0
      %4859 = vmatpush1.bf16.msra.mxu0 0
      %4860 = vmatprep.subr.bf16.mxu0 0
      %4861 = vmatpush1.bf16.msra.mxu0 0
      %4862 = vmatprep.subr.bf16.mxu0 0
      %4863 = vmatpush1.bf16.msra.mxu0 0
      %4864 = vmatprep.subr.bf16.mxu0 0
      %4865 = vmatpush1.bf16.msra.mxu0 0
      %4866 = vmatprep.subr.bf16.mxu0 0
      %4867 = vmatpush1.bf16.msra.mxu0 0
      %4868 = vmatprep.subr.bf16.mxu0 0
      %4869 = vmatpush1.bf16.msra.mxu0 0
      %4870 = vmatprep.subr.bf16.mxu0 0
      %4871 = vmatpush1.bf16.msra.mxu0 0
      %4872 = vmatprep.subr.bf16.mxu0 0
      %4873 = vmatpush1.bf16.msra.mxu0 %v4856
      %4874 = vmatprep.subr.bf16.mxu0 0
      %4875 = vmatpush2.bf16.msra.mxu0 0
      %4876 = vmatprep.subr.bf16.mxu0 0
      %4877 = vmatpush2.bf16.msra.mxu0 0
      %4878 = vmatprep.subr.bf16.mxu0 0
      %4879 = vmatpush2.bf16.msra.mxu0 0
      %4880 = vmatprep.subr.bf16.mxu0 0
      %4881 = vmatpush2.bf16.msra.mxu0 0
      %4882 = vmatprep.subr.bf16.mxu0 0
      %4883 = vmatpush2.bf16.msra.mxu0 0
      %4884 = vmatprep.subr.bf16.mxu0 0
      %4885 = vmatpush2.bf16.msra.mxu0 0
      %4886 = vmatprep.subr.bf16.mxu0 0
      %4887 = vmatpush2.bf16.msra.mxu0 0
      %4888 = vmatprep.subr.bf16.mxu0 0
      %4889 = vmatpush2.bf16.msra.mxu0 0
      %4890 = vmatprep.mubr.bf16.mxu0 0
      %4891 = vmatmul.mubr.bf16.gmra.mxu0 %v4080
      %v4892 = vpop.f32.mrf.mxu0
      %v4893 = vadd.f32 0.0, %v4892
      %v4894 = vpop.f32.mrf.mxu0
      %v4895 = vpop.f32.mrf.mxu0
      %v4896 = vadd.f32 0.0, %v4895
      %v4897 = vpop.f32.mrf.mxu0
      %4898 = vmatprep.mubr.bf16.mxu0 0
      %4899 = vmatmul.mubr.bf16.gmra.mxu0 %v4083
      %v4900 = vpop.f32.mrf.mxu0
      %v4901 = vadd.f32 0.0, %v4900
      %v4902 = vpop.f32.mrf.mxu0
      %v4903 = vpop.f32.mrf.mxu0
      %v4904 = vadd.f32 0.0, %v4903
      %v4905 = vpop.f32.mrf.mxu0
      %4906 = vmatprep.mubr.bf16.mxu0 0
      %4907 = vmatmul.mubr.bf16.gmra.mxu0 %v4086
      %v4908 = vpop.f32.mrf.mxu0
      %v4909 = vadd.f32 0.0, %v4908
      %v4910 = vpop.f32.mrf.mxu0
      %v4911 = vpop.f32.mrf.mxu0
      %v4912 = vadd.f32 0.0, %v4911
      %v4913 = vpop.f32.mrf.mxu0
      %4914 = vmatprep.mubr.bf16.mxu0 0
      %4915 = vmatmul.mubr.bf16.gmra.mxu0 %v4089
      %v4916 = vpop.f32.mrf.mxu0
      %v4917 = vadd.f32 0.0, %v4916
      %v4918 = vpop.f32.mrf.mxu0
      %v4919 = vpop.f32.mrf.mxu0
      %v4920 = vadd.f32 0.0, %v4919
      %v4921 = vpop.f32.mrf.mxu0
      %4922 = vmatprep.mubr.bf16.mxu0 0
      %4923 = vmatmul.mubr.bf16.gmra.mxu0 %v4092
      %v4924 = vpop.f32.mrf.mxu0
      %v4925 = vadd.f32 0.0, %v4924
      %v4926 = vpop.f32.mrf.mxu0
      %v4927 = vpop.f32.mrf.mxu0
      %v4928 = vadd.f32 0.0, %v4927
      %v4929 = vpop.f32.mrf.mxu0
      %4930 = vmatprep.mubr.bf16.mxu0 0
      %4931 = vmatmul.mubr.bf16.gmra.mxu0 %v4095
      %v4932 = vpop.f32.mrf.mxu0
      %v4933 = vadd.f32 0.0, %v4932
      %v4934 = vpop.f32.mrf.mxu0
      %v4935 = vpop.f32.mrf.mxu0
      %v4936 = vadd.f32 0.0, %v4935
      %v4937 = vpop.f32.mrf.mxu0
      %4938 = vmatprep.mubr.bf16.mxu0 0
      %4939 = vmatmul.mubr.bf16.gmra.mxu0 %v4474
      %v4940 = vpop.f32.mrf.mxu0
      %v4941 = vadd.f32 0.0, %v4940
      %v4942 = vpop.f32.mrf.mxu0
      %v4943 = vpop.f32.mrf.mxu0
      %v4944 = vadd.f32 0.0, %v4943
      %v4945 = vpop.f32.mrf.mxu0
      %4946 = vmatprep.mubr.bf16.mxu0 0
      %4947 = vmatmul.mubr.bf16.gmra.mxu0 %v4853
      %v4948 = vpop.f32.mrf.mxu0
      %v4949 = vadd.f32 0.0, %v4948
      %v4950 = vpop.f32.mrf.mxu0
      %v4951 = vpop.f32.mrf.mxu0
      %v4952 = vadd.f32 0.0, %v4951
      %v4953 = vpop.f32.mrf.mxu0
      %4954 = vdwg.mxu0
      %v4955 = vadd.f32 %v4829, %v4893
      %v4956 = vadd.f32 %v4830, %v4896
      %v4957 = vadd.f32 %v4831, %v4901
      %v4958 = vadd.f32 %v4832, %v4904
      %v4959 = vadd.f32 %v4833, %v4909
      %v4960 = vadd.f32 %v4834, %v4912
      %v4961 = vadd.f32 %v4835, %v4917
      %v4962 = vadd.f32 %v4836, %v4920
      %v4963 = vadd.f32 %v4837, %v4925
      %v4964 = vadd.f32 %v4838, %v4928
      %v4965 = vadd.f32 %v4839, %v4933
      %v4966 = vadd.f32 %v4840, %v4936
      %v4967 = vadd.f32 %v4841, %v4941
      %v4968 = vadd.f32 %v4842, %v4944
      %v4969 = vadd.f32 %v4843, %v4949
      %v4970 = vadd.f32 %v4844, %v4952
      %v4971 = vld [vmem:[%s5] sm:$0x1]
      %v4973 = vlaneseq
      %v4974 = vshrl.u32 %v4973, 7
      %v4975 = vsub.s32 0, %v4974
      %v4976 = vrot.slane %v4971, %v4975
      %v4978 = vadd.f32 %v4955, %v4976
      %v4979 = vadd.f32 %v4956, %v4976
      %v4980 = vadd.f32 %v4957, %v4976
      %v4981 = vadd.f32 %v4958, %v4976
      %v4982 = vadd.f32 %v4959, %v4976
      %v4983 = vadd.f32 %v4960, %v4976
      %v4984 = vadd.f32 %v4961, %v4976
      %v4985 = vadd.f32 %v4962, %v4976
      %v4986 = vadd.f32 %v4963, %v4976
      %v4987 = vadd.f32 %v4964, %v4976
      %v4988 = vadd.f32 %v4965, %v4976
      %v4989 = vadd.f32 %v4966, %v4976
      %v4990 = vadd.f32 %v4967, %v4976
      %v4991 = vadd.f32 %v4968, %v4976
      %v4992 = vadd.f32 %v4969, %v4976
      %v4993 = vadd.f32 %v4970, %v4976
      %v4994 = vmax.f32 %v4978, 0.0
      %v4995 = vmax.f32 %v4979, 0.0
      %v4996 = vmax.f32 %v4980, 0.0
      %v4997 = vmax.f32 %v4981, 0.0
      %v4998 = vmax.f32 %v4982, 0.0
      %v4999 = vmax.f32 %v4983, 0.0
      %v5000 = vmax.f32 %v4984, 0.0
      %v5001 = vmax.f32 %v4985, 0.0
      %v5002 = vmax.f32 %v4986, 0.0
      %v5003 = vmax.f32 %v4987, 0.0
      %v5004 = vmax.f32 %v4988, 0.0
      %v5005 = vmax.f32 %v4989, 0.0
      %v5006 = vmax.f32 %v4990, 0.0
      %v5007 = vmax.f32 %v4991, 0.0
      %v5008 = vmax.f32 %v4992, 0.0
      %v5009 = vmax.f32 %v4993, 0.0
      %5010 = vst.msk [vmem:[%s321] sm:$0xff] %vm708, %v4994
      %5011 = vst.msk [vmem:[%s321 + $0x8] sm:$0xff] %vm708, %v4995
      %5012 = vst.msk [vmem:[%s321 + $0x10] sm:$0xff] %vm708, %v4996
      %5013 = vst.msk [vmem:[%s321 + $0x18] sm:$0xff] %vm708, %v4997
      %5014 = vst.msk [vmem:[%s321 + $0x20] sm:$0xff] %vm708, %v4998
      %5015 = vst.msk [vmem:[%s321 + $0x28] sm:$0xff] %vm708, %v4999
      %5016 = vst.msk [vmem:[%s321 + $0x30] sm:$0xff] %vm708, %v5000
      %5017 = vst.msk [vmem:[%s321 + $0x38] sm:$0xff] %vm708, %v5001
      %5018 = vst.msk [vmem:[%s321 + $0x40] sm:$0xff] %vm708, %v5002
      %5019 = vst.msk [vmem:[%s321 + $0x48] sm:$0xff] %vm708, %v5003
      %5020 = vst.msk [vmem:[%s321 + $0x50] sm:$0xff] %vm708, %v5004
      %5021 = vst.msk [vmem:[%s321 + $0x58] sm:$0xff] %vm708, %v5005
      %5022 = vst.msk [vmem:[%s321 + $0x60] sm:$0xff] %vm708, %v5006
      %5023 = vst.msk [vmem:[%s321 + $0x68] sm:$0xff] %vm708, %v5007
      %5024 = vst.msk [vmem:[%s321 + $0x70] sm:$0xff] %vm708, %v5008
      %5025 = vst.msk [vmem:[%s321 + $0x78] sm:$0xff] %vm708, %v5009
      %s5026 = smul.u32 16, %s22
      %p5027 = scmp.lt.s32.totalorder %s21, 1
      %s5028 = scalar_select %p5027, %s21, 1
      %p5029 = scmp.lt.s32.totalorder %s5026, 31
      %s5030 = scalar_select %p5029, %s5026, 31
      %s5031 = smul.addr %s5028, 32
      %s5032 = sadd.s32 %s5030, %s5031
      %s5033 = smul.addr %s5032, 8
      %s5034 = scalar_lea.vmem %s6, %s5033
      // Predicated region
      $region45: #{tpu_custom_call.1} parent=43 // pred_check
        %p5035 = pneg %p189
      $region46: #{tpu_custom_call.1} parent=43 // pred_check_branch
        %5037 = sbr.rel (%p5035) target = $region48
      $region47: #{tpu_custom_call.1} parent=43 // pred_region
        %s5038 = smul.u32 16, %s22
      $region48: #{tpu_custom_call.1} parent=43 // pred_fallthru
        _
    $region44: #{tpu_custom_call.1} parent=5 // pred_fallthru
      _
    %p5039 = scmp.le.s32.totalorder 2, %s12
    // Predicated region
    $region49: #{tpu_custom_call.1} parent=5 // pred_check
      %p5040 = pneg %p5039
    $region50: #{tpu_custom_call.1} parent=5 // pred_check_branch
      %5042 = sbr.rel (%p5040) target = $region52
    $region51: #{tpu_custom_call.1} parent=5 // pred_region
      %s5043 = ssub.s32 %s12, 2
      // Predicated region
      $region53: #{tpu_custom_call.1} parent=51 // pred_check
        %p5044 = pneg %p195
      $region54: #{tpu_custom_call.1} parent=51 // pred_check_branch
        %5046 = sbr.rel (%p5044) target = $region56
      $region55: #{tpu_custom_call.1} parent=51 // pred_region
        %s5047 = smul.u32 16, %s24
        %p5048 = scmp.lt.s32.totalorder %s23, 1
        %s5049 = scalar_select %p5048, %s23, 1
        %p5050 = scmp.lt.s32.totalorder %s5047, 31
        %s5051 = scalar_select %p5050, %s5047, 31
        %s5052 = smul.addr %s5049, 32
        %s5053 = sadd.s32 %s5051, %s5052
        %s5054 = smul.addr %s5053, 8
        %s5055 = scalar_lea.vmem %s6, %s5054
      $region56: #{tpu_custom_call.1} parent=51 // pred_fallthru
        _
    $region52: #{tpu_custom_call.1} parent=5 // pred_fallthru
      _
  $region6: #{tpu_custom_call.1} parent=0 // loop_footer
    %s16 = sadd.s32 1, %s12
  $region7: #{tpu_custom_call.1} parent=0 // loop_footer_branch
    %11 = sbr.rel target = $region3
  $region8: #{tpu_custom_call.1} parent=0 // loop_exit
    _

</llo_original>
